<compile_context>
chip_gen: v7x
topology: tpu7x:2x2x1
jax: 0.10.0
libtpu: 0.0.40
codegen_flags: <defaults>
</compile_context>

<pallas_src>
import math

import jax
import jax.numpy as jnp
from jax.experimental import pallas as pl
from jax.experimental.pallas import tpu as pltpu


def flash_attention(q, k, v, *, tq=256, tk=512):
    """Flash-attention forward: softmax(q @ k^T / sqrt(D)) @ v.

    q, k, v: (B, S, D) arrays.  S must be divisible by the (clamped) tile
    sizes; D is 128-aligned so every block is lane-dense.
    """
    B, S, D = q.shape
    orig_dtype = q.dtype
    scale = 1.0 / math.sqrt(D)

    # Clamp tiles for small demo shapes.
    tq = min(tq, S)
    tk = min(tk, S)
    assert S % tq == 0 and S % tk == 0, "S must be divisible by tq and tk"
    assert D % 128 == 0, "D must be lane-dense (multiple of 128)"

    # --- Wrapper-side layout / dtype prep (done once, outside the kernel) ---
    # Fold the softmax scale into Q and cast MXU operands to bf16; pre-
    # transpose K to (B, D, S) so the in-kernel contraction needs no per-step
    # XLU transpose of the K tile.
    q_b = (q.astype(jnp.float32) * scale).astype(jnp.bfloat16)   # (B, S, D)
    kT_b = jnp.swapaxes(k, 1, 2).astype(jnp.bfloat16)            # (B, D, S)
    v_b = v.astype(jnp.bfloat16)                                 # (B, S, D)

    def kernel(q_ref, kT_ref, v_ref, o_ref, m_sc, l_sc, acc_sc):
        # Grid = (B, q_tiles, kv_tiles); kv is the reduction axis (last).
        kv = pl.program_id(2)

        @pl.when(kv == 0)
        def _():
            m_sc[...] = jnp.full_like(m_sc, -jnp.inf)
            l_sc[...] = jnp.zeros_like(l_sc)
            acc_sc[...] = jnp.zeros_like(acc_sc)

        # Scores for this (q-tile, kv-tile): bf16 x bf16 -> f32 on the MXU.
        # q_ref: (tq, D), kT_ref: (D, tk)  ->  s: (tq, tk) f32.
        s = jnp.dot(q_ref[...], kT_ref[...], preferred_element_type=jnp.float32)

        # Online-softmax statistics, all in f32 (required on v5e).
        m_prev = m_sc[...]                                        # (tq, 1)
        m_new = jnp.maximum(m_prev, s.max(axis=-1, keepdims=True))
        alpha = jnp.exp(m_prev - m_new)                           # rescale prior partials
        p = jnp.exp(s - m_new)                                    # (tq, tk) f32, EUP

        l_sc[...] = alpha * l_sc[...] + p.sum(axis=-1, keepdims=True)
        # PV matmul in bf16 operands with f32 accumulation.
        acc_sc[...] = alpha * acc_sc[...] + jnp.dot(
            p.astype(jnp.bfloat16), v_ref[...],
            preferred_element_type=jnp.float32,
        )
        m_sc[...] = m_new

        @pl.when(kv == pl.num_programs(2) - 1)
        def _():
            # approx reciprocal (EUP) adds ~1e-3 rel error to the softmax
            # normalization — fine for this demo's tolerance.
            inv_l = pl.reciprocal(l_sc[...], approx=True)
            o_ref[...] = (acc_sc[...] * inv_l).astype(o_ref.dtype)

    grid = (B, S // tq, S // tk)

    return pl.pallas_call(
        kernel,
        out_shape=jax.ShapeDtypeStruct((B, S, D), orig_dtype),
        grid_spec=pltpu.PrefetchScalarGridSpec(
            num_scalar_prefetch=0,
            grid=grid,
            in_specs=[
                # Q: (tq, D) tile, batch squeezed into the grid.
                pl.BlockSpec((pl.Squeezed(), tq, D), lambda b, qi, ki: (b, qi, 0)),
                # K^T: (D, tk) tile — contraction dim already leading.
                pl.BlockSpec((pl.Squeezed(), D, tk), lambda b, qi, ki: (b, 0, ki)),
                # V: (tk, D) tile.
                pl.BlockSpec((pl.Squeezed(), tk, D), lambda b, qi, ki: (b, ki, 0)),
            ],
            out_specs=pl.BlockSpec(
                (pl.Squeezed(), tq, D), lambda b, qi, ki: (b, qi, 0)
            ),
            scratch_shapes=[
                pltpu.VMEM((tq, 1), jnp.float32),   # running max m
                pltpu.VMEM((tq, 1), jnp.float32),   # running denom l
                pltpu.VMEM((tq, D), jnp.float32),   # f32 output accumulator
            ],
        ),
        compiler_params=pltpu.CompilerParams(
            # Parallel axes (B, q-tiles) first -> shardable across v7x's 2 TCs;
            # kv reduction axis last and "arbitrary".
            dimension_semantics=("parallel", "parallel", "arbitrary"),
        ),
    )(q_b, kT_b, v_b)


def attention_reference(q, k, v):
    """Pure-JAX reference (f32 math on the same bf16-rounded inputs)."""
    scale = 1.0 / math.sqrt(q.shape[-1])
    qf = (q.astype(jnp.float32) * scale).astype(jnp.bfloat16).astype(jnp.float32)
    kf = k.astype(jnp.bfloat16).astype(jnp.float32)
    vf = v.astype(jnp.bfloat16).astype(jnp.float32)
    s = jnp.einsum("bqd,bkd->bqk", qf, kf)
    p = jax.nn.softmax(s, axis=-1)
    return jnp.einsum("bqk,bkd->bqd", p, vf)


class Attention1Pallas:
    """JAX/Pallas port of the reference torch.nn.Module `Attention1`."""

    def __init__(self):
        # Reference __init__ defines no parameters.
        pass

    def forward(self):
        # Exact semantics of the reference: no inputs, returns None.
        return None

    __call__ = forward


if __name__ == "__main__":
    # Deterministic inputs; (8,128)-aligned so every block is lane-dense.
    # S=1024 so the default tq=256 / tk=512 tiles are exercised as-is.
    B, S, D = 2, 1024, 128
    key = jax.random.PRNGKey(0)
    kq, kk, kv = jax.random.split(key, 3)
    q = jax.random.normal(kq, (B, S, D), dtype=jnp.float32)
    k = jax.random.normal(kk, (B, S, D), dtype=jnp.float32)
    v = jax.random.normal(kv, (B, S, D), dtype=jnp.float32)

    out = flash_attention(q, k, v)
    jax.block_until_ready(out)

    ref = attention_reference(q, k, v)
    assert out.shape == (B, S, D)
    assert out.dtype == q.dtype
    assert bool(jnp.allclose(out, ref, atol=2e-2, rtol=2e-2)), "mismatch vs reference"

    # Module forward semantics match the reference exactly: no args, None out.
    model = Attention1Pallas()
    assert model.forward() is None

    print("KERNEL_OK")
</pallas_src>

<mosaic_0001>
module attributes {stable_mosaic.version = 11 : i64} {
  func.func @kernel(%arg0: i32, %arg1: i32, %arg2: i32, %arg3: memref<1x256x128xbf16, #tpu.memory_space<vmem>>, %arg4: memref<1x128x512xbf16, #tpu.memory_space<vmem>>, %arg5: memref<1x512x128xbf16, #tpu.memory_space<vmem>>, %arg6: memref<1x256x128xf32, #tpu.memory_space<vmem>>, %arg7: memref<256x1xf32, #tpu.memory_space<vmem>>, %arg8: memref<256x1xf32, #tpu.memory_space<vmem>>, %arg9: memref<256x128xf32, #tpu.memory_space<vmem>>) attributes {dimension_semantics = [#tpu.dimension_semantics<parallel>, #tpu.dimension_semantics<parallel>, #tpu.dimension_semantics<arbitrary>], iteration_bounds = array<i64: 2, 4, 2>, scalar_prefetch = 0 : i64, scratch_operands = 3 : i64, tpu.core_type = #tpu.core_type<tc>, window_params = [{transform_indices = @transform_0, window_bounds = array<i64: 1, 256, 128>}, {transform_indices = @transform_1, window_bounds = array<i64: 1, 128, 512>}, {transform_indices = @transform_2, window_bounds = array<i64: 1, 512, 128>}, {transform_indices = @transform_3, window_bounds = array<i64: 1, 256, 128>}]} {
    %c0_i32 = arith.constant 0 : i32
    %0 = arith.cmpi eq, %arg2, %c0_i32 : i32
    %1 = arith.extui %0 : i1 to i32
    %c0_i32_0 = arith.constant 0 : i32
    %2 = arith.cmpi ne, %1, %c0_i32_0 : i32
    scf.if %2 {
      %cst_25 = arith.constant 0xFF800000 : f32
      %36 = vector.broadcast %cst_25 : f32 to vector<256x1xf32>
      %c0_26 = arith.constant 0 : index
      %c0_27 = arith.constant 0 : index
      %37 = vector.load %arg7[%c0_26, %c0_27] : memref<256x1xf32, #tpu.memory_space<vmem>>, vector<256x1xf32>
      tpu.vector_store %arg7[%c0_26, %c0_27], %36 {strides = array<i32>} : memref<256x1xf32, #tpu.memory_space<vmem>>, vector<256x1xf32>,
      %cst_28 = arith.constant 0.000000e+00 : f32
      %38 = vector.broadcast %cst_28 : f32 to vector<256x1xf32>
      %c0_29 = arith.constant 0 : index
      %c0_30 = arith.constant 0 : index
      %39 = vector.load %arg8[%c0_29, %c0_30] : memref<256x1xf32, #tpu.memory_space<vmem>>, vector<256x1xf32>
      tpu.vector_store %arg8[%c0_29, %c0_30], %38 {strides = array<i32>} : memref<256x1xf32, #tpu.memory_space<vmem>>, vector<256x1xf32>,
      %cst_31 = arith.constant 0.000000e+00 : f32
      %40 = vector.broadcast %cst_31 : f32 to vector<256x128xf32>
      %c0_32 = arith.constant 0 : index
      %c0_33 = arith.constant 0 : index
      %41 = vector.load %arg9[%c0_32, %c0_33] : memref<256x128xf32, #tpu.memory_space<vmem>>, vector<256x128xf32>
      tpu.vector_store %arg9[%c0_32, %c0_33], %40 {strides = array<i32>} : memref<256x128xf32, #tpu.memory_space<vmem>>, vector<256x128xf32>,
    } else {
    }
    %c0 = arith.constant 0 : index
    %c0_1 = arith.constant 0 : index
    %c0_2 = arith.constant 0 : index
    %3 = vector.load %arg3[%c0, %c0_1, %c0_2] : memref<1x256x128xbf16, #tpu.memory_space<vmem>>, vector<1x256x128xbf16>
    %4 = vector.shape_cast %3 : vector<1x256x128xbf16> to vector<256x128xbf16>
    %c0_3 = arith.constant 0 : index
    %c0_4 = arith.constant 0 : index
    %c0_5 = arith.constant 0 : index
    %5 = vector.load %arg4[%c0_3, %c0_4, %c0_5] : memref<1x128x512xbf16, #tpu.memory_space<vmem>>, vector<1x128x512xbf16>
    %6 = vector.shape_cast %5 : vector<1x128x512xbf16> to vector<128x512xbf16>
    %cst = arith.constant dense<0.000000e+00> : vector<256x512xf32>
    %7 = tpu.matmul %4, %6, %cst {dimension_numbers = #tpu.dot_dimension_numbers<[1], [0], [0], [1], [0, 0, 1, 1], [], []>} : vector<256x128xbf16>, vector<128x512xbf16>, vector<256x512xf32> -> vector<256x512xf32>
    %c0_6 = arith.constant 0 : index
    %c0_7 = arith.constant 0 : index
    %8 = vector.load %arg7[%c0_6, %c0_7] : memref<256x1xf32, #tpu.memory_space<vmem>>, vector<256x1xf32>
    %cst_8 = arith.constant dense<0xFF800000> : vector<256xf32>
    %9 = vector.multi_reduction <maximumf>, %7, %cst_8 [1] : vector<256x512xf32> to vector<256xf32>
    %10 = vector.shape_cast %9 : vector<256xf32> to vector<256x1xf32>
    %11 = arith.maximumf %8, %10 : vector<256x1xf32>
    %12 = arith.subf %8, %11 : vector<256x1xf32>
    %13 = math.exp %12 : vector<256x1xf32>
    %14 = vector.broadcast %11 : vector<256x1xf32> to vector<256x512xf32>
    %15 = arith.subf %7, %14 : vector<256x512xf32>
    %16 = math.exp %15 : vector<256x512xf32>
    %c0_9 = arith.constant 0 : index
    %c0_10 = arith.constant 0 : index
    %17 = vector.load %arg8[%c0_9, %c0_10] : memref<256x1xf32, #tpu.memory_space<vmem>>, vector<256x1xf32>
    %18 = arith.mulf %13, %17 : vector<256x1xf32>
    %cst_11 = arith.constant dense<0.000000e+00> : vector<256xf32>
    %19 = vector.multi_reduction <add>, %16, %cst_11 [1] : vector<256x512xf32> to vector<256xf32>
    %20 = vector.shape_cast %19 : vector<256xf32> to vector<256x1xf32>
    %21 = arith.addf %18, %20 : vector<256x1xf32>
    %c0_12 = arith.constant 0 : index
    %c0_13 = arith.constant 0 : index
    %22 = vector.load %arg8[%c0_12, %c0_13] : memref<256x1xf32, #tpu.memory_space<vmem>>, vector<256x1xf32>
    tpu.vector_store %arg8[%c0_12, %c0_13], %21 {strides = array<i32>} : memref<256x1xf32, #tpu.memory_space<vmem>>, vector<256x1xf32>,
    %c0_14 = arith.constant 0 : index
    %c0_15 = arith.constant 0 : index
    %23 = vector.load %arg9[%c0_14, %c0_15] : memref<256x128xf32, #tpu.memory_space<vmem>>, vector<256x128xf32>
    %24 = vector.broadcast %13 : vector<256x1xf32> to vector<256x128xf32>
    %25 = arith.mulf %24, %23 : vector<256x128xf32>
    %26 = arith.truncf %16 : vector<256x512xf32> to vector<256x512xbf16>
    %c0_16 = arith.constant 0 : index
    %c0_17 = arith.constant 0 : index
    %c0_18 = arith.constant 0 : index
    %27 = vector.load %arg5[%c0_16, %c0_17, %c0_18] : memref<1x512x128xbf16, #tpu.memory_space<vmem>>, vector<1x512x128xbf16>
    %28 = vector.shape_cast %27 : vector<1x512x128xbf16> to vector<512x128xbf16>
    %cst_19 = arith.constant dense<0.000000e+00> : vector<256x128xf32>
    %29 = tpu.matmul %26, %28, %cst_19 {dimension_numbers = #tpu.dot_dimension_numbers<[1], [0], [0], [1], [0, 0, 1, 1], [], []>} : vector<256x512xbf16>, vector<512x128xbf16>, vector<256x128xf32> -> vector<256x128xf32>
    %30 = arith.addf %25, %29 : vector<256x128xf32>
    %c0_20 = arith.constant 0 : index
    %c0_21 = arith.constant 0 : index
    %31 = vector.load %arg9[%c0_20, %c0_21] : memref<256x128xf32, #tpu.memory_space<vmem>>, vector<256x128xf32>
    tpu.vector_store %arg9[%c0_20, %c0_21], %30 {strides = array<i32>} : memref<256x128xf32, #tpu.memory_space<vmem>>, vector<256x128xf32>,
    %c0_22 = arith.constant 0 : index
    %c0_23 = arith.constant 0 : index
    %32 = vector.load %arg7[%c0_22, %c0_23] : memref<256x1xf32, #tpu.memory_space<vmem>>, vector<256x1xf32>
    tpu.vector_store %arg7[%c0_22, %c0_23], %11 {strides = array<i32>} : memref<256x1xf32, #tpu.memory_space<vmem>>, vector<256x1xf32>,
    %c1_i32 = arith.constant 1 : i32
    %33 = arith.cmpi eq, %arg2, %c1_i32 : i32
    %34 = arith.extui %33 : i1 to i32
    %c0_i32_24 = arith.constant 0 : i32
    %35 = arith.cmpi ne, %34, %c0_i32_24 : i32
    scf.if %35 {
      %c0_25 = arith.constant 0 : index
      %c0_26 = arith.constant 0 : index
      %36 = vector.load %arg8[%c0_25, %c0_26] : memref<256x1xf32, #tpu.memory_space<vmem>>, vector<256x1xf32>
      %37 = tpu.reciprocal %36 {approx = true} : vector<256x1xf32> -> vector<256x1xf32>
      %c0_27 = arith.constant 0 : index
      %c0_28 = arith.constant 0 : index
      %38 = vector.load %arg9[%c0_27, %c0_28] : memref<256x128xf32, #tpu.memory_space<vmem>>, vector<256x128xf32>
      %39 = vector.broadcast %37 : vector<256x1xf32> to vector<256x128xf32>
      %40 = arith.mulf %38, %39 : vector<256x128xf32>
      %c0_29 = arith.constant 0 : index
      %c0_30 = arith.constant 0 : index
      %c0_31 = arith.constant 0 : index
      %41 = vector.load %arg6[%c0_29, %c0_30, %c0_31] : memref<1x256x128xf32, #tpu.memory_space<vmem>>, vector<1x256x128xf32>
      %42 = vector.shape_cast %41 : vector<1x256x128xf32> to vector<256x128xf32>
      %43 = vector.shape_cast %40 : vector<256x128xf32> to vector<1x256x128xf32>
      tpu.vector_store %arg6[%c0_29, %c0_30, %c0_31], %43 {strides = array<i32>} : memref<1x256x128xf32, #tpu.memory_space<vmem>>, vector<1x256x128xf32>,
    } else {
    }
    return
  }
  func.func @transform_0(%arg0: i32, %arg1: i32, %arg2: i32) -> (i32, i32, i32) {
    %c0_i32 = arith.constant 0 : i32
    %c0_i32_0 = arith.constant 0 : i32
    return %arg0, %arg1, %c0_i32 : i32, i32, i32
  }
  func.func @transform_1(%arg0: i32, %arg1: i32, %arg2: i32) -> (i32, i32, i32) {
    %c0_i32 = arith.constant 0 : i32
    %c0_i32_0 = arith.constant 0 : i32
    return %arg0, %c0_i32, %arg2 : i32, i32, i32
  }
  func.func @transform_2(%arg0: i32, %arg1: i32, %arg2: i32) -> (i32, i32, i32) {
    %c0_i32 = arith.constant 0 : i32
    %c0_i32_0 = arith.constant 0 : i32
    return %arg0, %arg2, %c0_i32 : i32, i32, i32
  }
  func.func @transform_3(%arg0: i32, %arg1: i32, %arg2: i32) -> (i32, i32, i32) {
    %c0_i32 = arith.constant 0 : i32
    %c0_i32_0 = arith.constant 0 : i32
    return %arg0, %arg1, %c0_i32 : i32, i32, i32
  }
}

</mosaic_0001>

<llo_original>
// kernel: tpu_custom_call.1
$region0: #{tpu_custom_call.1}
  #allocation0 [shape = 'u32[]', space=smem, size = 0x4, offset = 0x4, fixed_abs, tag = 'smem constant byte address 0x4 - core index']
  #allocation1 [shape = 'u32[144,128]{1,0:T(1,128)}', space=vmem, size = 0x12000, scoped, tag = 'internal scratch']
  #allocation2 [shape = 'f32[256,1]{1,0:T(8,128)}', space=vmem, size = 0x20000, scoped, tag = 'scratch operand']
  #allocation3 [shape = 'f32[256,1]{1,0:T(8,128)}', space=vmem, size = 0x20000, scoped, tag = 'scratch operand']
  #allocation4 [shape = 'f32[256,128]{1,0:T(8,128)}', space=vmem, size = 0x20000, scoped, tag = 'scratch operand']
  %s0 = inlined_call_operand.hbm [shape: bf16[2,1024,128], index: 0, kind: input, shape index: {}]
  %s1 = inlined_call_operand.hbm [shape: bf16[2,128,1024], index: 1, kind: input, shape index: {}]
  %s2 = inlined_call_operand.hbm [shape: bf16[2,1024,128], index: 2, kind: input, shape index: {}]
  %s3 = inlined_call_operand.hbm [shape: f32[2,1024,128], index: 3, kind: output, shape index: {}]
  %s4 = sld [smem:[#allocation0]]
  $region65: #{tpu_custom_call.1} parent=0
    _
  %s6 = ssub.s32 1, %s4
  %s7 = scalar_select 0, %s6, %s4
  $region1: #{tpu_custom_call.1} parent=0
    #allocation5 [shape = 'u8[131072]{0}', space=vmem, size = 0x20000, scoped, tag = 'input window, operand 0']
    #allocation6 [shape = 's32[2]{0}', space=sflag, size = 0x8, scoped, tag = 'scoped memory for tpu_custom_call.1']
    #allocation7 [shape = 's32[2]{0}', space=sflag, size = 0x8, scoped, tag = 'scoped memory for tpu_custom_call.1']
    #allocation8 [shape = 'u8[262144]{0}', space=vmem, size = 0x40000, scoped, tag = 'input window, operand 1']
    #allocation9 [shape = 's32[2]{0}', space=sflag, size = 0x8, scoped, tag = 'scoped memory for tpu_custom_call.1']
    #allocation10 [shape = 'u8[262144]{0}', space=vmem, size = 0x40000, scoped, tag = 'input window, operand 2']
    #allocation11 [shape = 'u8[262144]{0}', space=vmem, size = 0x40000, scoped, tag = 'output window, operand 0']
    %8 = vsyncpa [#allocation6], 0
    %s9 = scalar_lea.sflag [#allocation6], 1
    %10 = vsyncpa %s9, 0
    %11 = vsyncpa [#allocation9], 0
    %s12 = scalar_lea.sflag [#allocation9], 1
    %13 = vsyncpa %s12, 0
    %14 = vsyncpa [#allocation7], 0
    %s15 = scalar_lea.sflag [#allocation7], 1
    %16 = vsyncpa %s15, 0
    loop: start=0, step=1, limit=18
    $region2: #{tpu_custom_call.1} parent=1 // loop_pre_header
      _
    $region3: #{tpu_custom_call.1} parent=1 // loop_header
      %s18 = sphi 0, %s22
      %p19 = scmp.ge.s32.totalorder %s18, 18
      %s25 = sphi 0, %s44
      %s26 = sphi 0, %s40
      %s27 = sphi 0, %s36
      %s28 = sphi 0, %s25
      %s29 = sphi 0, %s26
      %s30 = sphi 0, %s27
      %s31 = sphi 0, %s28
      %s32 = sphi 0, %s29
      %s33 = sphi 0, %s30
      %s49 = sphi 0, %s51
      %s52 = sphi 0, %s49
      %s53 = sphi 0, %s52
      %s69 = sphi 0, %s53
      %s77 = sphi 0, %s79
      %s80 = sphi 0, %s77
      %s81 = sphi 0, %s80
      %s97 = sphi 0, %s81
      %s105 = sphi 0, %s107
      %s108 = sphi 0, %s105
      %s109 = sphi 0, %s108
      %s125 = sphi 0, %s109
      %s133 = sphi 0, %s135
      %s136 = sphi 0, %s133
      %s137 = sphi 0, %s136
      %s153 = sphi 0, %s137
    $region4: #{tpu_custom_call.1} parent=1 // loop_header_branch
      %21 = sbr.rel (%p19) target = $region8
    $region5: #{tpu_custom_call.1} parent=1 // loop_body
      %s23 = ssub.s32 %s18, 1
      %s24 = ssub.s32 %s18, 2
      %s34 = sadd.s32 1, %s27
      %p35 = scmp.ge.s32.totalorder %s34, 2
      %s36 = scalar_select %p35, 0, %s34
      %s37 = sadd.s32 1, %s26
      %s38 = scalar_select %p35, %s37, %s26
      %p39 = scmp.ge.s32.totalorder %s38, 4
      %s40 = scalar_select %p39, 0, %s38
      %s41 = sadd.s32 1, %s25
      %s42 = scalar_select %p39, %s41, %s25
      %p43 = scmp.ge.s32.totalorder %s42, 2
      %s44 = scalar_select %p43, 0, %s42
      %s45 = ssub.s32 %s25, %s44
      %s46 = ssub.s32 %s26, %s40
      %s47 = sor.u32 %s45, %s46
      %p48 = scmp.eq.s32.totalorder %s47, 0
      %s50 = sadd.s32 %s49, 1
      %s51 = scalar_select %p48, %s49, %s50
      %p54 = pneg %p48
      %p55 = scmp.eq.s32.totalorder %s18, 15
      %p56 = por %p54, %p55
      %p57 = scmp.ne.s32.totalorder %s49, %s52
      %p58 = scmp.eq.s32.totalorder %s18, 0
      %p59 = por %p57, %p58
      %p60 = scmp.ne.s32.totalorder %s49, %s52
      %p61 = scmp.eq.s32.totalorder %s23, 15
      %p62 = por %p60, %p61
      %p63 = scmp.ne.s32.totalorder %s52, %s53
      %p64 = scmp.eq.s32.totalorder %s23, 0
      %p65 = por %p63, %p64
      %p66 = scmp.ne.s32.totalorder %s52, %s53
      %p67 = scmp.eq.s32.totalorder %s24, 15
      %p68 = por %p66, %p67
      %p70 = scmp.ne.s32.totalorder %s53, %s69
      %p71 = scmp.eq.s32.totalorder %s24, 0
      %p72 = por %p70, %p71
      %s73 = ssub.s32 %s25, %s44
      %s74 = ssub.s32 %s27, %s36
      %s75 = sor.u32 %s73, %s74
      %p76 = scmp.eq.s32.totalorder %s75, 0
      %s78 = sadd.s32 %s77, 1
      %s79 = scalar_select %p76, %s77, %s78
      %p82 = pneg %p76
      %p83 = scmp.eq.s32.totalorder %s18, 15
      %p84 = por %p82, %p83
      %p85 = scmp.ne.s32.totalorder %s77, %s80
      %p86 = scmp.eq.s32.totalorder %s18, 0
      %p87 = por %p85, %p86
      %p88 = scmp.ne.s32.totalorder %s77, %s80
      %p89 = scmp.eq.s32.totalorder %s23, 15
      %p90 = por %p88, %p89
      %p91 = scmp.ne.s32.totalorder %s80, %s81
      %p92 = scmp.eq.s32.totalorder %s23, 0
      %p93 = por %p91, %p92
      %p94 = scmp.ne.s32.totalorder %s80, %s81
      %p95 = scmp.eq.s32.totalorder %s24, 15
      %p96 = por %p94, %p95
      %p98 = scmp.ne.s32.totalorder %s81, %s97
      %p99 = scmp.eq.s32.totalorder %s24, 0
      %p100 = por %p98, %p99
      %s101 = ssub.s32 %s25, %s44
      %s102 = ssub.s32 %s27, %s36
      %s103 = sor.u32 %s101, %s102
      %p104 = scmp.eq.s32.totalorder %s103, 0
      %s106 = sadd.s32 %s105, 1
      %s107 = scalar_select %p104, %s105, %s106
      %p110 = pneg %p104
      %p111 = scmp.eq.s32.totalorder %s18, 15
      %p112 = por %p110, %p111
      %p113 = scmp.ne.s32.totalorder %s105, %s108
      %p114 = scmp.eq.s32.totalorder %s18, 0
      %p115 = por %p113, %p114
      %p116 = scmp.ne.s32.totalorder %s105, %s108
      %p117 = scmp.eq.s32.totalorder %s23, 15
      %p118 = por %p116, %p117
      %p119 = scmp.ne.s32.totalorder %s108, %s109
      %p120 = scmp.eq.s32.totalorder %s23, 0
      %p121 = por %p119, %p120
      %p122 = scmp.ne.s32.totalorder %s108, %s109
      %p123 = scmp.eq.s32.totalorder %s24, 15
      %p124 = por %p122, %p123
      %p126 = scmp.ne.s32.totalorder %s109, %s125
      %p127 = scmp.eq.s32.totalorder %s24, 0
      %p128 = por %p126, %p127
      %s129 = ssub.s32 %s25, %s44
      %s130 = ssub.s32 %s26, %s40
      %s131 = sor.u32 %s129, %s130
      %p132 = scmp.eq.s32.totalorder %s131, 0
      %s134 = sadd.s32 %s133, 1
      %s135 = scalar_select %p132, %s133, %s134
      %p138 = pneg %p132
      %p139 = scmp.eq.s32.totalorder %s18, 15
      %p140 = por %p138, %p139
      %p141 = scmp.ne.s32.totalorder %s133, %s136
      %p142 = scmp.eq.s32.totalorder %s18, 0
      %p143 = por %p141, %p142
      %p144 = scmp.ne.s32.totalorder %s133, %s136
      %p145 = scmp.eq.s32.totalorder %s23, 15
      %p146 = por %p144, %p145
      %p147 = scmp.ne.s32.totalorder %s136, %s137
      %p148 = scmp.eq.s32.totalorder %s23, 0
      %p149 = por %p147, %p148
      %p150 = scmp.ne.s32.totalorder %s136, %s137
      %p151 = scmp.eq.s32.totalorder %s24, 15
      %p152 = por %p150, %p151
      %p154 = scmp.ne.s32.totalorder %s137, %s153
      %p155 = scmp.eq.s32.totalorder %s24, 0
      %p156 = por %p154, %p155
      %p157 = scmp.le.s32.totalorder 1, %s18
      %p158 = scmp.lt.s32.totalorder %s18, 17
      %p159 = pnand %p157, %p158
      %p160 = pneg %p159
      // Predicated region
      $region9: #{tpu_custom_call.1} parent=5 // pred_check
        _
      $region10: #{tpu_custom_call.1} parent=5 // pred_check_branch
        %162 = sbr.rel (%p159) target = $region12
      $region11: #{tpu_custom_call.1} parent=5 // pred_region
        %s163 = ssub.s32 %s18, 1
      $region12: #{tpu_custom_call.1} parent=5 // pred_fallthru
        _
      %p164 = scmp.lt.s32.totalorder %s18, 16
      // Predicated region
      $region13: #{tpu_custom_call.1} parent=5 // pred_check
        %p165 = pneg %p164
      $region14: #{tpu_custom_call.1} parent=5 // pred_check_branch
        %167 = sbr.rel (%p165) target = $region16
      $region15: #{tpu_custom_call.1} parent=5 // pred_region
        // Predicated region
        $region17: #{tpu_custom_call.1} parent=15 // pred_check
          %p168 = pneg %p59
        $region18: #{tpu_custom_call.1} parent=15 // pred_check_branch
          %170 = sbr.rel (%p168) target = $region20
        $region19: #{tpu_custom_call.1} parent=15 // pred_region
          %s171 = sand.u32 %s49, 1
          %s172 = scalar_lea.sflag [#allocation6], %s171
          %s173 = sand.u32 %s49, 1
          %s174 = smul.addr %s173, 128
          %s175 = scalar_lea.vmem [#allocation5], %s174
          %s176 = smul.u32 32, %s26
          %s178 = ssub.s32 2048, 2048
          %179 = vsyncadd %s172, %s178
          %s180 = smul.addr %s25, 128
          %s181 = sadd.s32 %s176, %s180
          %s182 = smul.addr %s181, 64
          %s183 = scalar_lea.hbm %s0, %s182
          %s184 = sshll.u32 %s175, 4
          %s185 = int_to_ptr.vmem [resolvable:$true] %s184
          %190 = dma.hbm_to_vmem [thread:$0]  %s183, 2048, %s185, %s172, 64, 64, 4
        $region20: #{tpu_custom_call.1} parent=15 // pred_fallthru
          _
        // Predicated region
        $region21: #{tpu_custom_call.1} parent=15 // pred_check
          %p191 = pneg %p87
        $region22: #{tpu_custom_call.1} parent=15 // pred_check_branch
          %193 = sbr.rel (%p191) target = $region24
        $region23: #{tpu_custom_call.1} parent=15 // pred_region
          %s194 = sand.u32 %s18, 1
          %s195 = scalar_lea.sflag [#allocation9], %s194
          %s196 = sand.u32 %s77, 1
          %s197 = smul.addr %s196, 256
          %s198 = scalar_lea.vmem [#allocation8], %s197
          %s199 = smul.u32 4, %s27
          %s201 = ssub.s32 4096, 4096
          %202 = vsyncadd %s195, %s201
          %s203 = smul.addr %s25, 128
          %s204 = sadd.s32 %s199, %s203
          %s205 = smul.addr %s204, 64
          %s206 = scalar_lea.hbm %s1, %s205
          %s207 = sshll.u32 %s198, 4
          %s208 = int_to_ptr.vmem [resolvable:$true] %s207
          %213 = dma.hbm_to_vmem [thread:$0]  %s206, 4096, %s208, %s195, 512, 256, 16
        $region24: #{tpu_custom_call.1} parent=15 // pred_fallthru
          _
        // Predicated region
        $region25: #{tpu_custom_call.1} parent=15 // pred_check
          %p214 = pneg %p115
        $region26: #{tpu_custom_call.1} parent=15 // pred_check_branch
          %216 = sbr.rel (%p214) target = $region28
        $region27: #{tpu_custom_call.1} parent=15 // pred_region
          %s217 = sand.u32 %s18, 1
          %s218 = scalar_lea.sflag [#allocation9], %s217
          %s219 = sand.u32 %s105, 1
          %s220 = smul.addr %s219, 256
          %s221 = scalar_lea.vmem [#allocation10], %s220
          %s222 = smul.u32 64, %s27
          %s224 = ssub.s32 4096, 4096
          %225 = vsyncadd %s218, %s224
          %s226 = smul.addr %s25, 128
          %s227 = sadd.s32 %s222, %s226
          %s228 = smul.addr %s227, 64
          %s229 = scalar_lea.hbm %s2, %s228
          %s230 = sshll.u32 %s221, 4
          %s231 = int_to_ptr.vmem [resolvable:$true] %s230
          %236 = dma.hbm_to_vmem [thread:$0]  %s229, 4096, %s231, %s218, 64, 64, 4
        $region28: #{tpu_custom_call.1} parent=15 // pred_fallthru
          _
      $region16: #{tpu_custom_call.1} parent=5 // pred_fallthru
        _
      %p237 = scmp.le.s32.totalorder 1, %s18
      %p238 = scmp.lt.s32.totalorder %s18, 17
      %p239 = pnand %p237, %p238
      %p240 = pneg %p239
      // Predicated region
      $region29: #{tpu_custom_call.1} parent=5 // pred_check
        _
      $region30: #{tpu_custom_call.1} parent=5 // pred_check_branch
        %242 = sbr.rel (%p239) target = $region32
      $region31: #{tpu_custom_call.1} parent=5 // pred_region
        %s243 = ssub.s32 %s18, 1
        %s244 = sand.u32 %s52, 1
        %s245 = scalar_lea.sflag [#allocation6], %s244
        %s246 = sand.u32 %s52, 1
        %s247 = smul.addr %s246, 128
        %s248 = scalar_lea.vmem [#allocation5], %s247
        // Predicated region
        $region33: #{tpu_custom_call.1} parent=31 // pred_check
          %p249 = pneg %p65
        $region34: #{tpu_custom_call.1} parent=31 // pred_check_branch
          %251 = sbr.rel (%p249) target = $region36
        $region35: #{tpu_custom_call.1} parent=31 // pred_region
          %252 = dma.done %s245, 2048
        $region36: #{tpu_custom_call.1} parent=31 // pred_fallthru
          _
        %s253 = sand.u32 %s23, 1
        %s254 = scalar_lea.sflag [#allocation9], %s253
        %s255 = sand.u32 %s80, 1
        %s256 = smul.addr %s255, 256
        %s257 = scalar_lea.vmem [#allocation8], %s256
        // Predicated region
        $region37: #{tpu_custom_call.1} parent=31 // pred_check
          %p258 = pneg %p93
        $region38: #{tpu_custom_call.1} parent=31 // pred_check_branch
          %260 = sbr.rel (%p258) target = $region40
        $region39: #{tpu_custom_call.1} parent=31 // pred_region
          %261 = dma.done %s254, 4096
        $region40: #{tpu_custom_call.1} parent=31 // pred_fallthru
          _
        %s262 = sand.u32 %s23, 1
        %s263 = scalar_lea.sflag [#allocation9], %s262
        %s264 = sand.u32 %s108, 1
        %s265 = smul.addr %s264, 256
        %s266 = scalar_lea.vmem [#allocation10], %s265
        // Predicated region
        $region41: #{tpu_custom_call.1} parent=31 // pred_check
          %p267 = pneg %p121
        $region42: #{tpu_custom_call.1} parent=31 // pred_check_branch
          %269 = sbr.rel (%p267) target = $region44
        $region43: #{tpu_custom_call.1} parent=31 // pred_region
          %270 = dma.done %s263, 4096
        $region44: #{tpu_custom_call.1} parent=31 // pred_fallthru
          _
        %s271 = sand.u32 %s52, 1
        %s272 = scalar_lea.sflag [#allocation6], %s271
        %s273 = sand.u32 %s52, 1
        %s274 = smul.addr %s273, 128
        %s275 = scalar_lea.vmem [#allocation5], %s274
        %p276 = pneg %p65
        %p277 = pneg %p62
        %s278 = sand.u32 %s23, 1
        %s279 = scalar_lea.sflag [#allocation9], %s278
        %s280 = sand.u32 %s80, 1
        %s281 = smul.addr %s280, 256
        %s282 = scalar_lea.vmem [#allocation8], %s281
        %p283 = pneg %p93
        %p284 = pneg %p90
        %s285 = sand.u32 %s23, 1
        %s286 = scalar_lea.sflag [#allocation9], %s285
        %s287 = sand.u32 %s108, 1
        %s288 = smul.addr %s287, 256
        %s289 = scalar_lea.vmem [#allocation10], %s288
        %p290 = pneg %p121
        %p291 = pneg %p118
        %p292 = pneg %p149
        %p293 = pneg %p146
        %s294 = sand.u32 %s136, 1
        %s295 = scalar_lea.sflag [#allocation7], %s294
        %s296 = sand.u32 %s136, 1
        %s297 = smul.addr %s296, 256
        %s298 = scalar_lea.vmem [#allocation11], %s297
        %s299 = smul.u32 32, %s29
        %s300 = smul.u32 4, %s30
        %s301 = smul.u32 64, %s30
        %s302 = smul.u32 32, %s29
        %p304 = scmp.eq.s32.totalorder %s30, 0
        // Predicated region
        $region45: #{tpu_custom_call.1} parent=31 // pred_check
          %p305 = pneg %p304
        $region46: #{tpu_custom_call.1} parent=31 // pred_check_branch
          %307 = sbr.rel (%p305) target = $region48
        $region47: #{tpu_custom_call.1} parent=31 // pred_region
          %vm308 = vcmask 7168
          %309 = vst.msk [vmem:[#allocation2] sm:$0xff] %vm308, -inf
          %310 = vst.msk [vmem:[#allocation2 + $0x8] sm:$0xff] %vm308, -inf
          %311 = vst.msk [vmem:[#allocation2 + $0x10] sm:$0xff] %vm308, -inf
          %312 = vst.msk [vmem:[#allocation2 + $0x18] sm:$0xff] %vm308, -inf
          %313 = vst.msk [vmem:[#allocation2 + $0x20] sm:$0xff] %vm308, -inf
          %314 = vst.msk [vmem:[#allocation2 + $0x28] sm:$0xff] %vm308, -inf
          %315 = vst.msk [vmem:[#allocation2 + $0x30] sm:$0xff] %vm308, -inf
          %316 = vst.msk [vmem:[#allocation2 + $0x38] sm:$0xff] %vm308, -inf
          %317 = vst.msk [vmem:[#allocation2 + $0x40] sm:$0xff] %vm308, -inf
          %318 = vst.msk [vmem:[#allocation2 + $0x48] sm:$0xff] %vm308, -inf
          %319 = vst.msk [vmem:[#allocation2 + $0x50] sm:$0xff] %vm308, -inf
          %320 = vst.msk [vmem:[#allocation2 + $0x58] sm:$0xff] %vm308, -inf
          %321 = vst.msk [vmem:[#allocation2 + $0x60] sm:$0xff] %vm308, -inf
          %322 = vst.msk [vmem:[#allocation2 + $0x68] sm:$0xff] %vm308, -inf
          %323 = vst.msk [vmem:[#allocation2 + $0x70] sm:$0xff] %vm308, -inf
          %324 = vst.msk [vmem:[#allocation2 + $0x78] sm:$0xff] %vm308, -inf
          %325 = vst.msk [vmem:[#allocation2 + $0x80] sm:$0xff] %vm308, -inf
          %326 = vst.msk [vmem:[#allocation2 + $0x88] sm:$0xff] %vm308, -inf
          %327 = vst.msk [vmem:[#allocation2 + $0x90] sm:$0xff] %vm308, -inf
          %328 = vst.msk [vmem:[#allocation2 + $0x98] sm:$0xff] %vm308, -inf
          %329 = vst.msk [vmem:[#allocation2 + $0xa0] sm:$0xff] %vm308, -inf
          %330 = vst.msk [vmem:[#allocation2 + $0xa8] sm:$0xff] %vm308, -inf
          %331 = vst.msk [vmem:[#allocation2 + $0xb0] sm:$0xff] %vm308, -inf
          %332 = vst.msk [vmem:[#allocation2 + $0xb8] sm:$0xff] %vm308, -inf
          %333 = vst.msk [vmem:[#allocation2 + $0xc0] sm:$0xff] %vm308, -inf
          %334 = vst.msk [vmem:[#allocation2 + $0xc8] sm:$0xff] %vm308, -inf
          %335 = vst.msk [vmem:[#allocation2 + $0xd0] sm:$0xff] %vm308, -inf
          %336 = vst.msk [vmem:[#allocation2 + $0xd8] sm:$0xff] %vm308, -inf
          %337 = vst.msk [vmem:[#allocation2 + $0xe0] sm:$0xff] %vm308, -inf
          %338 = vst.msk [vmem:[#allocation2 + $0xe8] sm:$0xff] %vm308, -inf
          %339 = vst.msk [vmem:[#allocation2 + $0xf0] sm:$0xff] %vm308, -inf
          %340 = vst.msk [vmem:[#allocation2 + $0xf8] sm:$0xff] %vm308, -inf
          %341 = vst.msk [vmem:[#allocation3] sm:$0xff] %vm308, 0.0
          %342 = vst.msk [vmem:[#allocation3 + $0x8] sm:$0xff] %vm308, 0.0
          %343 = vst.msk [vmem:[#allocation3 + $0x10] sm:$0xff] %vm308, 0.0
          %344 = vst.msk [vmem:[#allocation3 + $0x18] sm:$0xff] %vm308, 0.0
          %345 = vst.msk [vmem:[#allocation3 + $0x20] sm:$0xff] %vm308, 0.0
          %346 = vst.msk [vmem:[#allocation3 + $0x28] sm:$0xff] %vm308, 0.0
          %347 = vst.msk [vmem:[#allocation3 + $0x30] sm:$0xff] %vm308, 0.0
          %348 = vst.msk [vmem:[#allocation3 + $0x38] sm:$0xff] %vm308, 0.0
          %349 = vst.msk [vmem:[#allocation3 + $0x40] sm:$0xff] %vm308, 0.0
          %350 = vst.msk [vmem:[#allocation3 + $0x48] sm:$0xff] %vm308, 0.0
          %351 = vst.msk [vmem:[#allocation3 + $0x50] sm:$0xff] %vm308, 0.0
          %352 = vst.msk [vmem:[#allocation3 + $0x58] sm:$0xff] %vm308, 0.0
          %353 = vst.msk [vmem:[#allocation3 + $0x60] sm:$0xff] %vm308, 0.0
          %354 = vst.msk [vmem:[#allocation3 + $0x68] sm:$0xff] %vm308, 0.0
          %355 = vst.msk [vmem:[#allocation3 + $0x70] sm:$0xff] %vm308, 0.0
          %356 = vst.msk [vmem:[#allocation3 + $0x78] sm:$0xff] %vm308, 0.0
          %357 = vst.msk [vmem:[#allocation3 + $0x80] sm:$0xff] %vm308, 0.0
          %358 = vst.msk [vmem:[#allocation3 + $0x88] sm:$0xff] %vm308, 0.0
          %359 = vst.msk [vmem:[#allocation3 + $0x90] sm:$0xff] %vm308, 0.0
          %360 = vst.msk [vmem:[#allocation3 + $0x98] sm:$0xff] %vm308, 0.0
          %361 = vst.msk [vmem:[#allocation3 + $0xa0] sm:$0xff] %vm308, 0.0
          %362 = vst.msk [vmem:[#allocation3 + $0xa8] sm:$0xff] %vm308, 0.0
          %363 = vst.msk [vmem:[#allocation3 + $0xb0] sm:$0xff] %vm308, 0.0
          %364 = vst.msk [vmem:[#allocation3 + $0xb8] sm:$0xff] %vm308, 0.0
          %365 = vst.msk [vmem:[#allocation3 + $0xc0] sm:$0xff] %vm308, 0.0
          %366 = vst.msk [vmem:[#allocation3 + $0xc8] sm:$0xff] %vm308, 0.0
          %367 = vst.msk [vmem:[#allocation3 + $0xd0] sm:$0xff] %vm308, 0.0
          %368 = vst.msk [vmem:[#allocation3 + $0xd8] sm:$0xff] %vm308, 0.0
          %369 = vst.msk [vmem:[#allocation3 + $0xe0] sm:$0xff] %vm308, 0.0
          %370 = vst.msk [vmem:[#allocation3 + $0xe8] sm:$0xff] %vm308, 0.0
          %371 = vst.msk [vmem:[#allocation3 + $0xf0] sm:$0xff] %vm308, 0.0
          %372 = vst.msk [vmem:[#allocation3 + $0xf8] sm:$0xff] %vm308, 0.0
          %373 = vst [vmem:[#allocation4] sm:$0xff] 0.0
          %374 = vst [vmem:[#allocation4 + $0x8] sm:$0xff] 0.0
          %375 = vst [vmem:[#allocation4 + $0x10] sm:$0xff] 0.0
          %376 = vst [vmem:[#allocation4 + $0x18] sm:$0xff] 0.0
          %377 = vst [vmem:[#allocation4 + $0x20] sm:$0xff] 0.0
          %378 = vst [vmem:[#allocation4 + $0x28] sm:$0xff] 0.0
          %379 = vst [vmem:[#allocation4 + $0x30] sm:$0xff] 0.0
          %380 = vst [vmem:[#allocation4 + $0x38] sm:$0xff] 0.0
          %381 = vst [vmem:[#allocation4 + $0x40] sm:$0xff] 0.0
          %382 = vst [vmem:[#allocation4 + $0x48] sm:$0xff] 0.0
          %383 = vst [vmem:[#allocation4 + $0x50] sm:$0xff] 0.0
          %384 = vst [vmem:[#allocation4 + $0x58] sm:$0xff] 0.0
          %385 = vst [vmem:[#allocation4 + $0x60] sm:$0xff] 0.0
          %386 = vst [vmem:[#allocation4 + $0x68] sm:$0xff] 0.0
          %387 = vst [vmem:[#allocation4 + $0x70] sm:$0xff] 0.0
          %388 = vst [vmem:[#allocation4 + $0x78] sm:$0xff] 0.0
          %389 = vst [vmem:[#allocation4 + $0x80] sm:$0xff] 0.0
          %390 = vst [vmem:[#allocation4 + $0x88] sm:$0xff] 0.0
          %391 = vst [vmem:[#allocation4 + $0x90] sm:$0xff] 0.0
          %392 = vst [vmem:[#allocation4 + $0x98] sm:$0xff] 0.0
          %393 = vst [vmem:[#allocation4 + $0xa0] sm:$0xff] 0.0
          %394 = vst [vmem:[#allocation4 + $0xa8] sm:$0xff] 0.0
          %395 = vst [vmem:[#allocation4 + $0xb0] sm:$0xff] 0.0
          %396 = vst [vmem:[#allocation4 + $0xb8] sm:$0xff] 0.0
          %397 = vst [vmem:[#allocation4 + $0xc0] sm:$0xff] 0.0
          %398 = vst [vmem:[#allocation4 + $0xc8] sm:$0xff] 0.0
          %399 = vst [vmem:[#allocation4 + $0xd0] sm:$0xff] 0.0
          %400 = vst [vmem:[#allocation4 + $0xd8] sm:$0xff] 0.0
          %401 = vst [vmem:[#allocation4 + $0xe0] sm:$0xff] 0.0
          %402 = vst [vmem:[#allocation4 + $0xe8] sm:$0xff] 0.0
          %403 = vst [vmem:[#allocation4 + $0xf0] sm:$0xff] 0.0
          %404 = vst [vmem:[#allocation4 + $0xf8] sm:$0xff] 0.0
        $region48: #{tpu_custom_call.1} parent=31 // pred_fallthru
          _
        %v405 = vld [vmem:[%s248] sm:$0xf]
        %v406 = vld [vmem:[%s248 + $0x4] sm:$0xf]
        %v407 = vld [vmem:[%s248 + $0x8] sm:$0xf]
        %v408 = vld [vmem:[%s248 + $0xc] sm:$0xf]
        %v409 = vld [vmem:[%s248 + $0x10] sm:$0xf]
        %v410 = vld [vmem:[%s248 + $0x14] sm:$0xf]
        %v411 = vld [vmem:[%s248 + $0x18] sm:$0xf]
        %v412 = vld [vmem:[%s248 + $0x1c] sm:$0xf]
        %v413 = vld [vmem:[%s248 + $0x20] sm:$0xf]
        %v414 = vld [vmem:[%s248 + $0x24] sm:$0xf]
        %v415 = vld [vmem:[%s248 + $0x28] sm:$0xf]
        %v416 = vld [vmem:[%s248 + $0x2c] sm:$0xf]
        %v417 = vld [vmem:[%s248 + $0x30] sm:$0xf]
        %v418 = vld [vmem:[%s248 + $0x34] sm:$0xf]
        %v419 = vld [vmem:[%s248 + $0x38] sm:$0xf]
        %v420 = vld [vmem:[%s248 + $0x3c] sm:$0xf]
        %v421 = vld [vmem:[%s248 + $0x40] sm:$0xf]
        %v422 = vld [vmem:[%s248 + $0x44] sm:$0xf]
        %v423 = vld [vmem:[%s248 + $0x48] sm:$0xf]
        %v424 = vld [vmem:[%s248 + $0x4c] sm:$0xf]
        %v425 = vld [vmem:[%s248 + $0x50] sm:$0xf]
        %v426 = vld [vmem:[%s248 + $0x54] sm:$0xf]
        %v427 = vld [vmem:[%s248 + $0x58] sm:$0xf]
        %v428 = vld [vmem:[%s248 + $0x5c] sm:$0xf]
        %v429 = vld [vmem:[%s248 + $0x60] sm:$0xf]
        %v430 = vld [vmem:[%s248 + $0x64] sm:$0xf]
        %v431 = vld [vmem:[%s248 + $0x68] sm:$0xf]
        %v432 = vld [vmem:[%s248 + $0x6c] sm:$0xf]
        %v433 = vld [vmem:[%s248 + $0x70] sm:$0xf]
        %v434 = vld [vmem:[%s248 + $0x74] sm:$0xf]
        %v435 = vld [vmem:[%s248 + $0x78] sm:$0xf]
        %v436 = vld [vmem:[%s248 + $0x7c] sm:$0xf]
        %v437 = vld [vmem:[%s257] sm:$0xff]
        %v438 = vld [vmem:[%s257 + $0x8] sm:$0xff]
        %v439 = vld [vmem:[%s257 + $0x10] sm:$0xff]
        %v440 = vld [vmem:[%s257 + $0x18] sm:$0xff]
        %v441 = vld [vmem:[%s257 + $0x20] sm:$0xff]
        %v442 = vld [vmem:[%s257 + $0x28] sm:$0xff]
        %v443 = vld [vmem:[%s257 + $0x30] sm:$0xff]
        %v444 = vld [vmem:[%s257 + $0x38] sm:$0xff]
        %v445 = vld [vmem:[%s257 + $0x40] sm:$0xff]
        %v446 = vld [vmem:[%s257 + $0x48] sm:$0xff]
        %v447 = vld [vmem:[%s257 + $0x50] sm:$0xff]
        %v448 = vld [vmem:[%s257 + $0x58] sm:$0xff]
        %v449 = vld [vmem:[%s257 + $0x60] sm:$0xff]
        %v450 = vld [vmem:[%s257 + $0x68] sm:$0xff]
        %v451 = vld [vmem:[%s257 + $0x70] sm:$0xff]
        %v452 = vld [vmem:[%s257 + $0x78] sm:$0xff]
        %v453 = vld [vmem:[%s257 + $0x80] sm:$0xff]
        %v454 = vld [vmem:[%s257 + $0x88] sm:$0xff]
        %v455 = vld [vmem:[%s257 + $0x90] sm:$0xff]
        %v456 = vld [vmem:[%s257 + $0x98] sm:$0xff]
        %v457 = vld [vmem:[%s257 + $0xa0] sm:$0xff]
        %v458 = vld [vmem:[%s257 + $0xa8] sm:$0xff]
        %v459 = vld [vmem:[%s257 + $0xb0] sm:$0xff]
        %v460 = vld [vmem:[%s257 + $0xb8] sm:$0xff]
        %v461 = vld [vmem:[%s257 + $0xc0] sm:$0xff]
        %v462 = vld [vmem:[%s257 + $0xc8] sm:$0xff]
        %v463 = vld [vmem:[%s257 + $0xd0] sm:$0xff]
        %v464 = vld [vmem:[%s257 + $0xd8] sm:$0xff]
        %v465 = vld [vmem:[%s257 + $0xe0] sm:$0xff]
        %v466 = vld [vmem:[%s257 + $0xe8] sm:$0xff]
        %v467 = vld [vmem:[%s257 + $0xf0] sm:$0xff]
        %v468 = vld [vmem:[%s257 + $0xf8] sm:$0xff]
        %v501 = vunpack.c.l.b16 %v405
        %v502 = vunpack.c.l.b16 %v406
        %v503 = vunpack.c.l.b16 %v407
        %v504 = vunpack.c.l.b16 %v408
        %v505 = vunpack.c.l.b16 %v409
        %v506 = vunpack.c.l.b16 %v410
        %v507 = vunpack.c.l.b16 %v411
        %v508 = vunpack.c.l.b16 %v412
        %v509 = vunpack.c.l.b16 %v413
        %v510 = vunpack.c.l.b16 %v414
        %v511 = vunpack.c.l.b16 %v415
        %v512 = vunpack.c.l.b16 %v416
        %v513 = vunpack.c.l.b16 %v417
        %v514 = vunpack.c.l.b16 %v418
        %v515 = vunpack.c.l.b16 %v419
        %v516 = vunpack.c.l.b16 %v420
        %v517 = vunpack.c.l.b16 %v421
        %v518 = vunpack.c.l.b16 %v422
        %v519 = vunpack.c.l.b16 %v423
        %v520 = vunpack.c.l.b16 %v424
        %v521 = vunpack.c.l.b16 %v425
        %v522 = vunpack.c.l.b16 %v426
        %v523 = vunpack.c.l.b16 %v427
        %v524 = vunpack.c.l.b16 %v428
        %v525 = vunpack.c.l.b16 %v429
        %v526 = vunpack.c.l.b16 %v430
        %v527 = vunpack.c.l.b16 %v431
        %v528 = vunpack.c.l.b16 %v432
        %v529 = vunpack.c.l.b16 %v433
        %v530 = vunpack.c.l.b16 %v434
        %v531 = vunpack.c.l.b16 %v435
        %v532 = vunpack.c.l.b16 %v436
        %v533 = vpack.c.b16 %v502, %v501
        %v534 = vpack.c.b16 %v504, %v503
        %v535 = vpack.c.b16 %v506, %v505
        %v536 = vpack.c.b16 %v508, %v507
        %v537 = vpack.c.b16 %v510, %v509
        %v538 = vpack.c.b16 %v512, %v511
        %v539 = vpack.c.b16 %v514, %v513
        %v540 = vpack.c.b16 %v516, %v515
        %v541 = vpack.c.b16 %v518, %v517
        %v542 = vpack.c.b16 %v520, %v519
        %v543 = vpack.c.b16 %v522, %v521
        %v544 = vpack.c.b16 %v524, %v523
        %v545 = vpack.c.b16 %v526, %v525
        %v546 = vpack.c.b16 %v528, %v527
        %v547 = vpack.c.b16 %v530, %v529
        %v548 = vpack.c.b16 %v532, %v531
        %v597 = vunpack.c.l.b16 %v437
        %v598 = vunpack.c.h.b16 %v437
        %v599 = vunpack.c.l.b16 %v438
        %v600 = vunpack.c.h.b16 %v438
        %v601 = vunpack.c.l.b16 %v439
        %v602 = vunpack.c.h.b16 %v439
        %v603 = vunpack.c.l.b16 %v440
        %v604 = vunpack.c.h.b16 %v440
        %v605 = vunpack.c.l.b16 %v441
        %v606 = vunpack.c.h.b16 %v441
        %v607 = vunpack.c.l.b16 %v442
        %v608 = vunpack.c.h.b16 %v442
        %v609 = vunpack.c.l.b16 %v443
        %v610 = vunpack.c.h.b16 %v443
        %v611 = vunpack.c.l.b16 %v444
        %v612 = vunpack.c.h.b16 %v444
        %v613 = vunpack.c.l.b16 %v445
        %v614 = vunpack.c.h.b16 %v445
        %v615 = vunpack.c.l.b16 %v446
        %v616 = vunpack.c.h.b16 %v446
        %v617 = vunpack.c.l.b16 %v447
        %v618 = vunpack.c.h.b16 %v447
        %v619 = vunpack.c.l.b16 %v448
        %v620 = vunpack.c.h.b16 %v448
        %v621 = vunpack.c.l.b16 %v449
        %v622 = vunpack.c.h.b16 %v449
        %v623 = vunpack.c.l.b16 %v450
        %v624 = vunpack.c.h.b16 %v450
        %v625 = vunpack.c.l.b16 %v451
        %v626 = vunpack.c.h.b16 %v451
        %v627 = vunpack.c.l.b16 %v452
        %v628 = vunpack.c.h.b16 %v452
        %v629 = vunpack.c.l.b16 %v453
        %v630 = vunpack.c.h.b16 %v453
        %v631 = vunpack.c.l.b16 %v454
        %v632 = vunpack.c.h.b16 %v454
        %v633 = vunpack.c.l.b16 %v455
        %v634 = vunpack.c.h.b16 %v455
        %v635 = vunpack.c.l.b16 %v456
        %v636 = vunpack.c.h.b16 %v456
        %v637 = vunpack.c.l.b16 %v457
        %v638 = vunpack.c.h.b16 %v457
        %v639 = vunpack.c.l.b16 %v458
        %v640 = vunpack.c.h.b16 %v458
        %v641 = vunpack.c.l.b16 %v459
        %v642 = vunpack.c.h.b16 %v459
        %v643 = vunpack.c.l.b16 %v460
        %v644 = vunpack.c.h.b16 %v460
        %v645 = vunpack.c.l.b16 %v461
        %v646 = vunpack.c.h.b16 %v461
        %v647 = vunpack.c.l.b16 %v462
        %v648 = vunpack.c.h.b16 %v462
        %v649 = vunpack.c.l.b16 %v463
        %v650 = vunpack.c.h.b16 %v463
        %v651 = vunpack.c.l.b16 %v464
        %v652 = vunpack.c.h.b16 %v464
        %v653 = vunpack.c.l.b16 %v465
        %v654 = vunpack.c.h.b16 %v465
        %v655 = vunpack.c.l.b16 %v466
        %v656 = vunpack.c.h.b16 %v466
        %v657 = vunpack.c.l.b16 %v467
        %v658 = vunpack.c.h.b16 %v467
        %v659 = vunpack.c.l.b16 %v468
        %v660 = vunpack.c.h.b16 %v468
        %v661 = vpack.c.b16 %v601, %v597
        %v662 = vpack.c.b16 %v602, %v598
        %v663 = vpack.c.b16 %v603, %v599
        %v664 = vpack.c.b16 %v604, %v600
        %v665 = vpack.c.b16 %v609, %v605
        %v666 = vpack.c.b16 %v610, %v606
        %v667 = vpack.c.b16 %v611, %v607
        %v668 = vpack.c.b16 %v612, %v608
        %v669 = vpack.c.b16 %v617, %v613
        %v670 = vpack.c.b16 %v618, %v614
        %v671 = vpack.c.b16 %v619, %v615
        %v672 = vpack.c.b16 %v620, %v616
        %v673 = vpack.c.b16 %v625, %v621
        %v674 = vpack.c.b16 %v626, %v622
        %v675 = vpack.c.b16 %v627, %v623
        %v676 = vpack.c.b16 %v628, %v624
        %v677 = vpack.c.b16 %v633, %v629
        %v678 = vpack.c.b16 %v634, %v630
        %v679 = vpack.c.b16 %v635, %v631
        %v680 = vpack.c.b16 %v636, %v632
        %v681 = vpack.c.b16 %v641, %v637
        %v682 = vpack.c.b16 %v642, %v638
        %v683 = vpack.c.b16 %v643, %v639
        %v684 = vpack.c.b16 %v644, %v640
        %v685 = vpack.c.b16 %v649, %v645
        %v686 = vpack.c.b16 %v650, %v646
        %v687 = vpack.c.b16 %v651, %v647
        %v688 = vpack.c.b16 %v652, %v648
        %v689 = vpack.c.b16 %v657, %v653
        %v690 = vpack.c.b16 %v658, %v654
        %v691 = vpack.c.b16 %v659, %v655
        %v692 = vpack.c.b16 %v660, %v656
        %725 = vmatprep.subr.bf16.mxu0 %v662
        %726 = vmatpush1.bf16.msra.mxu0 %v661
        %727 = vmatprep.subr.bf16.mxu0 %v666
        %728 = vmatpush1.bf16.msra.mxu0 %v665
        %729 = vmatprep.subr.bf16.mxu0 %v670
        %730 = vmatpush1.bf16.msra.mxu0 %v669
        %731 = vmatprep.subr.bf16.mxu0 %v674
        %732 = vmatpush1.bf16.msra.mxu0 %v673
        %733 = vmatprep.subr.bf16.mxu0 %v678
        %734 = vmatpush1.bf16.msra.mxu0 %v677
        %735 = vmatprep.subr.bf16.mxu0 %v682
        %736 = vmatpush1.bf16.msra.mxu0 %v681
        %737 = vmatprep.subr.bf16.mxu0 %v686
        %738 = vmatpush1.bf16.msra.mxu0 %v685
        %739 = vmatprep.subr.bf16.mxu0 %v690
        %740 = vmatpush1.bf16.msra.mxu0 %v689
        %741 = vmatprep.subr.bf16.mxu0 0
        %742 = vmatpush1.bf16.msra.mxu0 0
        %743 = vmatprep.subr.bf16.mxu0 0
        %744 = vmatpush1.bf16.msra.mxu0 0
        %745 = vmatprep.subr.bf16.mxu0 0
        %746 = vmatpush1.bf16.msra.mxu0 0
        %747 = vmatprep.subr.bf16.mxu0 0
        %748 = vmatpush1.bf16.msra.mxu0 0
        %749 = vmatprep.subr.bf16.mxu0 0
        %750 = vmatpush1.bf16.msra.mxu0 0
        %751 = vmatprep.subr.bf16.mxu0 0
        %752 = vmatpush1.bf16.msra.mxu0 0
        %753 = vmatprep.subr.bf16.mxu0 0
        %754 = vmatpush1.bf16.msra.mxu0 0
        %755 = vmatprep.subr.bf16.mxu0 0
        %756 = vmatpush1.bf16.msra.mxu0 0
        %757 = vmatprep.mubr.bf16.mxu0 0
        %758 = vmatmul.mubr.bf16.gmra.mrb[0].mxu0 %v533
        %v759 = vpop.f32.mrb[0].mxu0
        %v760 = vadd.f32 0.0, %v759
        %v761 = vpop.f32.mrb[0].mxu0
        %v762 = vadd.f32 0.0, %v761
        %v763 = vpop.f32.mrb[0].mxu0
        %v764 = vadd.f32 0.0, %v763
        %v765 = vpop.f32.mrb[0].mxu0
        %v766 = vadd.f32 0.0, %v765
        %767 = vmatprep.mubr.bf16.mxu0 0
        %768 = vmatmul.mubr.bf16.gmra.mrb[0].mxu0 %v534
        %v769 = vpop.f32.mrb[0].mxu0
        %v770 = vadd.f32 0.0, %v769
        %v771 = vpop.f32.mrb[0].mxu0
        %v772 = vadd.f32 0.0, %v771
        %v773 = vpop.f32.mrb[0].mxu0
        %v774 = vadd.f32 0.0, %v773
        %v775 = vpop.f32.mrb[0].mxu0
        %v776 = vadd.f32 0.0, %v775
        %777 = vmatprep.mubr.bf16.mxu0 0
        %778 = vmatmul.mubr.bf16.gmra.mrb[0].mxu0 %v535
        %v779 = vpop.f32.mrb[0].mxu0
        %v780 = vadd.f32 0.0, %v779
        %v781 = vpop.f32.mrb[0].mxu0
        %v782 = vadd.f32 0.0, %v781
        %v783 = vpop.f32.mrb[0].mxu0
        %v784 = vadd.f32 0.0, %v783
        %v785 = vpop.f32.mrb[0].mxu0
        %v786 = vadd.f32 0.0, %v785
        %787 = vmatprep.mubr.bf16.mxu0 0
        %788 = vmatmul.mubr.bf16.gmra.mrb[0].mxu0 %v536
        %v789 = vpop.f32.mrb[0].mxu0
        %v790 = vadd.f32 0.0, %v789
        %v791 = vpop.f32.mrb[0].mxu0
        %v792 = vadd.f32 0.0, %v791
        %v793 = vpop.f32.mrb[0].mxu0
        %v794 = vadd.f32 0.0, %v793
        %v795 = vpop.f32.mrb[0].mxu0
        %v796 = vadd.f32 0.0, %v795
        %797 = vmatprep.mubr.bf16.mxu0 0
        %798 = vmatmul.mubr.bf16.gmra.mrb[0].mxu0 %v537
        %v799 = vpop.f32.mrb[0].mxu0
        %v800 = vadd.f32 0.0, %v799
        %v801 = vpop.f32.mrb[0].mxu0
        %v802 = vadd.f32 0.0, %v801
        %v803 = vpop.f32.mrb[0].mxu0
        %v804 = vadd.f32 0.0, %v803
        %v805 = vpop.f32.mrb[0].mxu0
        %v806 = vadd.f32 0.0, %v805
        %807 = vmatprep.mubr.bf16.mxu0 0
        %808 = vmatmul.mubr.bf16.gmra.mrb[0].mxu0 %v538
        %v809 = vpop.f32.mrb[0].mxu0
        %v810 = vadd.f32 0.0, %v809
        %v811 = vpop.f32.mrb[0].mxu0
        %v812 = vadd.f32 0.0, %v811
        %v813 = vpop.f32.mrb[0].mxu0
        %v814 = vadd.f32 0.0, %v813
        %v815 = vpop.f32.mrb[0].mxu0
        %v816 = vadd.f32 0.0, %v815
        %817 = vmatprep.mubr.bf16.mxu0 0
        %818 = vmatmul.mubr.bf16.gmra.mrb[0].mxu0 %v539
        %v819 = vpop.f32.mrb[0].mxu0
        %v820 = vadd.f32 0.0, %v819
        %v821 = vpop.f32.mrb[0].mxu0
        %v822 = vadd.f32 0.0, %v821
        %v823 = vpop.f32.mrb[0].mxu0
        %v824 = vadd.f32 0.0, %v823
        %v825 = vpop.f32.mrb[0].mxu0
        %v826 = vadd.f32 0.0, %v825
        %827 = vmatprep.mubr.bf16.mxu0 0
        %828 = vmatmul.mubr.bf16.gmra.mrb[0].mxu0 %v540
        %v829 = vpop.f32.mrb[0].mxu0
        %v830 = vadd.f32 0.0, %v829
        %v831 = vpop.f32.mrb[0].mxu0
        %v832 = vadd.f32 0.0, %v831
        %v833 = vpop.f32.mrb[0].mxu0
        %v834 = vadd.f32 0.0, %v833
        %v835 = vpop.f32.mrb[0].mxu0
        %v836 = vadd.f32 0.0, %v835
        %837 = vmatprep.mubr.bf16.mxu0 0
        %838 = vmatmul.mubr.bf16.gmra.mrb[0].mxu0 %v541
        %v839 = vpop.f32.mrb[0].mxu0
        %v840 = vadd.f32 0.0, %v839
        %v841 = vpop.f32.mrb[0].mxu0
        %v842 = vadd.f32 0.0, %v841
        %v843 = vpop.f32.mrb[0].mxu0
        %v844 = vadd.f32 0.0, %v843
        %v845 = vpop.f32.mrb[0].mxu0
        %v846 = vadd.f32 0.0, %v845
        %847 = vmatprep.mubr.bf16.mxu0 0
        %848 = vmatmul.mubr.bf16.gmra.mrb[0].mxu0 %v542
        %v849 = vpop.f32.mrb[0].mxu0
        %v850 = vadd.f32 0.0, %v849
        %v851 = vpop.f32.mrb[0].mxu0
        %v852 = vadd.f32 0.0, %v851
        %v853 = vpop.f32.mrb[0].mxu0
        %v854 = vadd.f32 0.0, %v853
        %v855 = vpop.f32.mrb[0].mxu0
        %v856 = vadd.f32 0.0, %v855
        %857 = vmatprep.mubr.bf16.mxu0 0
        %858 = vmatmul.mubr.bf16.gmra.mrb[0].mxu0 %v543
        %v859 = vpop.f32.mrb[0].mxu0
        %v860 = vadd.f32 0.0, %v859
        %v861 = vpop.f32.mrb[0].mxu0
        %v862 = vadd.f32 0.0, %v861
        %v863 = vpop.f32.mrb[0].mxu0
        %v864 = vadd.f32 0.0, %v863
        %v865 = vpop.f32.mrb[0].mxu0
        %v866 = vadd.f32 0.0, %v865
        %867 = vmatprep.mubr.bf16.mxu0 0
        %868 = vmatmul.mubr.bf16.gmra.mrb[0].mxu0 %v544
        %v869 = vpop.f32.mrb[0].mxu0
        %v870 = vadd.f32 0.0, %v869
        %v871 = vpop.f32.mrb[0].mxu0
        %v872 = vadd.f32 0.0, %v871
        %v873 = vpop.f32.mrb[0].mxu0
        %v874 = vadd.f32 0.0, %v873
        %v875 = vpop.f32.mrb[0].mxu0
        %v876 = vadd.f32 0.0, %v875
        %877 = vmatprep.mubr.bf16.mxu0 0
        %878 = vmatmul.mubr.bf16.gmra.mrb[0].mxu0 %v545
        %v879 = vpop.f32.mrb[0].mxu0
        %v880 = vadd.f32 0.0, %v879
        %v881 = vpop.f32.mrb[0].mxu0
        %v882 = vadd.f32 0.0, %v881
        %v883 = vpop.f32.mrb[0].mxu0
        %v884 = vadd.f32 0.0, %v883
        %v885 = vpop.f32.mrb[0].mxu0
        %v886 = vadd.f32 0.0, %v885
        %887 = vmatprep.mubr.bf16.mxu0 0
        %888 = vmatmul.mubr.bf16.gmra.mrb[0].mxu0 %v546
        %v889 = vpop.f32.mrb[0].mxu0
        %v890 = vadd.f32 0.0, %v889
        %v891 = vpop.f32.mrb[0].mxu0
        %v892 = vadd.f32 0.0, %v891
        %v893 = vpop.f32.mrb[0].mxu0
        %v894 = vadd.f32 0.0, %v893
        %v895 = vpop.f32.mrb[0].mxu0
        %v896 = vadd.f32 0.0, %v895
        %897 = vmatprep.mubr.bf16.mxu0 0
        %898 = vmatmul.mubr.bf16.gmra.mrb[0].mxu0 %v547
        %v899 = vpop.f32.mrb[0].mxu0
        %v900 = vadd.f32 0.0, %v899
        %v901 = vpop.f32.mrb[0].mxu0
        %v902 = vadd.f32 0.0, %v901
        %v903 = vpop.f32.mrb[0].mxu0
        %v904 = vadd.f32 0.0, %v903
        %v905 = vpop.f32.mrb[0].mxu0
        %v906 = vadd.f32 0.0, %v905
        %907 = vmatprep.mubr.bf16.mxu0 0
        %908 = vmatmul.mubr.bf16.gmra.mrb[0].mxu0 %v548
        %v909 = vpop.f32.mrb[0].mxu0
        %v910 = vadd.f32 0.0, %v909
        %v911 = vpop.f32.mrb[0].mxu0
        %v912 = vadd.f32 0.0, %v911
        %v913 = vpop.f32.mrb[0].mxu0
        %v914 = vadd.f32 0.0, %v913
        %v915 = vpop.f32.mrb[0].mxu0
        %v916 = vadd.f32 0.0, %v915
        %917 = vdwg.mxu0
        %918 = vmatprep.subr.bf16.mxu0 %v664
        %919 = vmatpush1.bf16.msra.mxu0 %v663
        %920 = vmatprep.subr.bf16.mxu0 %v668
        %921 = vmatpush1.bf16.msra.mxu0 %v667
        %922 = vmatprep.subr.bf16.mxu0 %v672
        %923 = vmatpush1.bf16.msra.mxu0 %v671
        %924 = vmatprep.subr.bf16.mxu0 %v676
        %925 = vmatpush1.bf16.msra.mxu0 %v675
        %926 = vmatprep.subr.bf16.mxu0 %v680
        %927 = vmatpush1.bf16.msra.mxu0 %v679
        %928 = vmatprep.subr.bf16.mxu0 %v684
        %929 = vmatpush1.bf16.msra.mxu0 %v683
        %930 = vmatprep.subr.bf16.mxu0 %v688
        %931 = vmatpush1.bf16.msra.mxu0 %v687
        %932 = vmatprep.subr.bf16.mxu0 %v692
        %933 = vmatpush1.bf16.msra.mxu0 %v691
        %934 = vmatprep.subr.bf16.mxu0 0
        %935 = vmatpush1.bf16.msra.mxu0 0
        %936 = vmatprep.subr.bf16.mxu0 0
        %937 = vmatpush1.bf16.msra.mxu0 0
        %938 = vmatprep.subr.bf16.mxu0 0
        %939 = vmatpush1.bf16.msra.mxu0 0
        %940 = vmatprep.subr.bf16.mxu0 0
        %941 = vmatpush1.bf16.msra.mxu0 0
        %942 = vmatprep.subr.bf16.mxu0 0
        %943 = vmatpush1.bf16.msra.mxu0 0
        %944 = vmatprep.subr.bf16.mxu0 0
        %945 = vmatpush1.bf16.msra.mxu0 0
        %946 = vmatprep.subr.bf16.mxu0 0
        %947 = vmatpush1.bf16.msra.mxu0 0
        %948 = vmatprep.subr.bf16.mxu0 0
        %949 = vmatpush1.bf16.msra.mxu0 0
        %950 = vmatprep.mubr.bf16.mxu0 0
        %951 = vmatmul.mubr.bf16.gmra.mrb[0].mxu0 %v533
        %v952 = vpop.f32.mrb[0].mxu0
        %v953 = vadd.f32 0.0, %v952
        %v954 = vpop.f32.mrb[0].mxu0
        %v955 = vadd.f32 0.0, %v954
        %v956 = vpop.f32.mrb[0].mxu0
        %v957 = vadd.f32 0.0, %v956
        %v958 = vpop.f32.mrb[0].mxu0
        %v959 = vadd.f32 0.0, %v958
        %960 = vmatprep.mubr.bf16.mxu0 0
        %961 = vmatmul.mubr.bf16.gmra.mrb[0].mxu0 %v534
        %v962 = vpop.f32.mrb[0].mxu0
        %v963 = vadd.f32 0.0, %v962
        %v964 = vpop.f32.mrb[0].mxu0
        %v965 = vadd.f32 0.0, %v964
        %v966 = vpop.f32.mrb[0].mxu0
        %v967 = vadd.f32 0.0, %v966
        %v968 = vpop.f32.mrb[0].mxu0
        %v969 = vadd.f32 0.0, %v968
        %970 = vmatprep.mubr.bf16.mxu0 0
        %971 = vmatmul.mubr.bf16.gmra.mrb[0].mxu0 %v535
        %v972 = vpop.f32.mrb[0].mxu0
        %v973 = vadd.f32 0.0, %v972
        %v974 = vpop.f32.mrb[0].mxu0
        %v975 = vadd.f32 0.0, %v974
        %v976 = vpop.f32.mrb[0].mxu0
        %v977 = vadd.f32 0.0, %v976
        %v978 = vpop.f32.mrb[0].mxu0
        %v979 = vadd.f32 0.0, %v978
        %980 = vmatprep.mubr.bf16.mxu0 0
        %981 = vmatmul.mubr.bf16.gmra.mrb[0].mxu0 %v536
        %v982 = vpop.f32.mrb[0].mxu0
        %v983 = vadd.f32 0.0, %v982
        %v984 = vpop.f32.mrb[0].mxu0
        %v985 = vadd.f32 0.0, %v984
        %v986 = vpop.f32.mrb[0].mxu0
        %v987 = vadd.f32 0.0, %v986
        %v988 = vpop.f32.mrb[0].mxu0
        %v989 = vadd.f32 0.0, %v988
        %990 = vmatprep.mubr.bf16.mxu0 0
        %991 = vmatmul.mubr.bf16.gmra.mrb[0].mxu0 %v537
        %v992 = vpop.f32.mrb[0].mxu0
        %v993 = vadd.f32 0.0, %v992
        %v994 = vpop.f32.mrb[0].mxu0
        %v995 = vadd.f32 0.0, %v994
        %v996 = vpop.f32.mrb[0].mxu0
        %v997 = vadd.f32 0.0, %v996
        %v998 = vpop.f32.mrb[0].mxu0
        %v999 = vadd.f32 0.0, %v998
        %1000 = vmatprep.mubr.bf16.mxu0 0
        %1001 = vmatmul.mubr.bf16.gmra.mrb[0].mxu0 %v538
        %v1002 = vpop.f32.mrb[0].mxu0
        %v1003 = vadd.f32 0.0, %v1002
        %v1004 = vpop.f32.mrb[0].mxu0
        %v1005 = vadd.f32 0.0, %v1004
        %v1006 = vpop.f32.mrb[0].mxu0
        %v1007 = vadd.f32 0.0, %v1006
        %v1008 = vpop.f32.mrb[0].mxu0
        %v1009 = vadd.f32 0.0, %v1008
        %1010 = vmatprep.mubr.bf16.mxu0 0
        %1011 = vmatmul.mubr.bf16.gmra.mrb[0].mxu0 %v539
        %v1012 = vpop.f32.mrb[0].mxu0
        %v1013 = vadd.f32 0.0, %v1012
        %v1014 = vpop.f32.mrb[0].mxu0
        %v1015 = vadd.f32 0.0, %v1014
        %v1016 = vpop.f32.mrb[0].mxu0
        %v1017 = vadd.f32 0.0, %v1016
        %v1018 = vpop.f32.mrb[0].mxu0
        %v1019 = vadd.f32 0.0, %v1018
        %1020 = vmatprep.mubr.bf16.mxu0 0
        %1021 = vmatmul.mubr.bf16.gmra.mrb[0].mxu0 %v540
        %v1022 = vpop.f32.mrb[0].mxu0
        %v1023 = vadd.f32 0.0, %v1022
        %v1024 = vpop.f32.mrb[0].mxu0
        %v1025 = vadd.f32 0.0, %v1024
        %v1026 = vpop.f32.mrb[0].mxu0
        %v1027 = vadd.f32 0.0, %v1026
        %v1028 = vpop.f32.mrb[0].mxu0
        %v1029 = vadd.f32 0.0, %v1028
        %1030 = vmatprep.mubr.bf16.mxu0 0
        %1031 = vmatmul.mubr.bf16.gmra.mrb[0].mxu0 %v541
        %v1032 = vpop.f32.mrb[0].mxu0
        %v1033 = vadd.f32 0.0, %v1032
        %v1034 = vpop.f32.mrb[0].mxu0
        %v1035 = vadd.f32 0.0, %v1034
        %v1036 = vpop.f32.mrb[0].mxu0
        %v1037 = vadd.f32 0.0, %v1036
        %v1038 = vpop.f32.mrb[0].mxu0
        %v1039 = vadd.f32 0.0, %v1038
        %1040 = vmatprep.mubr.bf16.mxu0 0
        %1041 = vmatmul.mubr.bf16.gmra.mrb[0].mxu0 %v542
        %v1042 = vpop.f32.mrb[0].mxu0
        %v1043 = vadd.f32 0.0, %v1042
        %v1044 = vpop.f32.mrb[0].mxu0
        %v1045 = vadd.f32 0.0, %v1044
        %v1046 = vpop.f32.mrb[0].mxu0
        %v1047 = vadd.f32 0.0, %v1046
        %v1048 = vpop.f32.mrb[0].mxu0
        %v1049 = vadd.f32 0.0, %v1048
        %1050 = vmatprep.mubr.bf16.mxu0 0
        %1051 = vmatmul.mubr.bf16.gmra.mrb[0].mxu0 %v543
        %v1052 = vpop.f32.mrb[0].mxu0
        %v1053 = vadd.f32 0.0, %v1052
        %v1054 = vpop.f32.mrb[0].mxu0
        %v1055 = vadd.f32 0.0, %v1054
        %v1056 = vpop.f32.mrb[0].mxu0
        %v1057 = vadd.f32 0.0, %v1056
        %v1058 = vpop.f32.mrb[0].mxu0
        %v1059 = vadd.f32 0.0, %v1058
        %1060 = vmatprep.mubr.bf16.mxu0 0
        %1061 = vmatmul.mubr.bf16.gmra.mrb[0].mxu0 %v544
        %v1062 = vpop.f32.mrb[0].mxu0
        %v1063 = vadd.f32 0.0, %v1062
        %v1064 = vpop.f32.mrb[0].mxu0
        %v1065 = vadd.f32 0.0, %v1064
        %v1066 = vpop.f32.mrb[0].mxu0
        %v1067 = vadd.f32 0.0, %v1066
        %v1068 = vpop.f32.mrb[0].mxu0
        %v1069 = vadd.f32 0.0, %v1068
        %1070 = vmatprep.mubr.bf16.mxu0 0
        %1071 = vmatmul.mubr.bf16.gmra.mrb[0].mxu0 %v545
        %v1072 = vpop.f32.mrb[0].mxu0
        %v1073 = vadd.f32 0.0, %v1072
        %v1074 = vpop.f32.mrb[0].mxu0
        %v1075 = vadd.f32 0.0, %v1074
        %v1076 = vpop.f32.mrb[0].mxu0
        %v1077 = vadd.f32 0.0, %v1076
        %v1078 = vpop.f32.mrb[0].mxu0
        %v1079 = vadd.f32 0.0, %v1078
        %1080 = vmatprep.mubr.bf16.mxu0 0
        %1081 = vmatmul.mubr.bf16.gmra.mrb[0].mxu0 %v546
        %v1082 = vpop.f32.mrb[0].mxu0
        %v1083 = vadd.f32 0.0, %v1082
        %v1084 = vpop.f32.mrb[0].mxu0
        %v1085 = vadd.f32 0.0, %v1084
        %v1086 = vpop.f32.mrb[0].mxu0
        %v1087 = vadd.f32 0.0, %v1086
        %v1088 = vpop.f32.mrb[0].mxu0
        %v1089 = vadd.f32 0.0, %v1088
        %1090 = vmatprep.mubr.bf16.mxu0 0
        %1091 = vmatmul.mubr.bf16.gmra.mrb[0].mxu0 %v547
        %v1092 = vpop.f32.mrb[0].mxu0
        %v1093 = vadd.f32 0.0, %v1092
        %v1094 = vpop.f32.mrb[0].mxu0
        %v1095 = vadd.f32 0.0, %v1094
        %v1096 = vpop.f32.mrb[0].mxu0
        %v1097 = vadd.f32 0.0, %v1096
        %v1098 = vpop.f32.mrb[0].mxu0
        %v1099 = vadd.f32 0.0, %v1098
        %1100 = vmatprep.mubr.bf16.mxu0 0
        %1101 = vmatmul.mubr.bf16.gmra.mrb[0].mxu0 %v548
        %v1102 = vpop.f32.mrb[0].mxu0
        %v1103 = vadd.f32 0.0, %v1102
        %v1104 = vpop.f32.mrb[0].mxu0
        %v1105 = vadd.f32 0.0, %v1104
        %v1106 = vpop.f32.mrb[0].mxu0
        %v1107 = vadd.f32 0.0, %v1106
        %v1108 = vpop.f32.mrb[0].mxu0
        %v1109 = vadd.f32 0.0, %v1108
        %1110 = vdwg.mxu0
        %v1111 = vld [vmem:[#allocation2] sm:$0xff]
        %v1112 = vld [vmem:[#allocation2 + $0x8] sm:$0xff]
        %v1113 = vld [vmem:[#allocation2 + $0x10] sm:$0xff]
        %v1114 = vld [vmem:[#allocation2 + $0x18] sm:$0xff]
        %v1115 = vld [vmem:[#allocation2 + $0x20] sm:$0xff]
        %v1116 = vld [vmem:[#allocation2 + $0x28] sm:$0xff]
        %v1117 = vld [vmem:[#allocation2 + $0x30] sm:$0xff]
        %v1118 = vld [vmem:[#allocation2 + $0x38] sm:$0xff]
        %v1119 = vld [vmem:[#allocation2 + $0x40] sm:$0xff]
        %v1120 = vld [vmem:[#allocation2 + $0x48] sm:$0xff]
        %v1121 = vld [vmem:[#allocation2 + $0x50] sm:$0xff]
        %v1122 = vld [vmem:[#allocation2 + $0x58] sm:$0xff]
        %v1123 = vld [vmem:[#allocation2 + $0x60] sm:$0xff]
        %v1124 = vld [vmem:[#allocation2 + $0x68] sm:$0xff]
        %v1125 = vld [vmem:[#allocation2 + $0x70] sm:$0xff]
        %v1126 = vld [vmem:[#allocation2 + $0x78] sm:$0xff]
        %v1127 = vld [vmem:[#allocation2 + $0x80] sm:$0xff]
        %v1128 = vld [vmem:[#allocation2 + $0x88] sm:$0xff]
        %v1129 = vld [vmem:[#allocation2 + $0x90] sm:$0xff]
        %v1130 = vld [vmem:[#allocation2 + $0x98] sm:$0xff]
        %v1131 = vld [vmem:[#allocation2 + $0xa0] sm:$0xff]
        %v1132 = vld [vmem:[#allocation2 + $0xa8] sm:$0xff]
        %v1133 = vld [vmem:[#allocation2 + $0xb0] sm:$0xff]
        %v1134 = vld [vmem:[#allocation2 + $0xb8] sm:$0xff]
        %v1135 = vld [vmem:[#allocation2 + $0xc0] sm:$0xff]
        %v1136 = vld [vmem:[#allocation2 + $0xc8] sm:$0xff]
        %v1137 = vld [vmem:[#allocation2 + $0xd0] sm:$0xff]
        %v1138 = vld [vmem:[#allocation2 + $0xd8] sm:$0xff]
        %v1139 = vld [vmem:[#allocation2 + $0xe0] sm:$0xff]
        %v1140 = vld [vmem:[#allocation2 + $0xe8] sm:$0xff]
        %v1141 = vld [vmem:[#allocation2 + $0xf0] sm:$0xff]
        %v1142 = vld [vmem:[#allocation2 + $0xf8] sm:$0xff]
        %v1143 = vmax.f32 %v760, %v762
        %v1144 = vmax.f32 %v1143, %v953
        %v1145 = vmax.f32 %v1144, %v955
        %1146 = vmax.xlane.f32.xlu0 %v1145
        %v1147 = vpop.xlane.xlu0 %1146
        %v1148 = vmax.f32 %v764, %v766
        %v1149 = vmax.f32 %v1148, %v957
        %v1150 = vmax.f32 %v1149, %v959
        %1151 = vmax.xlane.f32.xlu0 %v1150
        %v1152 = vpop.xlane.xlu0 %1151
        %v1153 = vmax.f32 %v770, %v772
        %v1154 = vmax.f32 %v1153, %v963
        %v1155 = vmax.f32 %v1154, %v965
        %1156 = vmax.xlane.f32.xlu0 %v1155
        %v1157 = vpop.xlane.xlu0 %1156
        %v1158 = vmax.f32 %v774, %v776
        %v1159 = vmax.f32 %v1158, %v967
        %v1160 = vmax.f32 %v1159, %v969
        %1161 = vmax.xlane.f32.xlu0 %v1160
        %v1162 = vpop.xlane.xlu0 %1161
        %v1163 = vmax.f32 %v780, %v782
        %v1164 = vmax.f32 %v1163, %v973
        %v1165 = vmax.f32 %v1164, %v975
        %1166 = vmax.xlane.f32.xlu0 %v1165
        %v1167 = vpop.xlane.xlu0 %1166
        %v1168 = vmax.f32 %v784, %v786
        %v1169 = vmax.f32 %v1168, %v977
        %v1170 = vmax.f32 %v1169, %v979
        %1171 = vmax.xlane.f32.xlu0 %v1170
        %v1172 = vpop.xlane.xlu0 %1171
        %v1173 = vmax.f32 %v790, %v792
        %v1174 = vmax.f32 %v1173, %v983
        %v1175 = vmax.f32 %v1174, %v985
        %1176 = vmax.xlane.f32.xlu0 %v1175
        %v1177 = vpop.xlane.xlu0 %1176
        %v1178 = vmax.f32 %v794, %v796
        %v1179 = vmax.f32 %v1178, %v987
        %v1180 = vmax.f32 %v1179, %v989
        %1181 = vmax.xlane.f32.xlu0 %v1180
        %v1182 = vpop.xlane.xlu0 %1181
        %v1183 = vmax.f32 %v800, %v802
        %v1184 = vmax.f32 %v1183, %v993
        %v1185 = vmax.f32 %v1184, %v995
        %1186 = vmax.xlane.f32.xlu0 %v1185
        %v1187 = vpop.xlane.xlu0 %1186
        %v1188 = vmax.f32 %v804, %v806
        %v1189 = vmax.f32 %v1188, %v997
        %v1190 = vmax.f32 %v1189, %v999
        %1191 = vmax.xlane.f32.xlu0 %v1190
        %v1192 = vpop.xlane.xlu0 %1191
        %v1193 = vmax.f32 %v810, %v812
        %v1194 = vmax.f32 %v1193, %v1003
        %v1195 = vmax.f32 %v1194, %v1005
        %1196 = vmax.xlane.f32.xlu0 %v1195
        %v1197 = vpop.xlane.xlu0 %1196
        %v1198 = vmax.f32 %v814, %v816
        %v1199 = vmax.f32 %v1198, %v1007
        %v1200 = vmax.f32 %v1199, %v1009
        %1201 = vmax.xlane.f32.xlu0 %v1200
        %v1202 = vpop.xlane.xlu0 %1201
        %v1203 = vmax.f32 %v820, %v822
        %v1204 = vmax.f32 %v1203, %v1013
        %v1205 = vmax.f32 %v1204, %v1015
        %1206 = vmax.xlane.f32.xlu0 %v1205
        %v1207 = vpop.xlane.xlu0 %1206
        %v1208 = vmax.f32 %v824, %v826
        %v1209 = vmax.f32 %v1208, %v1017
        %v1210 = vmax.f32 %v1209, %v1019
        %1211 = vmax.xlane.f32.xlu0 %v1210
        %v1212 = vpop.xlane.xlu0 %1211
        %v1213 = vmax.f32 %v830, %v832
        %v1214 = vmax.f32 %v1213, %v1023
        %v1215 = vmax.f32 %v1214, %v1025
        %1216 = vmax.xlane.f32.xlu0 %v1215
        %v1217 = vpop.xlane.xlu0 %1216
        %v1218 = vmax.f32 %v834, %v836
        %v1219 = vmax.f32 %v1218, %v1027
        %v1220 = vmax.f32 %v1219, %v1029
        %1221 = vmax.xlane.f32.xlu0 %v1220
        %v1222 = vpop.xlane.xlu0 %1221
        %v1223 = vmax.f32 %v840, %v842
        %v1224 = vmax.f32 %v1223, %v1033
        %v1225 = vmax.f32 %v1224, %v1035
        %1226 = vmax.xlane.f32.xlu0 %v1225
        %v1227 = vpop.xlane.xlu0 %1226
        %v1228 = vmax.f32 %v844, %v846
        %v1229 = vmax.f32 %v1228, %v1037
        %v1230 = vmax.f32 %v1229, %v1039
        %1231 = vmax.xlane.f32.xlu0 %v1230
        %v1232 = vpop.xlane.xlu0 %1231
        %v1233 = vmax.f32 %v850, %v852
        %v1234 = vmax.f32 %v1233, %v1043
        %v1235 = vmax.f32 %v1234, %v1045
        %1236 = vmax.xlane.f32.xlu0 %v1235
        %v1237 = vpop.xlane.xlu0 %1236
        %v1238 = vmax.f32 %v854, %v856
        %v1239 = vmax.f32 %v1238, %v1047
        %v1240 = vmax.f32 %v1239, %v1049
        %1241 = vmax.xlane.f32.xlu0 %v1240
        %v1242 = vpop.xlane.xlu0 %1241
        %v1243 = vmax.f32 %v860, %v862
        %v1244 = vmax.f32 %v1243, %v1053
        %v1245 = vmax.f32 %v1244, %v1055
        %1246 = vmax.xlane.f32.xlu0 %v1245
        %v1247 = vpop.xlane.xlu0 %1246
        %v1248 = vmax.f32 %v864, %v866
        %v1249 = vmax.f32 %v1248, %v1057
        %v1250 = vmax.f32 %v1249, %v1059
        %1251 = vmax.xlane.f32.xlu0 %v1250
        %v1252 = vpop.xlane.xlu0 %1251
        %v1253 = vmax.f32 %v870, %v872
        %v1254 = vmax.f32 %v1253, %v1063
        %v1255 = vmax.f32 %v1254, %v1065
        %1256 = vmax.xlane.f32.xlu0 %v1255
        %v1257 = vpop.xlane.xlu0 %1256
        %v1258 = vmax.f32 %v874, %v876
        %v1259 = vmax.f32 %v1258, %v1067
        %v1260 = vmax.f32 %v1259, %v1069
        %1261 = vmax.xlane.f32.xlu0 %v1260
        %v1262 = vpop.xlane.xlu0 %1261
        %v1263 = vmax.f32 %v880, %v882
        %v1264 = vmax.f32 %v1263, %v1073
        %v1265 = vmax.f32 %v1264, %v1075
        %1266 = vmax.xlane.f32.xlu0 %v1265
        %v1267 = vpop.xlane.xlu0 %1266
        %v1268 = vmax.f32 %v884, %v886
        %v1269 = vmax.f32 %v1268, %v1077
        %v1270 = vmax.f32 %v1269, %v1079
        %1271 = vmax.xlane.f32.xlu0 %v1270
        %v1272 = vpop.xlane.xlu0 %1271
        %v1273 = vmax.f32 %v890, %v892
        %v1274 = vmax.f32 %v1273, %v1083
        %v1275 = vmax.f32 %v1274, %v1085
        %1276 = vmax.xlane.f32.xlu0 %v1275
        %v1277 = vpop.xlane.xlu0 %1276
        %v1278 = vmax.f32 %v894, %v896
        %v1279 = vmax.f32 %v1278, %v1087
        %v1280 = vmax.f32 %v1279, %v1089
        %1281 = vmax.xlane.f32.xlu0 %v1280
        %v1282 = vpop.xlane.xlu0 %1281
        %v1283 = vmax.f32 %v900, %v902
        %v1284 = vmax.f32 %v1283, %v1093
        %v1285 = vmax.f32 %v1284, %v1095
        %1286 = vmax.xlane.f32.xlu0 %v1285
        %v1287 = vpop.xlane.xlu0 %1286
        %v1288 = vmax.f32 %v904, %v906
        %v1289 = vmax.f32 %v1288, %v1097
        %v1290 = vmax.f32 %v1289, %v1099
        %1291 = vmax.xlane.f32.xlu0 %v1290
        %v1292 = vpop.xlane.xlu0 %1291
        %v1293 = vmax.f32 %v910, %v912
        %v1294 = vmax.f32 %v1293, %v1103
        %v1295 = vmax.f32 %v1294, %v1105
        %1296 = vmax.xlane.f32.xlu0 %v1295
        %v1297 = vpop.xlane.xlu0 %1296
        %v1298 = vmax.f32 %v914, %v916
        %v1299 = vmax.f32 %v1298, %v1107
        %v1300 = vmax.f32 %v1299, %v1109
        %1301 = vmax.xlane.f32.xlu0 %v1300
        %v1302 = vpop.xlane.xlu0 %1301
        %v1303 = vmax.f32 %v1111, %v1147
        %v1304 = vmax.f32 %v1112, %v1152
        %v1305 = vmax.f32 %v1113, %v1157
        %v1306 = vmax.f32 %v1114, %v1162
        %v1307 = vmax.f32 %v1115, %v1167
        %v1308 = vmax.f32 %v1116, %v1172
        %v1309 = vmax.f32 %v1117, %v1177
        %v1310 = vmax.f32 %v1118, %v1182
        %v1311 = vmax.f32 %v1119, %v1187
        %v1312 = vmax.f32 %v1120, %v1192
        %v1313 = vmax.f32 %v1121, %v1197
        %v1314 = vmax.f32 %v1122, %v1202
        %v1315 = vmax.f32 %v1123, %v1207
        %v1316 = vmax.f32 %v1124, %v1212
        %v1317 = vmax.f32 %v1125, %v1217
        %v1318 = vmax.f32 %v1126, %v1222
        %v1319 = vmax.f32 %v1127, %v1227
        %v1320 = vmax.f32 %v1128, %v1232
        %v1321 = vmax.f32 %v1129, %v1237
        %v1322 = vmax.f32 %v1130, %v1242
        %v1323 = vmax.f32 %v1131, %v1247
        %v1324 = vmax.f32 %v1132, %v1252
        %v1325 = vmax.f32 %v1133, %v1257
        %v1326 = vmax.f32 %v1134, %v1262
        %v1327 = vmax.f32 %v1135, %v1267
        %v1328 = vmax.f32 %v1136, %v1272
        %v1329 = vmax.f32 %v1137, %v1277
        %v1330 = vmax.f32 %v1138, %v1282
        %v1331 = vmax.f32 %v1139, %v1287
        %v1332 = vmax.f32 %v1140, %v1292
        %v1333 = vmax.f32 %v1141, %v1297
        %v1334 = vmax.f32 %v1142, %v1302
        %v1335 = vsub.f32 %v1111, %v1303
        %v1336 = vsub.f32 %v1112, %v1304
        %v1337 = vsub.f32 %v1113, %v1305
        %v1338 = vsub.f32 %v1114, %v1306
        %v1339 = vsub.f32 %v1115, %v1307
        %v1340 = vsub.f32 %v1116, %v1308
        %v1341 = vsub.f32 %v1117, %v1309
        %v1342 = vsub.f32 %v1118, %v1310
        %v1343 = vsub.f32 %v1119, %v1311
        %v1344 = vsub.f32 %v1120, %v1312
        %v1345 = vsub.f32 %v1121, %v1313
        %v1346 = vsub.f32 %v1122, %v1314
        %v1347 = vsub.f32 %v1123, %v1315
        %v1348 = vsub.f32 %v1124, %v1316
        %v1349 = vsub.f32 %v1125, %v1317
        %v1350 = vsub.f32 %v1126, %v1318
        %v1351 = vsub.f32 %v1127, %v1319
        %v1352 = vsub.f32 %v1128, %v1320
        %v1353 = vsub.f32 %v1129, %v1321
        %v1354 = vsub.f32 %v1130, %v1322
        %v1355 = vsub.f32 %v1131, %v1323
        %v1356 = vsub.f32 %v1132, %v1324
        %v1357 = vsub.f32 %v1133, %v1325
        %v1358 = vsub.f32 %v1134, %v1326
        %v1359 = vsub.f32 %v1135, %v1327
        %v1360 = vsub.f32 %v1136, %v1328
        %v1361 = vsub.f32 %v1137, %v1329
        %v1362 = vsub.f32 %v1138, %v1330
        %v1363 = vsub.f32 %v1139, %v1331
        %v1364 = vsub.f32 %v1140, %v1332
        %v1365 = vsub.f32 %v1141, %v1333
        %v1366 = vsub.f32 %v1142, %v1334
        %v1367 = vmul.f32 %v1335, 1.442695
        %v1368 = vpow.pop %v1367
        %v1369 = vmul.f32 %v1336, 1.442695
        %v1370 = vpow.pop %v1369
        %v1371 = vmul.f32 %v1337, 1.442695
        %v1372 = vpow.pop %v1371
        %v1373 = vmul.f32 %v1338, 1.442695
        %v1374 = vpow.pop %v1373
        %v1375 = vmul.f32 %v1339, 1.442695
        %v1376 = vpow.pop %v1375
        %v1377 = vmul.f32 %v1340, 1.442695
        %v1378 = vpow.pop %v1377
        %v1379 = vmul.f32 %v1341, 1.442695
        %v1380 = vpow.pop %v1379
        %v1381 = vmul.f32 %v1342, 1.442695
        %v1382 = vpow.pop %v1381
        %v1383 = vmul.f32 %v1343, 1.442695
        %v1384 = vpow.pop %v1383
        %v1385 = vmul.f32 %v1344, 1.442695
        %v1386 = vpow.pop %v1385
        %v1387 = vmul.f32 %v1345, 1.442695
        %v1388 = vpow.pop %v1387
        %v1389 = vmul.f32 %v1346, 1.442695
        %v1390 = vpow.pop %v1389
        %v1391 = vmul.f32 %v1347, 1.442695
        %v1392 = vpow.pop %v1391
        %v1393 = vmul.f32 %v1348, 1.442695
        %v1394 = vpow.pop %v1393
        %v1395 = vmul.f32 %v1349, 1.442695
        %v1396 = vpow.pop %v1395
        %v1397 = vmul.f32 %v1350, 1.442695
        %v1398 = vpow.pop %v1397
        %v1399 = vmul.f32 %v1351, 1.442695
        %v1400 = vpow.pop %v1399
        %v1401 = vmul.f32 %v1352, 1.442695
        %v1402 = vpow.pop %v1401
        %v1403 = vmul.f32 %v1353, 1.442695
        %v1404 = vpow.pop %v1403
        %v1405 = vmul.f32 %v1354, 1.442695
        %v1406 = vpow.pop %v1405
        %v1407 = vmul.f32 %v1355, 1.442695
        %v1408 = vpow.pop %v1407
        %v1409 = vmul.f32 %v1356, 1.442695
        %v1410 = vpow.pop %v1409
        %v1411 = vmul.f32 %v1357, 1.442695
        %v1412 = vpow.pop %v1411
        %v1413 = vmul.f32 %v1358, 1.442695
        %v1414 = vpow.pop %v1413
        %v1415 = vmul.f32 %v1359, 1.442695
        %v1416 = vpow.pop %v1415
        %v1417 = vmul.f32 %v1360, 1.442695
        %v1418 = vpow.pop %v1417
        %v1419 = vmul.f32 %v1361, 1.442695
        %v1420 = vpow.pop %v1419
        %v1421 = vmul.f32 %v1362, 1.442695
        %v1422 = vpow.pop %v1421
        %v1423 = vmul.f32 %v1363, 1.442695
        %v1424 = vpow.pop %v1423
        %v1425 = vmul.f32 %v1364, 1.442695
        %v1426 = vpow.pop %v1425
        %v1427 = vmul.f32 %v1365, 1.442695
        %v1428 = vpow.pop %v1427
        %v1429 = vmul.f32 %v1366, 1.442695
        %v1430 = vpow.pop %v1429
        %1432 = vset.pattern.permute.xlu0 0
        %1433 = vperm.xlu0 %1432, %v1303
        %v1434 = vpop.permute.xlu0 %1433
        %1437 = vset.pattern.permute.xlu0 0
        %1438 = vperm.xlu0 %1437, %v1304
        %v1439 = vpop.permute.xlu0 %1438
        %1442 = vset.pattern.permute.xlu0 0
        %1443 = vperm.xlu0 %1442, %v1305
        %v1444 = vpop.permute.xlu0 %1443
        %1447 = vset.pattern.permute.xlu0 0
        %1448 = vperm.xlu0 %1447, %v1306
        %v1449 = vpop.permute.xlu0 %1448
        %1452 = vset.pattern.permute.xlu0 0
        %1453 = vperm.xlu0 %1452, %v1307
        %v1454 = vpop.permute.xlu0 %1453
        %1457 = vset.pattern.permute.xlu0 0
        %1458 = vperm.xlu0 %1457, %v1308
        %v1459 = vpop.permute.xlu0 %1458
        %1462 = vset.pattern.permute.xlu0 0
        %1463 = vperm.xlu0 %1462, %v1309
        %v1464 = vpop.permute.xlu0 %1463
        %1467 = vset.pattern.permute.xlu0 0
        %1468 = vperm.xlu0 %1467, %v1310
        %v1469 = vpop.permute.xlu0 %1468
        %1472 = vset.pattern.permute.xlu0 0
        %1473 = vperm.xlu0 %1472, %v1311
        %v1474 = vpop.permute.xlu0 %1473
        %1477 = vset.pattern.permute.xlu0 0
        %1478 = vperm.xlu0 %1477, %v1312
        %v1479 = vpop.permute.xlu0 %1478
        %1482 = vset.pattern.permute.xlu0 0
        %1483 = vperm.xlu0 %1482, %v1313
        %v1484 = vpop.permute.xlu0 %1483
        %1487 = vset.pattern.permute.xlu0 0
        %1488 = vperm.xlu0 %1487, %v1314
        %v1489 = vpop.permute.xlu0 %1488
        %1492 = vset.pattern.permute.xlu0 0
        %1493 = vperm.xlu0 %1492, %v1315
        %v1494 = vpop.permute.xlu0 %1493
        %1497 = vset.pattern.permute.xlu0 0
        %1498 = vperm.xlu0 %1497, %v1316
        %v1499 = vpop.permute.xlu0 %1498
        %1502 = vset.pattern.permute.xlu0 0
        %1503 = vperm.xlu0 %1502, %v1317
        %v1504 = vpop.permute.xlu0 %1503
        %1507 = vset.pattern.permute.xlu0 0
        %1508 = vperm.xlu0 %1507, %v1318
        %v1509 = vpop.permute.xlu0 %1508
        %1512 = vset.pattern.permute.xlu0 0
        %1513 = vperm.xlu0 %1512, %v1319
        %v1514 = vpop.permute.xlu0 %1513
        %1517 = vset.pattern.permute.xlu0 0
        %1518 = vperm.xlu0 %1517, %v1320
        %v1519 = vpop.permute.xlu0 %1518
        %1522 = vset.pattern.permute.xlu0 0
        %1523 = vperm.xlu0 %1522, %v1321
        %v1524 = vpop.permute.xlu0 %1523
        %1527 = vset.pattern.permute.xlu0 0
        %1528 = vperm.xlu0 %1527, %v1322
        %v1529 = vpop.permute.xlu0 %1528
        %1532 = vset.pattern.permute.xlu0 0
        %1533 = vperm.xlu0 %1532, %v1323
        %v1534 = vpop.permute.xlu0 %1533
        %1537 = vset.pattern.permute.xlu0 0
        %1538 = vperm.xlu0 %1537, %v1324
        %v1539 = vpop.permute.xlu0 %1538
        %1542 = vset.pattern.permute.xlu0 0
        %1543 = vperm.xlu0 %1542, %v1325
        %v1544 = vpop.permute.xlu0 %1543
        %1547 = vset.pattern.permute.xlu0 0
        %1548 = vperm.xlu0 %1547, %v1326
        %v1549 = vpop.permute.xlu0 %1548
        %1552 = vset.pattern.permute.xlu0 0
        %1553 = vperm.xlu0 %1552, %v1327
        %v1554 = vpop.permute.xlu0 %1553
        %1557 = vset.pattern.permute.xlu0 0
        %1558 = vperm.xlu0 %1557, %v1328
        %v1559 = vpop.permute.xlu0 %1558
        %1562 = vset.pattern.permute.xlu0 0
        %1563 = vperm.xlu0 %1562, %v1329
        %v1564 = vpop.permute.xlu0 %1563
        %1567 = vset.pattern.permute.xlu0 0
        %1568 = vperm.xlu0 %1567, %v1330
        %v1569 = vpop.permute.xlu0 %1568
        %1572 = vset.pattern.permute.xlu0 0
        %1573 = vperm.xlu0 %1572, %v1331
        %v1574 = vpop.permute.xlu0 %1573
        %1577 = vset.pattern.permute.xlu0 0
        %1578 = vperm.xlu0 %1577, %v1332
        %v1579 = vpop.permute.xlu0 %1578
        %1582 = vset.pattern.permute.xlu0 0
        %1583 = vperm.xlu0 %1582, %v1333
        %v1584 = vpop.permute.xlu0 %1583
        %1587 = vset.pattern.permute.xlu0 0
        %1588 = vperm.xlu0 %1587, %v1334
        %v1589 = vpop.permute.xlu0 %1588
        %v1591 = vsub.f32 %v760, %v1434
        %v1592 = vsub.f32 %v762, %v1434
        %v1593 = vsub.f32 %v953, %v1434
        %v1594 = vsub.f32 %v955, %v1434
        %v1595 = vsub.f32 %v764, %v1439
        %v1596 = vsub.f32 %v766, %v1439
        %v1597 = vsub.f32 %v957, %v1439
        %v1598 = vsub.f32 %v959, %v1439
        %v1599 = vsub.f32 %v770, %v1444
        %v1600 = vsub.f32 %v772, %v1444
        %v1601 = vsub.f32 %v963, %v1444
        %v1602 = vsub.f32 %v965, %v1444
        %v1603 = vsub.f32 %v774, %v1449
        %v1604 = vsub.f32 %v776, %v1449
        %v1605 = vsub.f32 %v967, %v1449
        %v1606 = vsub.f32 %v969, %v1449
        %v1607 = vsub.f32 %v780, %v1454
        %v1608 = vsub.f32 %v782, %v1454
        %v1609 = vsub.f32 %v973, %v1454
        %v1610 = vsub.f32 %v975, %v1454
        %v1611 = vsub.f32 %v784, %v1459
        %v1612 = vsub.f32 %v786, %v1459
        %v1613 = vsub.f32 %v977, %v1459
        %v1614 = vsub.f32 %v979, %v1459
        %v1615 = vsub.f32 %v790, %v1464
        %v1616 = vsub.f32 %v792, %v1464
        %v1617 = vsub.f32 %v983, %v1464
        %v1618 = vsub.f32 %v985, %v1464
        %v1619 = vsub.f32 %v794, %v1469
        %v1620 = vsub.f32 %v796, %v1469
        %v1621 = vsub.f32 %v987, %v1469
        %v1622 = vsub.f32 %v989, %v1469
        %v1623 = vsub.f32 %v800, %v1474
        %v1624 = vsub.f32 %v802, %v1474
        %v1625 = vsub.f32 %v993, %v1474
        %v1626 = vsub.f32 %v995, %v1474
        %v1627 = vsub.f32 %v804, %v1479
        %v1628 = vsub.f32 %v806, %v1479
        %v1629 = vsub.f32 %v997, %v1479
        %v1630 = vsub.f32 %v999, %v1479
        %v1631 = vsub.f32 %v810, %v1484
        %v1632 = vsub.f32 %v812, %v1484
        %v1633 = vsub.f32 %v1003, %v1484
        %v1634 = vsub.f32 %v1005, %v1484
        %v1635 = vsub.f32 %v814, %v1489
        %v1636 = vsub.f32 %v816, %v1489
        %v1637 = vsub.f32 %v1007, %v1489
        %v1638 = vsub.f32 %v1009, %v1489
        %v1639 = vsub.f32 %v820, %v1494
        %v1640 = vsub.f32 %v822, %v1494
        %v1641 = vsub.f32 %v1013, %v1494
        %v1642 = vsub.f32 %v1015, %v1494
        %v1643 = vsub.f32 %v824, %v1499
        %v1644 = vsub.f32 %v826, %v1499
        %v1645 = vsub.f32 %v1017, %v1499
        %v1646 = vsub.f32 %v1019, %v1499
        %v1647 = vsub.f32 %v830, %v1504
        %v1648 = vsub.f32 %v832, %v1504
        %v1649 = vsub.f32 %v1023, %v1504
        %v1650 = vsub.f32 %v1025, %v1504
        %v1651 = vsub.f32 %v834, %v1509
        %v1652 = vsub.f32 %v836, %v1509
        %v1653 = vsub.f32 %v1027, %v1509
        %v1654 = vsub.f32 %v1029, %v1509
        %v1655 = vsub.f32 %v840, %v1514
        %v1656 = vsub.f32 %v842, %v1514
        %v1657 = vsub.f32 %v1033, %v1514
        %v1658 = vsub.f32 %v1035, %v1514
        %v1659 = vsub.f32 %v844, %v1519
        %v1660 = vsub.f32 %v846, %v1519
        %v1661 = vsub.f32 %v1037, %v1519
        %v1662 = vsub.f32 %v1039, %v1519
        %v1663 = vsub.f32 %v850, %v1524
        %v1664 = vsub.f32 %v852, %v1524
        %v1665 = vsub.f32 %v1043, %v1524
        %v1666 = vsub.f32 %v1045, %v1524
        %v1667 = vsub.f32 %v854, %v1529
        %v1668 = vsub.f32 %v856, %v1529
        %v1669 = vsub.f32 %v1047, %v1529
        %v1670 = vsub.f32 %v1049, %v1529
        %v1671 = vsub.f32 %v860, %v1534
        %v1672 = vsub.f32 %v862, %v1534
        %v1673 = vsub.f32 %v1053, %v1534
        %v1674 = vsub.f32 %v1055, %v1534
        %v1675 = vsub.f32 %v864, %v1539
        %v1676 = vsub.f32 %v866, %v1539
        %v1677 = vsub.f32 %v1057, %v1539
        %v1678 = vsub.f32 %v1059, %v1539
        %v1679 = vsub.f32 %v870, %v1544
        %v1680 = vsub.f32 %v872, %v1544
        %v1681 = vsub.f32 %v1063, %v1544
        %v1682 = vsub.f32 %v1065, %v1544
        %v1683 = vsub.f32 %v874, %v1549
        %v1684 = vsub.f32 %v876, %v1549
        %v1685 = vsub.f32 %v1067, %v1549
        %v1686 = vsub.f32 %v1069, %v1549
        %v1687 = vsub.f32 %v880, %v1554
        %v1688 = vsub.f32 %v882, %v1554
        %v1689 = vsub.f32 %v1073, %v1554
        %v1690 = vsub.f32 %v1075, %v1554
        %v1691 = vsub.f32 %v884, %v1559
        %v1692 = vsub.f32 %v886, %v1559
        %v1693 = vsub.f32 %v1077, %v1559
        %v1694 = vsub.f32 %v1079, %v1559
        %v1695 = vsub.f32 %v890, %v1564
        %v1696 = vsub.f32 %v892, %v1564
        %v1697 = vsub.f32 %v1083, %v1564
        %v1698 = vsub.f32 %v1085, %v1564
        %v1699 = vsub.f32 %v894, %v1569
        %v1700 = vsub.f32 %v896, %v1569
        %v1701 = vsub.f32 %v1087, %v1569
        %v1702 = vsub.f32 %v1089, %v1569
        %v1703 = vsub.f32 %v900, %v1574
        %v1704 = vsub.f32 %v902, %v1574
        %v1705 = vsub.f32 %v1093, %v1574
        %v1706 = vsub.f32 %v1095, %v1574
        %v1707 = vsub.f32 %v904, %v1579
        %v1708 = vsub.f32 %v906, %v1579
        %v1709 = vsub.f32 %v1097, %v1579
        %v1710 = vsub.f32 %v1099, %v1579
        %v1711 = vsub.f32 %v910, %v1584
        %v1712 = vsub.f32 %v912, %v1584
        %v1713 = vsub.f32 %v1103, %v1584
        %v1714 = vsub.f32 %v1105, %v1584
        %v1715 = vsub.f32 %v914, %v1589
        %v1716 = vsub.f32 %v916, %v1589
        %v1717 = vsub.f32 %v1107, %v1589
        %v1718 = vsub.f32 %v1109, %v1589
        %v1719 = vmul.f32 %v1591, 1.442695
        %v1720 = vpow.pop %v1719
        %v1721 = vmul.f32 %v1592, 1.442695
        %v1722 = vpow.pop %v1721
        %v1723 = vmul.f32 %v1593, 1.442695
        %v1724 = vpow.pop %v1723
        %v1725 = vmul.f32 %v1594, 1.442695
        %v1726 = vpow.pop %v1725
        %v1727 = vmul.f32 %v1595, 1.442695
        %v1728 = vpow.pop %v1727
        %v1729 = vmul.f32 %v1596, 1.442695
        %v1730 = vpow.pop %v1729
        %v1731 = vmul.f32 %v1597, 1.442695
        %v1732 = vpow.pop %v1731
        %v1733 = vmul.f32 %v1598, 1.442695
        %v1734 = vpow.pop %v1733
        %v1735 = vmul.f32 %v1599, 1.442695
        %v1736 = vpow.pop %v1735
        %v1737 = vmul.f32 %v1600, 1.442695
        %v1738 = vpow.pop %v1737
        %v1739 = vmul.f32 %v1601, 1.442695
        %v1740 = vpow.pop %v1739
        %v1741 = vmul.f32 %v1602, 1.442695
        %v1742 = vpow.pop %v1741
        %v1743 = vmul.f32 %v1603, 1.442695
        %v1744 = vpow.pop %v1743
        %v1745 = vmul.f32 %v1604, 1.442695
        %v1746 = vpow.pop %v1745
        %v1747 = vmul.f32 %v1605, 1.442695
        %v1748 = vpow.pop %v1747
        %v1749 = vmul.f32 %v1606, 1.442695
        %v1750 = vpow.pop %v1749
        %v1751 = vmul.f32 %v1607, 1.442695
        %v1752 = vpow.pop %v1751
        %v1753 = vmul.f32 %v1608, 1.442695
        %v1754 = vpow.pop %v1753
        %v1755 = vmul.f32 %v1609, 1.442695
        %v1756 = vpow.pop %v1755
        %v1757 = vmul.f32 %v1610, 1.442695
        %v1758 = vpow.pop %v1757
        %v1759 = vmul.f32 %v1611, 1.442695
        %v1760 = vpow.pop %v1759
        %v1761 = vmul.f32 %v1612, 1.442695
        %v1762 = vpow.pop %v1761
        %v1763 = vmul.f32 %v1613, 1.442695
        %v1764 = vpow.pop %v1763
        %v1765 = vmul.f32 %v1614, 1.442695
        %v1766 = vpow.pop %v1765
        %v1767 = vmul.f32 %v1615, 1.442695
        %v1768 = vpow.pop %v1767
        %v1769 = vmul.f32 %v1616, 1.442695
        %v1770 = vpow.pop %v1769
        %v1771 = vmul.f32 %v1617, 1.442695
        %v1772 = vpow.pop %v1771
        %v1773 = vmul.f32 %v1618, 1.442695
        %v1774 = vpow.pop %v1773
        %v1775 = vmul.f32 %v1619, 1.442695
        %v1776 = vpow.pop %v1775
        %v1777 = vmul.f32 %v1620, 1.442695
        %v1778 = vpow.pop %v1777
        %v1779 = vmul.f32 %v1621, 1.442695
        %v1780 = vpow.pop %v1779
        %v1781 = vmul.f32 %v1622, 1.442695
        %v1782 = vpow.pop %v1781
        %v1783 = vmul.f32 %v1623, 1.442695
        %v1784 = vpow.pop %v1783
        %v1785 = vmul.f32 %v1624, 1.442695
        %v1786 = vpow.pop %v1785
        %v1787 = vmul.f32 %v1625, 1.442695
        %v1788 = vpow.pop %v1787
        %v1789 = vmul.f32 %v1626, 1.442695
        %v1790 = vpow.pop %v1789
        %v1791 = vmul.f32 %v1627, 1.442695
        %v1792 = vpow.pop %v1791
        %v1793 = vmul.f32 %v1628, 1.442695
        %v1794 = vpow.pop %v1793
        %v1795 = vmul.f32 %v1629, 1.442695
        %v1796 = vpow.pop %v1795
        %v1797 = vmul.f32 %v1630, 1.442695
        %v1798 = vpow.pop %v1797
        %v1799 = vmul.f32 %v1631, 1.442695
        %v1800 = vpow.pop %v1799
        %v1801 = vmul.f32 %v1632, 1.442695
        %v1802 = vpow.pop %v1801
        %v1803 = vmul.f32 %v1633, 1.442695
        %v1804 = vpow.pop %v1803
        %v1805 = vmul.f32 %v1634, 1.442695
        %v1806 = vpow.pop %v1805
        %v1807 = vmul.f32 %v1635, 1.442695
        %v1808 = vpow.pop %v1807
        %v1809 = vmul.f32 %v1636, 1.442695
        %v1810 = vpow.pop %v1809
        %v1811 = vmul.f32 %v1637, 1.442695
        %v1812 = vpow.pop %v1811
        %v1813 = vmul.f32 %v1638, 1.442695
        %v1814 = vpow.pop %v1813
        %v1815 = vmul.f32 %v1639, 1.442695
        %v1816 = vpow.pop %v1815
        %v1817 = vmul.f32 %v1640, 1.442695
        %v1818 = vpow.pop %v1817
        %v1819 = vmul.f32 %v1641, 1.442695
        %v1820 = vpow.pop %v1819
        %v1821 = vmul.f32 %v1642, 1.442695
        %v1822 = vpow.pop %v1821
        %v1823 = vmul.f32 %v1643, 1.442695
        %v1824 = vpow.pop %v1823
        %v1825 = vmul.f32 %v1644, 1.442695
        %v1826 = vpow.pop %v1825
        %v1827 = vmul.f32 %v1645, 1.442695
        %v1828 = vpow.pop %v1827
        %v1829 = vmul.f32 %v1646, 1.442695
        %v1830 = vpow.pop %v1829
        %v1831 = vmul.f32 %v1647, 1.442695
        %v1832 = vpow.pop %v1831
        %v1833 = vmul.f32 %v1648, 1.442695
        %v1834 = vpow.pop %v1833
        %v1835 = vmul.f32 %v1649, 1.442695
        %v1836 = vpow.pop %v1835
        %v1837 = vmul.f32 %v1650, 1.442695
        %v1838 = vpow.pop %v1837
        %v1839 = vmul.f32 %v1651, 1.442695
        %v1840 = vpow.pop %v1839
        %v1841 = vmul.f32 %v1652, 1.442695
        %v1842 = vpow.pop %v1841
        %v1843 = vmul.f32 %v1653, 1.442695
        %v1844 = vpow.pop %v1843
        %v1845 = vmul.f32 %v1654, 1.442695
        %v1846 = vpow.pop %v1845
        %v1847 = vmul.f32 %v1655, 1.442695
        %v1848 = vpow.pop %v1847
        %v1849 = vmul.f32 %v1656, 1.442695
        %v1850 = vpow.pop %v1849
        %v1851 = vmul.f32 %v1657, 1.442695
        %v1852 = vpow.pop %v1851
        %v1853 = vmul.f32 %v1658, 1.442695
        %v1854 = vpow.pop %v1853
        %v1855 = vmul.f32 %v1659, 1.442695
        %v1856 = vpow.pop %v1855
        %v1857 = vmul.f32 %v1660, 1.442695
        %v1858 = vpow.pop %v1857
        %v1859 = vmul.f32 %v1661, 1.442695
        %v1860 = vpow.pop %v1859
        %v1861 = vmul.f32 %v1662, 1.442695
        %v1862 = vpow.pop %v1861
        %v1863 = vmul.f32 %v1663, 1.442695
        %v1864 = vpow.pop %v1863
        %v1865 = vmul.f32 %v1664, 1.442695
        %v1866 = vpow.pop %v1865
        %v1867 = vmul.f32 %v1665, 1.442695
        %v1868 = vpow.pop %v1867
        %v1869 = vmul.f32 %v1666, 1.442695
        %v1870 = vpow.pop %v1869
        %v1871 = vmul.f32 %v1667, 1.442695
        %v1872 = vpow.pop %v1871
        %v1873 = vmul.f32 %v1668, 1.442695
        %v1874 = vpow.pop %v1873
        %v1875 = vmul.f32 %v1669, 1.442695
        %v1876 = vpow.pop %v1875
        %v1877 = vmul.f32 %v1670, 1.442695
        %v1878 = vpow.pop %v1877
        %v1879 = vmul.f32 %v1671, 1.442695
        %v1880 = vpow.pop %v1879
        %v1881 = vmul.f32 %v1672, 1.442695
        %v1882 = vpow.pop %v1881
        %v1883 = vmul.f32 %v1673, 1.442695
        %v1884 = vpow.pop %v1883
        %v1885 = vmul.f32 %v1674, 1.442695
        %v1886 = vpow.pop %v1885
        %v1887 = vmul.f32 %v1675, 1.442695
        %v1888 = vpow.pop %v1887
        %v1889 = vmul.f32 %v1676, 1.442695
        %v1890 = vpow.pop %v1889
        %v1891 = vmul.f32 %v1677, 1.442695
        %v1892 = vpow.pop %v1891
        %v1893 = vmul.f32 %v1678, 1.442695
        %v1894 = vpow.pop %v1893
        %v1895 = vmul.f32 %v1679, 1.442695
        %v1896 = vpow.pop %v1895
        %v1897 = vmul.f32 %v1680, 1.442695
        %v1898 = vpow.pop %v1897
        %v1899 = vmul.f32 %v1681, 1.442695
        %v1900 = vpow.pop %v1899
        %v1901 = vmul.f32 %v1682, 1.442695
        %v1902 = vpow.pop %v1901
        %v1903 = vmul.f32 %v1683, 1.442695
        %v1904 = vpow.pop %v1903
        %v1905 = vmul.f32 %v1684, 1.442695
        %v1906 = vpow.pop %v1905
        %v1907 = vmul.f32 %v1685, 1.442695
        %v1908 = vpow.pop %v1907
        %v1909 = vmul.f32 %v1686, 1.442695
        %v1910 = vpow.pop %v1909
        %v1911 = vmul.f32 %v1687, 1.442695
        %v1912 = vpow.pop %v1911
        %v1913 = vmul.f32 %v1688, 1.442695
        %v1914 = vpow.pop %v1913
        %v1915 = vmul.f32 %v1689, 1.442695
        %v1916 = vpow.pop %v1915
        %v1917 = vmul.f32 %v1690, 1.442695
        %v1918 = vpow.pop %v1917
        %v1919 = vmul.f32 %v1691, 1.442695
        %v1920 = vpow.pop %v1919
        %v1921 = vmul.f32 %v1692, 1.442695
        %v1922 = vpow.pop %v1921
        %v1923 = vmul.f32 %v1693, 1.442695
        %v1924 = vpow.pop %v1923
        %v1925 = vmul.f32 %v1694, 1.442695
        %v1926 = vpow.pop %v1925
        %v1927 = vmul.f32 %v1695, 1.442695
        %v1928 = vpow.pop %v1927
        %v1929 = vmul.f32 %v1696, 1.442695
        %v1930 = vpow.pop %v1929
        %v1931 = vmul.f32 %v1697, 1.442695
        %v1932 = vpow.pop %v1931
        %v1933 = vmul.f32 %v1698, 1.442695
        %v1934 = vpow.pop %v1933
        %v1935 = vmul.f32 %v1699, 1.442695
        %v1936 = vpow.pop %v1935
        %v1937 = vmul.f32 %v1700, 1.442695
        %v1938 = vpow.pop %v1937
        %v1939 = vmul.f32 %v1701, 1.442695
        %v1940 = vpow.pop %v1939
        %v1941 = vmul.f32 %v1702, 1.442695
        %v1942 = vpow.pop %v1941
        %v1943 = vmul.f32 %v1703, 1.442695
        %v1944 = vpow.pop %v1943
        %v1945 = vmul.f32 %v1704, 1.442695
        %v1946 = vpow.pop %v1945
        %v1947 = vmul.f32 %v1705, 1.442695
        %v1948 = vpow.pop %v1947
        %v1949 = vmul.f32 %v1706, 1.442695
        %v1950 = vpow.pop %v1949
        %v1951 = vmul.f32 %v1707, 1.442695
        %v1952 = vpow.pop %v1951
        %v1953 = vmul.f32 %v1708, 1.442695
        %v1954 = vpow.pop %v1953
        %v1955 = vmul.f32 %v1709, 1.442695
        %v1956 = vpow.pop %v1955
        %v1957 = vmul.f32 %v1710, 1.442695
        %v1958 = vpow.pop %v1957
        %v1959 = vmul.f32 %v1711, 1.442695
        %v1960 = vpow.pop %v1959
        %v1961 = vmul.f32 %v1712, 1.442695
        %v1962 = vpow.pop %v1961
        %v1963 = vmul.f32 %v1713, 1.442695
        %v1964 = vpow.pop %v1963
        %v1965 = vmul.f32 %v1714, 1.442695
        %v1966 = vpow.pop %v1965
        %v1967 = vmul.f32 %v1715, 1.442695
        %v1968 = vpow.pop %v1967
        %v1969 = vmul.f32 %v1716, 1.442695
        %v1970 = vpow.pop %v1969
        %v1971 = vmul.f32 %v1717, 1.442695
        %v1972 = vpow.pop %v1971
        %v1973 = vmul.f32 %v1718, 1.442695
        %v1974 = vpow.pop %v1973
        %v1975 = vld [vmem:[#allocation3] sm:$0xff]
        %v1976 = vld [vmem:[#allocation3 + $0x8] sm:$0xff]
        %v1977 = vld [vmem:[#allocation3 + $0x10] sm:$0xff]
        %v1978 = vld [vmem:[#allocation3 + $0x18] sm:$0xff]
        %v1979 = vld [vmem:[#allocation3 + $0x20] sm:$0xff]
        %v1980 = vld [vmem:[#allocation3 + $0x28] sm:$0xff]
        %v1981 = vld [vmem:[#allocation3 + $0x30] sm:$0xff]
        %v1982 = vld [vmem:[#allocation3 + $0x38] sm:$0xff]
        %v1983 = vld [vmem:[#allocation3 + $0x40] sm:$0xff]
        %v1984 = vld [vmem:[#allocation3 + $0x48] sm:$0xff]
        %v1985 = vld [vmem:[#allocation3 + $0x50] sm:$0xff]
        %v1986 = vld [vmem:[#allocation3 + $0x58] sm:$0xff]
        %v1987 = vld [vmem:[#allocation3 + $0x60] sm:$0xff]
        %v1988 = vld [vmem:[#allocation3 + $0x68] sm:$0xff]
        %v1989 = vld [vmem:[#allocation3 + $0x70] sm:$0xff]
        %v1990 = vld [vmem:[#allocation3 + $0x78] sm:$0xff]
        %v1991 = vld [vmem:[#allocation3 + $0x80] sm:$0xff]
        %v1992 = vld [vmem:[#allocation3 + $0x88] sm:$0xff]
        %v1993 = vld [vmem:[#allocation3 + $0x90] sm:$0xff]
        %v1994 = vld [vmem:[#allocation3 + $0x98] sm:$0xff]
        %v1995 = vld [vmem:[#allocation3 + $0xa0] sm:$0xff]
        %v1996 = vld [vmem:[#allocation3 + $0xa8] sm:$0xff]
        %v1997 = vld [vmem:[#allocation3 + $0xb0] sm:$0xff]
        %v1998 = vld [vmem:[#allocation3 + $0xb8] sm:$0xff]
        %v1999 = vld [vmem:[#allocation3 + $0xc0] sm:$0xff]
        %v2000 = vld [vmem:[#allocation3 + $0xc8] sm:$0xff]
        %v2001 = vld [vmem:[#allocation3 + $0xd0] sm:$0xff]
        %v2002 = vld [vmem:[#allocation3 + $0xd8] sm:$0xff]
        %v2003 = vld [vmem:[#allocation3 + $0xe0] sm:$0xff]
        %v2004 = vld [vmem:[#allocation3 + $0xe8] sm:$0xff]
        %v2005 = vld [vmem:[#allocation3 + $0xf0] sm:$0xff]
        %v2006 = vld [vmem:[#allocation3 + $0xf8] sm:$0xff]
        %v2007 = vmul.f32 %v1368, %v1975
        %v2008 = vmul.f32 %v1370, %v1976
        %v2009 = vmul.f32 %v1372, %v1977
        %v2010 = vmul.f32 %v1374, %v1978
        %v2011 = vmul.f32 %v1376, %v1979
        %v2012 = vmul.f32 %v1378, %v1980
        %v2013 = vmul.f32 %v1380, %v1981
        %v2014 = vmul.f32 %v1382, %v1982
        %v2015 = vmul.f32 %v1384, %v1983
        %v2016 = vmul.f32 %v1386, %v1984
        %v2017 = vmul.f32 %v1388, %v1985
        %v2018 = vmul.f32 %v1390, %v1986
        %v2019 = vmul.f32 %v1392, %v1987
        %v2020 = vmul.f32 %v1394, %v1988
        %v2021 = vmul.f32 %v1396, %v1989
        %v2022 = vmul.f32 %v1398, %v1990
        %v2023 = vmul.f32 %v1400, %v1991
        %v2024 = vmul.f32 %v1402, %v1992
        %v2025 = vmul.f32 %v1404, %v1993
        %v2026 = vmul.f32 %v1406, %v1994
        %v2027 = vmul.f32 %v1408, %v1995
        %v2028 = vmul.f32 %v1410, %v1996
        %v2029 = vmul.f32 %v1412, %v1997
        %v2030 = vmul.f32 %v1414, %v1998
        %v2031 = vmul.f32 %v1416, %v1999
        %v2032 = vmul.f32 %v1418, %v2000
        %v2033 = vmul.f32 %v1420, %v2001
        %v2034 = vmul.f32 %v1422, %v2002
        %v2035 = vmul.f32 %v1424, %v2003
        %v2036 = vmul.f32 %v1426, %v2004
        %v2037 = vmul.f32 %v1428, %v2005
        %v2038 = vmul.f32 %v1430, %v2006
        %v2039 = vadd.f32 %v1720, %v1722
        %v2040 = vadd.f32 %v2039, %v1724
        %v2041 = vadd.f32 %v2040, %v1726
        %2042 = vadd.xlane.f32.xlu0 %v2041
        %v2043 = vpop.xlane.xlu0 %2042
        %v2044 = vadd.f32 %v1728, %v1730
        %v2045 = vadd.f32 %v2044, %v1732
        %v2046 = vadd.f32 %v2045, %v1734
        %2047 = vadd.xlane.f32.xlu0 %v2046
        %v2048 = vpop.xlane.xlu0 %2047
        %v2049 = vadd.f32 %v1736, %v1738
        %v2050 = vadd.f32 %v2049, %v1740
        %v2051 = vadd.f32 %v2050, %v1742
        %2052 = vadd.xlane.f32.xlu0 %v2051
        %v2053 = vpop.xlane.xlu0 %2052
        %v2054 = vadd.f32 %v1744, %v1746
        %v2055 = vadd.f32 %v2054, %v1748
        %v2056 = vadd.f32 %v2055, %v1750
        %2057 = vadd.xlane.f32.xlu0 %v2056
        %v2058 = vpop.xlane.xlu0 %2057
        %v2059 = vadd.f32 %v1752, %v1754
        %v2060 = vadd.f32 %v2059, %v1756
        %v2061 = vadd.f32 %v2060, %v1758
        %2062 = vadd.xlane.f32.xlu0 %v2061
        %v2063 = vpop.xlane.xlu0 %2062
        %v2064 = vadd.f32 %v1760, %v1762
        %v2065 = vadd.f32 %v2064, %v1764
        %v2066 = vadd.f32 %v2065, %v1766
        %2067 = vadd.xlane.f32.xlu0 %v2066
        %v2068 = vpop.xlane.xlu0 %2067
        %v2069 = vadd.f32 %v1768, %v1770
        %v2070 = vadd.f32 %v2069, %v1772
        %v2071 = vadd.f32 %v2070, %v1774
        %2072 = vadd.xlane.f32.xlu0 %v2071
        %v2073 = vpop.xlane.xlu0 %2072
        %v2074 = vadd.f32 %v1776, %v1778
        %v2075 = vadd.f32 %v2074, %v1780
        %v2076 = vadd.f32 %v2075, %v1782
        %2077 = vadd.xlane.f32.xlu0 %v2076
        %v2078 = vpop.xlane.xlu0 %2077
        %v2079 = vadd.f32 %v1784, %v1786
        %v2080 = vadd.f32 %v2079, %v1788
        %v2081 = vadd.f32 %v2080, %v1790
        %2082 = vadd.xlane.f32.xlu0 %v2081
        %v2083 = vpop.xlane.xlu0 %2082
        %v2084 = vadd.f32 %v1792, %v1794
        %v2085 = vadd.f32 %v2084, %v1796
        %v2086 = vadd.f32 %v2085, %v1798
        %2087 = vadd.xlane.f32.xlu0 %v2086
        %v2088 = vpop.xlane.xlu0 %2087
        %v2089 = vadd.f32 %v1800, %v1802
        %v2090 = vadd.f32 %v2089, %v1804
        %v2091 = vadd.f32 %v2090, %v1806
        %2092 = vadd.xlane.f32.xlu0 %v2091
        %v2093 = vpop.xlane.xlu0 %2092
        %v2094 = vadd.f32 %v1808, %v1810
        %v2095 = vadd.f32 %v2094, %v1812
        %v2096 = vadd.f32 %v2095, %v1814
        %2097 = vadd.xlane.f32.xlu0 %v2096
        %v2098 = vpop.xlane.xlu0 %2097
        %v2099 = vadd.f32 %v1816, %v1818
        %v2100 = vadd.f32 %v2099, %v1820
        %v2101 = vadd.f32 %v2100, %v1822
        %2102 = vadd.xlane.f32.xlu0 %v2101
        %v2103 = vpop.xlane.xlu0 %2102
        %v2104 = vadd.f32 %v1824, %v1826
        %v2105 = vadd.f32 %v2104, %v1828
        %v2106 = vadd.f32 %v2105, %v1830
        %2107 = vadd.xlane.f32.xlu0 %v2106
        %v2108 = vpop.xlane.xlu0 %2107
        %v2109 = vadd.f32 %v1832, %v1834
        %v2110 = vadd.f32 %v2109, %v1836
        %v2111 = vadd.f32 %v2110, %v1838
        %2112 = vadd.xlane.f32.xlu0 %v2111
        %v2113 = vpop.xlane.xlu0 %2112
        %v2114 = vadd.f32 %v1840, %v1842
        %v2115 = vadd.f32 %v2114, %v1844
        %v2116 = vadd.f32 %v2115, %v1846
        %2117 = vadd.xlane.f32.xlu0 %v2116
        %v2118 = vpop.xlane.xlu0 %2117
        %v2119 = vadd.f32 %v1848, %v1850
        %v2120 = vadd.f32 %v2119, %v1852
        %v2121 = vadd.f32 %v2120, %v1854
        %2122 = vadd.xlane.f32.xlu0 %v2121
        %v2123 = vpop.xlane.xlu0 %2122
        %v2124 = vadd.f32 %v1856, %v1858
        %v2125 = vadd.f32 %v2124, %v1860
        %v2126 = vadd.f32 %v2125, %v1862
        %2127 = vadd.xlane.f32.xlu0 %v2126
        %v2128 = vpop.xlane.xlu0 %2127
        %v2129 = vadd.f32 %v1864, %v1866
        %v2130 = vadd.f32 %v2129, %v1868
        %v2131 = vadd.f32 %v2130, %v1870
        %2132 = vadd.xlane.f32.xlu0 %v2131
        %v2133 = vpop.xlane.xlu0 %2132
        %v2134 = vadd.f32 %v1872, %v1874
        %v2135 = vadd.f32 %v2134, %v1876
        %v2136 = vadd.f32 %v2135, %v1878
        %2137 = vadd.xlane.f32.xlu0 %v2136
        %v2138 = vpop.xlane.xlu0 %2137
        %v2139 = vadd.f32 %v1880, %v1882
        %v2140 = vadd.f32 %v2139, %v1884
        %v2141 = vadd.f32 %v2140, %v1886
        %2142 = vadd.xlane.f32.xlu0 %v2141
        %v2143 = vpop.xlane.xlu0 %2142
        %v2144 = vadd.f32 %v1888, %v1890
        %v2145 = vadd.f32 %v2144, %v1892
        %v2146 = vadd.f32 %v2145, %v1894
        %2147 = vadd.xlane.f32.xlu0 %v2146
        %v2148 = vpop.xlane.xlu0 %2147
        %v2149 = vadd.f32 %v1896, %v1898
        %v2150 = vadd.f32 %v2149, %v1900
        %v2151 = vadd.f32 %v2150, %v1902
        %2152 = vadd.xlane.f32.xlu0 %v2151
        %v2153 = vpop.xlane.xlu0 %2152
        %v2154 = vadd.f32 %v1904, %v1906
        %v2155 = vadd.f32 %v2154, %v1908
        %v2156 = vadd.f32 %v2155, %v1910
        %2157 = vadd.xlane.f32.xlu0 %v2156
        %v2158 = vpop.xlane.xlu0 %2157
        %v2159 = vadd.f32 %v1912, %v1914
        %v2160 = vadd.f32 %v2159, %v1916
        %v2161 = vadd.f32 %v2160, %v1918
        %2162 = vadd.xlane.f32.xlu0 %v2161
        %v2163 = vpop.xlane.xlu0 %2162
        %v2164 = vadd.f32 %v1920, %v1922
        %v2165 = vadd.f32 %v2164, %v1924
        %v2166 = vadd.f32 %v2165, %v1926
        %2167 = vadd.xlane.f32.xlu0 %v2166
        %v2168 = vpop.xlane.xlu0 %2167
        %v2169 = vadd.f32 %v1928, %v1930
        %v2170 = vadd.f32 %v2169, %v1932
        %v2171 = vadd.f32 %v2170, %v1934
        %2172 = vadd.xlane.f32.xlu0 %v2171
        %v2173 = vpop.xlane.xlu0 %2172
        %v2174 = vadd.f32 %v1936, %v1938
        %v2175 = vadd.f32 %v2174, %v1940
        %v2176 = vadd.f32 %v2175, %v1942
        %2177 = vadd.xlane.f32.xlu0 %v2176
        %v2178 = vpop.xlane.xlu0 %2177
        %v2179 = vadd.f32 %v1944, %v1946
        %v2180 = vadd.f32 %v2179, %v1948
        %v2181 = vadd.f32 %v2180, %v1950
        %2182 = vadd.xlane.f32.xlu0 %v2181
        %v2183 = vpop.xlane.xlu0 %2182
        %v2184 = vadd.f32 %v1952, %v1954
        %v2185 = vadd.f32 %v2184, %v1956
        %v2186 = vadd.f32 %v2185, %v1958
        %2187 = vadd.xlane.f32.xlu0 %v2186
        %v2188 = vpop.xlane.xlu0 %2187
        %v2189 = vadd.f32 %v1960, %v1962
        %v2190 = vadd.f32 %v2189, %v1964
        %v2191 = vadd.f32 %v2190, %v1966
        %2192 = vadd.xlane.f32.xlu0 %v2191
        %v2193 = vpop.xlane.xlu0 %2192
        %v2194 = vadd.f32 %v1968, %v1970
        %v2195 = vadd.f32 %v2194, %v1972
        %v2196 = vadd.f32 %v2195, %v1974
        %2197 = vadd.xlane.f32.xlu0 %v2196
        %v2198 = vpop.xlane.xlu0 %2197
        %v2199 = vadd.f32 %v2007, %v2043
        %v2200 = vadd.f32 %v2008, %v2048
        %v2201 = vadd.f32 %v2009, %v2053
        %v2202 = vadd.f32 %v2010, %v2058
        %v2203 = vadd.f32 %v2011, %v2063
        %v2204 = vadd.f32 %v2012, %v2068
        %v2205 = vadd.f32 %v2013, %v2073
        %v2206 = vadd.f32 %v2014, %v2078
        %v2207 = vadd.f32 %v2015, %v2083
        %v2208 = vadd.f32 %v2016, %v2088
        %v2209 = vadd.f32 %v2017, %v2093
        %v2210 = vadd.f32 %v2018, %v2098
        %v2211 = vadd.f32 %v2019, %v2103
        %v2212 = vadd.f32 %v2020, %v2108
        %v2213 = vadd.f32 %v2021, %v2113
        %v2214 = vadd.f32 %v2022, %v2118
        %v2215 = vadd.f32 %v2023, %v2123
        %v2216 = vadd.f32 %v2024, %v2128
        %v2217 = vadd.f32 %v2025, %v2133
        %v2218 = vadd.f32 %v2026, %v2138
        %v2219 = vadd.f32 %v2027, %v2143
        %v2220 = vadd.f32 %v2028, %v2148
        %v2221 = vadd.f32 %v2029, %v2153
        %v2222 = vadd.f32 %v2030, %v2158
        %v2223 = vadd.f32 %v2031, %v2163
        %v2224 = vadd.f32 %v2032, %v2168
        %v2225 = vadd.f32 %v2033, %v2173
        %v2226 = vadd.f32 %v2034, %v2178
        %v2227 = vadd.f32 %v2035, %v2183
        %v2228 = vadd.f32 %v2036, %v2188
        %v2229 = vadd.f32 %v2037, %v2193
        %v2230 = vadd.f32 %v2038, %v2198
        %vm2231 = vcmask 7168
        %2232 = vst.msk [vmem:[#allocation3] sm:$0xff] %vm2231, %v2199
        %2233 = vst.msk [vmem:[#allocation3 + $0x8] sm:$0xff] %vm2231, %v2200
        %2234 = vst.msk [vmem:[#allocation3 + $0x10] sm:$0xff] %vm2231, %v2201
        %2235 = vst.msk [vmem:[#allocation3 + $0x18] sm:$0xff] %vm2231, %v2202
        %2236 = vst.msk [vmem:[#allocation3 + $0x20] sm:$0xff] %vm2231, %v2203
        %2237 = vst.msk [vmem:[#allocation3 + $0x28] sm:$0xff] %vm2231, %v2204
        %2238 = vst.msk [vmem:[#allocation3 + $0x30] sm:$0xff] %vm2231, %v2205
        %2239 = vst.msk [vmem:[#allocation3 + $0x38] sm:$0xff] %vm2231, %v2206
        %2240 = vst.msk [vmem:[#allocation3 + $0x40] sm:$0xff] %vm2231, %v2207
        %2241 = vst.msk [vmem:[#allocation3 + $0x48] sm:$0xff] %vm2231, %v2208
        %2242 = vst.msk [vmem:[#allocation3 + $0x50] sm:$0xff] %vm2231, %v2209
        %2243 = vst.msk [vmem:[#allocation3 + $0x58] sm:$0xff] %vm2231, %v2210
        %2244 = vst.msk [vmem:[#allocation3 + $0x60] sm:$0xff] %vm2231, %v2211
        %2245 = vst.msk [vmem:[#allocation3 + $0x68] sm:$0xff] %vm2231, %v2212
        %2246 = vst.msk [vmem:[#allocation3 + $0x70] sm:$0xff] %vm2231, %v2213
        %2247 = vst.msk [vmem:[#allocation3 + $0x78] sm:$0xff] %vm2231, %v2214
        %2248 = vst.msk [vmem:[#allocation3 + $0x80] sm:$0xff] %vm2231, %v2215
        %2249 = vst.msk [vmem:[#allocation3 + $0x88] sm:$0xff] %vm2231, %v2216
        %2250 = vst.msk [vmem:[#allocation3 + $0x90] sm:$0xff] %vm2231, %v2217
        %2251 = vst.msk [vmem:[#allocation3 + $0x98] sm:$0xff] %vm2231, %v2218
        %2252 = vst.msk [vmem:[#allocation3 + $0xa0] sm:$0xff] %vm2231, %v2219
        %2253 = vst.msk [vmem:[#allocation3 + $0xa8] sm:$0xff] %vm2231, %v2220
        %2254 = vst.msk [vmem:[#allocation3 + $0xb0] sm:$0xff] %vm2231, %v2221
        %2255 = vst.msk [vmem:[#allocation3 + $0xb8] sm:$0xff] %vm2231, %v2222
        %2256 = vst.msk [vmem:[#allocation3 + $0xc0] sm:$0xff] %vm2231, %v2223
        %2257 = vst.msk [vmem:[#allocation3 + $0xc8] sm:$0xff] %vm2231, %v2224
        %2258 = vst.msk [vmem:[#allocation3 + $0xd0] sm:$0xff] %vm2231, %v2225
        %2259 = vst.msk [vmem:[#allocation3 + $0xd8] sm:$0xff] %vm2231, %v2226
        %2260 = vst.msk [vmem:[#allocation3 + $0xe0] sm:$0xff] %vm2231, %v2227
        %2261 = vst.msk [vmem:[#allocation3 + $0xe8] sm:$0xff] %vm2231, %v2228
        %2262 = vst.msk [vmem:[#allocation3 + $0xf0] sm:$0xff] %vm2231, %v2229
        %2263 = vst.msk [vmem:[#allocation3 + $0xf8] sm:$0xff] %vm2231, %v2230
        %v2264 = vld [vmem:[#allocation4] sm:$0xff]
        %v2265 = vld [vmem:[#allocation4 + $0x8] sm:$0xff]
        %v2266 = vld [vmem:[#allocation4 + $0x10] sm:$0xff]
        %v2267 = vld [vmem:[#allocation4 + $0x18] sm:$0xff]
        %v2268 = vld [vmem:[#allocation4 + $0x20] sm:$0xff]
        %v2269 = vld [vmem:[#allocation4 + $0x28] sm:$0xff]
        %v2270 = vld [vmem:[#allocation4 + $0x30] sm:$0xff]
        %v2271 = vld [vmem:[#allocation4 + $0x38] sm:$0xff]
        %v2272 = vld [vmem:[#allocation4 + $0x40] sm:$0xff]
        %v2273 = vld [vmem:[#allocation4 + $0x48] sm:$0xff]
        %v2274 = vld [vmem:[#allocation4 + $0x50] sm:$0xff]
        %v2275 = vld [vmem:[#allocation4 + $0x58] sm:$0xff]
        %v2276 = vld [vmem:[#allocation4 + $0x60] sm:$0xff]
        %v2277 = vld [vmem:[#allocation4 + $0x68] sm:$0xff]
        %v2278 = vld [vmem:[#allocation4 + $0x70] sm:$0xff]
        %v2279 = vld [vmem:[#allocation4 + $0x78] sm:$0xff]
        %v2280 = vld [vmem:[#allocation4 + $0x80] sm:$0xff]
        %v2281 = vld [vmem:[#allocation4 + $0x88] sm:$0xff]
        %v2282 = vld [vmem:[#allocation4 + $0x90] sm:$0xff]
        %v2283 = vld [vmem:[#allocation4 + $0x98] sm:$0xff]
        %v2284 = vld [vmem:[#allocation4 + $0xa0] sm:$0xff]
        %v2285 = vld [vmem:[#allocation4 + $0xa8] sm:$0xff]
        %v2286 = vld [vmem:[#allocation4 + $0xb0] sm:$0xff]
        %v2287 = vld [vmem:[#allocation4 + $0xb8] sm:$0xff]
        %v2288 = vld [vmem:[#allocation4 + $0xc0] sm:$0xff]
        %v2289 = vld [vmem:[#allocation4 + $0xc8] sm:$0xff]
        %v2290 = vld [vmem:[#allocation4 + $0xd0] sm:$0xff]
        %v2291 = vld [vmem:[#allocation4 + $0xd8] sm:$0xff]
        %v2292 = vld [vmem:[#allocation4 + $0xe0] sm:$0xff]
        %v2293 = vld [vmem:[#allocation4 + $0xe8] sm:$0xff]
        %v2294 = vld [vmem:[#allocation4 + $0xf0] sm:$0xff]
        %v2295 = vld [vmem:[#allocation4 + $0xf8] sm:$0xff]
        %2297 = vset.pattern.permute.xlu0 0
        %2298 = vperm.xlu0 %2297, %v1368
        %v2299 = vpop.permute.xlu0 %2298
        %2302 = vset.pattern.permute.xlu0 0
        %2303 = vperm.xlu0 %2302, %v1370
        %v2304 = vpop.permute.xlu0 %2303
        %2307 = vset.pattern.permute.xlu0 0
        %2308 = vperm.xlu0 %2307, %v1372
        %v2309 = vpop.permute.xlu0 %2308
        %2312 = vset.pattern.permute.xlu0 0
        %2313 = vperm.xlu0 %2312, %v1374
        %v2314 = vpop.permute.xlu0 %2313
        %2317 = vset.pattern.permute.xlu0 0
        %2318 = vperm.xlu0 %2317, %v1376
        %v2319 = vpop.permute.xlu0 %2318
        %2322 = vset.pattern.permute.xlu0 0
        %2323 = vperm.xlu0 %2322, %v1378
        %v2324 = vpop.permute.xlu0 %2323
        %2327 = vset.pattern.permute.xlu0 0
        %2328 = vperm.xlu0 %2327, %v1380
        %v2329 = vpop.permute.xlu0 %2328
        %2332 = vset.pattern.permute.xlu0 0
        %2333 = vperm.xlu0 %2332, %v1382
        %v2334 = vpop.permute.xlu0 %2333
        %2337 = vset.pattern.permute.xlu0 0
        %2338 = vperm.xlu0 %2337, %v1384
        %v2339 = vpop.permute.xlu0 %2338
        %2342 = vset.pattern.permute.xlu0 0
        %2343 = vperm.xlu0 %2342, %v1386
        %v2344 = vpop.permute.xlu0 %2343
        %2347 = vset.pattern.permute.xlu0 0
        %2348 = vperm.xlu0 %2347, %v1388
        %v2349 = vpop.permute.xlu0 %2348
        %2352 = vset.pattern.permute.xlu0 0
        %2353 = vperm.xlu0 %2352, %v1390
        %v2354 = vpop.permute.xlu0 %2353
        %2357 = vset.pattern.permute.xlu0 0
        %2358 = vperm.xlu0 %2357, %v1392
        %v2359 = vpop.permute.xlu0 %2358
        %2362 = vset.pattern.permute.xlu0 0
        %2363 = vperm.xlu0 %2362, %v1394
        %v2364 = vpop.permute.xlu0 %2363
        %2367 = vset.pattern.permute.xlu0 0
        %2368 = vperm.xlu0 %2367, %v1396
        %v2369 = vpop.permute.xlu0 %2368
        %2372 = vset.pattern.permute.xlu0 0
        %2373 = vperm.xlu0 %2372, %v1398
        %v2374 = vpop.permute.xlu0 %2373
        %2377 = vset.pattern.permute.xlu0 0
        %2378 = vperm.xlu0 %2377, %v1400
        %v2379 = vpop.permute.xlu0 %2378
        %2382 = vset.pattern.permute.xlu0 0
        %2383 = vperm.xlu0 %2382, %v1402
        %v2384 = vpop.permute.xlu0 %2383
        %2387 = vset.pattern.permute.xlu0 0
        %2388 = vperm.xlu0 %2387, %v1404
        %v2389 = vpop.permute.xlu0 %2388
        %2392 = vset.pattern.permute.xlu0 0
        %2393 = vperm.xlu0 %2392, %v1406
        %v2394 = vpop.permute.xlu0 %2393
        %2397 = vset.pattern.permute.xlu0 0
        %2398 = vperm.xlu0 %2397, %v1408
        %v2399 = vpop.permute.xlu0 %2398
        %2402 = vset.pattern.permute.xlu0 0
        %2403 = vperm.xlu0 %2402, %v1410
        %v2404 = vpop.permute.xlu0 %2403
        %2407 = vset.pattern.permute.xlu0 0
        %2408 = vperm.xlu0 %2407, %v1412
        %v2409 = vpop.permute.xlu0 %2408
        %2412 = vset.pattern.permute.xlu0 0
        %2413 = vperm.xlu0 %2412, %v1414
        %v2414 = vpop.permute.xlu0 %2413
        %2417 = vset.pattern.permute.xlu0 0
        %2418 = vperm.xlu0 %2417, %v1416
        %v2419 = vpop.permute.xlu0 %2418
        %2422 = vset.pattern.permute.xlu0 0
        %2423 = vperm.xlu0 %2422, %v1418
        %v2424 = vpop.permute.xlu0 %2423
        %2427 = vset.pattern.permute.xlu0 0
        %2428 = vperm.xlu0 %2427, %v1420
        %v2429 = vpop.permute.xlu0 %2428
        %2432 = vset.pattern.permute.xlu0 0
        %2433 = vperm.xlu0 %2432, %v1422
        %v2434 = vpop.permute.xlu0 %2433
        %2437 = vset.pattern.permute.xlu0 0
        %2438 = vperm.xlu0 %2437, %v1424
        %v2439 = vpop.permute.xlu0 %2438
        %2442 = vset.pattern.permute.xlu0 0
        %2443 = vperm.xlu0 %2442, %v1426
        %v2444 = vpop.permute.xlu0 %2443
        %2447 = vset.pattern.permute.xlu0 0
        %2448 = vperm.xlu0 %2447, %v1428
        %v2449 = vpop.permute.xlu0 %2448
        %2452 = vset.pattern.permute.xlu0 0
        %2453 = vperm.xlu0 %2452, %v1430
        %v2454 = vpop.permute.xlu0 %2453
        %v2456 = vmul.f32 %v2299, %v2264
        %v2457 = vmul.f32 %v2304, %v2265
        %v2458 = vmul.f32 %v2309, %v2266
        %v2459 = vmul.f32 %v2314, %v2267
        %v2460 = vmul.f32 %v2319, %v2268
        %v2461 = vmul.f32 %v2324, %v2269
        %v2462 = vmul.f32 %v2329, %v2270
        %v2463 = vmul.f32 %v2334, %v2271
        %v2464 = vmul.f32 %v2339, %v2272
        %v2465 = vmul.f32 %v2344, %v2273
        %v2466 = vmul.f32 %v2349, %v2274
        %v2467 = vmul.f32 %v2354, %v2275
        %v2468 = vmul.f32 %v2359, %v2276
        %v2469 = vmul.f32 %v2364, %v2277
        %v2470 = vmul.f32 %v2369, %v2278
        %v2471 = vmul.f32 %v2374, %v2279
        %v2472 = vmul.f32 %v2379, %v2280
        %v2473 = vmul.f32 %v2384, %v2281
        %v2474 = vmul.f32 %v2389, %v2282
        %v2475 = vmul.f32 %v2394, %v2283
        %v2476 = vmul.f32 %v2399, %v2284
        %v2477 = vmul.f32 %v2404, %v2285
        %v2478 = vmul.f32 %v2409, %v2286
        %v2479 = vmul.f32 %v2414, %v2287
        %v2480 = vmul.f32 %v2419, %v2288
        %v2481 = vmul.f32 %v2424, %v2289
        %v2482 = vmul.f32 %v2429, %v2290
        %v2483 = vmul.f32 %v2434, %v2291
        %v2484 = vmul.f32 %v2439, %v2292
        %v2485 = vmul.f32 %v2444, %v2293
        %v2486 = vmul.f32 %v2449, %v2294
        %v2487 = vmul.f32 %v2454, %v2295
        %v2488 = vpack.c.bf16 %v1728, %v1720
        %v2489 = vpack.c.bf16 %v1730, %v1722
        %v2490 = vpack.c.bf16 %v1732, %v1724
        %v2491 = vpack.c.bf16 %v1734, %v1726
        %v2492 = vpack.c.bf16 %v1744, %v1736
        %v2493 = vpack.c.bf16 %v1746, %v1738
        %v2494 = vpack.c.bf16 %v1748, %v1740
        %v2495 = vpack.c.bf16 %v1750, %v1742
        %v2496 = vpack.c.bf16 %v1760, %v1752
        %v2497 = vpack.c.bf16 %v1762, %v1754
        %v2498 = vpack.c.bf16 %v1764, %v1756
        %v2499 = vpack.c.bf16 %v1766, %v1758
        %v2500 = vpack.c.bf16 %v1776, %v1768
        %v2501 = vpack.c.bf16 %v1778, %v1770
        %v2502 = vpack.c.bf16 %v1780, %v1772
        %v2503 = vpack.c.bf16 %v1782, %v1774
        %v2504 = vpack.c.bf16 %v1792, %v1784
        %v2505 = vpack.c.bf16 %v1794, %v1786
        %v2506 = vpack.c.bf16 %v1796, %v1788
        %v2507 = vpack.c.bf16 %v1798, %v1790
        %v2508 = vpack.c.bf16 %v1808, %v1800
        %v2509 = vpack.c.bf16 %v1810, %v1802
        %v2510 = vpack.c.bf16 %v1812, %v1804
        %v2511 = vpack.c.bf16 %v1814, %v1806
        %v2512 = vpack.c.bf16 %v1824, %v1816
        %v2513 = vpack.c.bf16 %v1826, %v1818
        %v2514 = vpack.c.bf16 %v1828, %v1820
        %v2515 = vpack.c.bf16 %v1830, %v1822
        %v2516 = vpack.c.bf16 %v1840, %v1832
        %v2517 = vpack.c.bf16 %v1842, %v1834
        %v2518 = vpack.c.bf16 %v1844, %v1836
        %v2519 = vpack.c.bf16 %v1846, %v1838
        %v2520 = vpack.c.bf16 %v1856, %v1848
        %v2521 = vpack.c.bf16 %v1858, %v1850
        %v2522 = vpack.c.bf16 %v1860, %v1852
        %v2523 = vpack.c.bf16 %v1862, %v1854
        %v2524 = vpack.c.bf16 %v1872, %v1864
        %v2525 = vpack.c.bf16 %v1874, %v1866
        %v2526 = vpack.c.bf16 %v1876, %v1868
        %v2527 = vpack.c.bf16 %v1878, %v1870
        %v2528 = vpack.c.bf16 %v1888, %v1880
        %v2529 = vpack.c.bf16 %v1890, %v1882
        %v2530 = vpack.c.bf16 %v1892, %v1884
        %v2531 = vpack.c.bf16 %v1894, %v1886
        %v2532 = vpack.c.bf16 %v1904, %v1896
        %v2533 = vpack.c.bf16 %v1906, %v1898
        %v2534 = vpack.c.bf16 %v1908, %v1900
        %v2535 = vpack.c.bf16 %v1910, %v1902
        %v2536 = vpack.c.bf16 %v1920, %v1912
        %v2537 = vpack.c.bf16 %v1922, %v1914
        %v2538 = vpack.c.bf16 %v1924, %v1916
        %v2539 = vpack.c.bf16 %v1926, %v1918
        %v2540 = vpack.c.bf16 %v1936, %v1928
        %v2541 = vpack.c.bf16 %v1938, %v1930
        %v2542 = vpack.c.bf16 %v1940, %v1932
        %v2543 = vpack.c.bf16 %v1942, %v1934
        %v2544 = vpack.c.bf16 %v1952, %v1944
        %v2545 = vpack.c.bf16 %v1954, %v1946
        %v2546 = vpack.c.bf16 %v1956, %v1948
        %v2547 = vpack.c.bf16 %v1958, %v1950
        %v2548 = vpack.c.bf16 %v1968, %v1960
        %v2549 = vpack.c.bf16 %v1970, %v1962
        %v2550 = vpack.c.bf16 %v1972, %v1964
        %v2551 = vpack.c.bf16 %v1974, %v1966
        %v2552 = vld [vmem:[%s266] sm:$0xf]
        %v2553 = vld [vmem:[%s266 + $0x4] sm:$0xf]
        %v2554 = vld [vmem:[%s266 + $0x8] sm:$0xf]
        %v2555 = vld [vmem:[%s266 + $0xc] sm:$0xf]
        %v2556 = vld [vmem:[%s266 + $0x10] sm:$0xf]
        %v2557 = vld [vmem:[%s266 + $0x14] sm:$0xf]
        %v2558 = vld [vmem:[%s266 + $0x18] sm:$0xf]
        %v2559 = vld [vmem:[%s266 + $0x1c] sm:$0xf]
        %v2560 = vld [vmem:[%s266 + $0x20] sm:$0xf]
        %v2561 = vld [vmem:[%s266 + $0x24] sm:$0xf]
        %v2562 = vld [vmem:[%s266 + $0x28] sm:$0xf]
        %v2563 = vld [vmem:[%s266 + $0x2c] sm:$0xf]
        %v2564 = vld [vmem:[%s266 + $0x30] sm:$0xf]
        %v2565 = vld [vmem:[%s266 + $0x34] sm:$0xf]
        %v2566 = vld [vmem:[%s266 + $0x38] sm:$0xf]
        %v2567 = vld [vmem:[%s266 + $0x3c] sm:$0xf]
        %v2568 = vld [vmem:[%s266 + $0x40] sm:$0xf]
        %v2569 = vld [vmem:[%s266 + $0x44] sm:$0xf]
        %v2570 = vld [vmem:[%s266 + $0x48] sm:$0xf]
        %v2571 = vld [vmem:[%s266 + $0x4c] sm:$0xf]
        %v2572 = vld [vmem:[%s266 + $0x50] sm:$0xf]
        %v2573 = vld [vmem:[%s266 + $0x54] sm:$0xf]
        %v2574 = vld [vmem:[%s266 + $0x58] sm:$0xf]
        %v2575 = vld [vmem:[%s266 + $0x5c] sm:$0xf]
        %v2576 = vld [vmem:[%s266 + $0x60] sm:$0xf]
        %v2577 = vld [vmem:[%s266 + $0x64] sm:$0xf]
        %v2578 = vld [vmem:[%s266 + $0x68] sm:$0xf]
        %v2579 = vld [vmem:[%s266 + $0x6c] sm:$0xf]
        %v2580 = vld [vmem:[%s266 + $0x70] sm:$0xf]
        %v2581 = vld [vmem:[%s266 + $0x74] sm:$0xf]
        %v2582 = vld [vmem:[%s266 + $0x78] sm:$0xf]
        %v2583 = vld [vmem:[%s266 + $0x7c] sm:$0xf]
        %v2584 = vld [vmem:[%s266 + $0x80] sm:$0xf]
        %v2585 = vld [vmem:[%s266 + $0x84] sm:$0xf]
        %v2586 = vld [vmem:[%s266 + $0x88] sm:$0xf]
        %v2587 = vld [vmem:[%s266 + $0x8c] sm:$0xf]
        %v2588 = vld [vmem:[%s266 + $0x90] sm:$0xf]
        %v2589 = vld [vmem:[%s266 + $0x94] sm:$0xf]
        %v2590 = vld [vmem:[%s266 + $0x98] sm:$0xf]
        %v2591 = vld [vmem:[%s266 + $0x9c] sm:$0xf]
        %v2592 = vld [vmem:[%s266 + $0xa0] sm:$0xf]
        %v2593 = vld [vmem:[%s266 + $0xa4] sm:$0xf]
        %v2594 = vld [vmem:[%s266 + $0xa8] sm:$0xf]
        %v2595 = vld [vmem:[%s266 + $0xac] sm:$0xf]
        %v2596 = vld [vmem:[%s266 + $0xb0] sm:$0xf]
        %v2597 = vld [vmem:[%s266 + $0xb4] sm:$0xf]
        %v2598 = vld [vmem:[%s266 + $0xb8] sm:$0xf]
        %v2599 = vld [vmem:[%s266 + $0xbc] sm:$0xf]
        %v2600 = vld [vmem:[%s266 + $0xc0] sm:$0xf]
        %v2601 = vld [vmem:[%s266 + $0xc4] sm:$0xf]
        %v2602 = vld [vmem:[%s266 + $0xc8] sm:$0xf]
        %v2603 = vld [vmem:[%s266 + $0xcc] sm:$0xf]
        %v2604 = vld [vmem:[%s266 + $0xd0] sm:$0xf]
        %v2605 = vld [vmem:[%s266 + $0xd4] sm:$0xf]
        %v2606 = vld [vmem:[%s266 + $0xd8] sm:$0xf]
        %v2607 = vld [vmem:[%s266 + $0xdc] sm:$0xf]
        %v2608 = vld [vmem:[%s266 + $0xe0] sm:$0xf]
        %v2609 = vld [vmem:[%s266 + $0xe4] sm:$0xf]
        %v2610 = vld [vmem:[%s266 + $0xe8] sm:$0xf]
        %v2611 = vld [vmem:[%s266 + $0xec] sm:$0xf]
        %v2612 = vld [vmem:[%s266 + $0xf0] sm:$0xf]
        %v2613 = vld [vmem:[%s266 + $0xf4] sm:$0xf]
        %v2614 = vld [vmem:[%s266 + $0xf8] sm:$0xf]
        %v2615 = vld [vmem:[%s266 + $0xfc] sm:$0xf]
        %v2680 = vunpack.c.l.b16 %v2552
        %v2681 = vunpack.c.l.b16 %v2553
        %v2682 = vunpack.c.l.b16 %v2554
        %v2683 = vunpack.c.l.b16 %v2555
        %v2684 = vunpack.c.l.b16 %v2556
        %v2685 = vunpack.c.l.b16 %v2557
        %v2686 = vunpack.c.l.b16 %v2558
        %v2687 = vunpack.c.l.b16 %v2559
        %v2688 = vunpack.c.l.b16 %v2560
        %v2689 = vunpack.c.l.b16 %v2561
        %v2690 = vunpack.c.l.b16 %v2562
        %v2691 = vunpack.c.l.b16 %v2563
        %v2692 = vunpack.c.l.b16 %v2564
        %v2693 = vunpack.c.l.b16 %v2565
        %v2694 = vunpack.c.l.b16 %v2566
        %v2695 = vunpack.c.l.b16 %v2567
        %v2696 = vunpack.c.l.b16 %v2568
        %v2697 = vunpack.c.l.b16 %v2569
        %v2698 = vunpack.c.l.b16 %v2570
        %v2699 = vunpack.c.l.b16 %v2571
        %v2700 = vunpack.c.l.b16 %v2572
        %v2701 = vunpack.c.l.b16 %v2573
        %v2702 = vunpack.c.l.b16 %v2574
        %v2703 = vunpack.c.l.b16 %v2575
        %v2704 = vunpack.c.l.b16 %v2576
        %v2705 = vunpack.c.l.b16 %v2577
        %v2706 = vunpack.c.l.b16 %v2578
        %v2707 = vunpack.c.l.b16 %v2579
        %v2708 = vunpack.c.l.b16 %v2580
        %v2709 = vunpack.c.l.b16 %v2581
        %v2710 = vunpack.c.l.b16 %v2582
        %v2711 = vunpack.c.l.b16 %v2583
        %v2712 = vunpack.c.l.b16 %v2584
        %v2713 = vunpack.c.l.b16 %v2585
        %v2714 = vunpack.c.l.b16 %v2586
        %v2715 = vunpack.c.l.b16 %v2587
        %v2716 = vunpack.c.l.b16 %v2588
        %v2717 = vunpack.c.l.b16 %v2589
        %v2718 = vunpack.c.l.b16 %v2590
        %v2719 = vunpack.c.l.b16 %v2591
        %v2720 = vunpack.c.l.b16 %v2592
        %v2721 = vunpack.c.l.b16 %v2593
        %v2722 = vunpack.c.l.b16 %v2594
        %v2723 = vunpack.c.l.b16 %v2595
        %v2724 = vunpack.c.l.b16 %v2596
        %v2725 = vunpack.c.l.b16 %v2597
        %v2726 = vunpack.c.l.b16 %v2598
        %v2727 = vunpack.c.l.b16 %v2599
        %v2728 = vunpack.c.l.b16 %v2600
        %v2729 = vunpack.c.l.b16 %v2601
        %v2730 = vunpack.c.l.b16 %v2602
        %v2731 = vunpack.c.l.b16 %v2603
        %v2732 = vunpack.c.l.b16 %v2604
        %v2733 = vunpack.c.l.b16 %v2605
        %v2734 = vunpack.c.l.b16 %v2606
        %v2735 = vunpack.c.l.b16 %v2607
        %v2736 = vunpack.c.l.b16 %v2608
        %v2737 = vunpack.c.l.b16 %v2609
        %v2738 = vunpack.c.l.b16 %v2610
        %v2739 = vunpack.c.l.b16 %v2611
        %v2740 = vunpack.c.l.b16 %v2612
        %v2741 = vunpack.c.l.b16 %v2613
        %v2742 = vunpack.c.l.b16 %v2614
        %v2743 = vunpack.c.l.b16 %v2615
        %v2744 = vpack.c.b16 %v2681, %v2680
        %v2745 = vpack.c.b16 %v2683, %v2682
        %v2746 = vpack.c.b16 %v2685, %v2684
        %v2747 = vpack.c.b16 %v2687, %v2686
        %v2748 = vpack.c.b16 %v2689, %v2688
        %v2749 = vpack.c.b16 %v2691, %v2690
        %v2750 = vpack.c.b16 %v2693, %v2692
        %v2751 = vpack.c.b16 %v2695, %v2694
        %v2752 = vpack.c.b16 %v2697, %v2696
        %v2753 = vpack.c.b16 %v2699, %v2698
        %v2754 = vpack.c.b16 %v2701, %v2700
        %v2755 = vpack.c.b16 %v2703, %v2702
        %v2756 = vpack.c.b16 %v2705, %v2704
        %v2757 = vpack.c.b16 %v2707, %v2706
        %v2758 = vpack.c.b16 %v2709, %v2708
        %v2759 = vpack.c.b16 %v2711, %v2710
        %v2760 = vpack.c.b16 %v2713, %v2712
        %v2761 = vpack.c.b16 %v2715, %v2714
        %v2762 = vpack.c.b16 %v2717, %v2716
        %v2763 = vpack.c.b16 %v2719, %v2718
        %v2764 = vpack.c.b16 %v2721, %v2720
        %v2765 = vpack.c.b16 %v2723, %v2722
        %v2766 = vpack.c.b16 %v2725, %v2724
        %v2767 = vpack.c.b16 %v2727, %v2726
        %v2768 = vpack.c.b16 %v2729, %v2728
        %v2769 = vpack.c.b16 %v2731, %v2730
        %v2770 = vpack.c.b16 %v2733, %v2732
        %v2771 = vpack.c.b16 %v2735, %v2734
        %v2772 = vpack.c.b16 %v2737, %v2736
        %v2773 = vpack.c.b16 %v2739, %v2738
        %v2774 = vpack.c.b16 %v2741, %v2740
        %v2775 = vpack.c.b16 %v2743, %v2742
        %2808 = vmatprep.subr.bf16.mxu0 0
        %2809 = vmatpush1.bf16.msra.mxu0 %v2744
        %2810 = vmatprep.subr.bf16.mxu0 0
        %2811 = vmatpush1.bf16.msra.mxu0 %v2745
        %2812 = vmatprep.subr.bf16.mxu0 0
        %2813 = vmatpush1.bf16.msra.mxu0 %v2746
        %2814 = vmatprep.subr.bf16.mxu0 0
        %2815 = vmatpush1.bf16.msra.mxu0 %v2747
        %2816 = vmatprep.subr.bf16.mxu0 0
        %2817 = vmatpush1.bf16.msra.mxu0 %v2748
        %2818 = vmatprep.subr.bf16.mxu0 0
        %2819 = vmatpush1.bf16.msra.mxu0 %v2749
        %2820 = vmatprep.subr.bf16.mxu0 0
        %2821 = vmatpush1.bf16.msra.mxu0 %v2750
        %2822 = vmatprep.subr.bf16.mxu0 0
        %2823 = vmatpush1.bf16.msra.mxu0 %v2751
        %2824 = vmatprep.subr.bf16.mxu0 0
        %2825 = vmatpush1.bf16.msra.mxu0 %v2752
        %2826 = vmatprep.subr.bf16.mxu0 0
        %2827 = vmatpush1.bf16.msra.mxu0 %v2753
        %2828 = vmatprep.subr.bf16.mxu0 0
        %2829 = vmatpush1.bf16.msra.mxu0 %v2754
        %2830 = vmatprep.subr.bf16.mxu0 0
        %2831 = vmatpush1.bf16.msra.mxu0 %v2755
        %2832 = vmatprep.subr.bf16.mxu0 0
        %2833 = vmatpush1.bf16.msra.mxu0 %v2756
        %2834 = vmatprep.subr.bf16.mxu0 0
        %2835 = vmatpush1.bf16.msra.mxu0 %v2757
        %2836 = vmatprep.subr.bf16.mxu0 0
        %2837 = vmatpush1.bf16.msra.mxu0 %v2758
        %2838 = vmatprep.subr.bf16.mxu0 0
        %2839 = vmatpush1.bf16.msra.mxu0 %v2759
        %2840 = vmatprep.mubr.bf16.mxu0 %v2489
        %2841 = vmatmul.mubr.bf16.gmra.mrb[0].mxu0 %v2488
        %v2842 = vpop.f32.mrb[0].mxu0
        %v2843 = vadd.f32 0.0, %v2842
        %v2844 = vpop.f32.mrb[0].mxu0
        %v2845 = vpop.f32.mrb[0].mxu0
        %v2846 = vadd.f32 0.0, %v2845
        %v2847 = vpop.f32.mrb[0].mxu0
        %2848 = vmatprep.mubr.bf16.mxu0 %v2493
        %2849 = vmatmul.mubr.bf16.gmra.mrb[0].mxu0 %v2492
        %v2850 = vpop.f32.mrb[0].mxu0
        %v2851 = vadd.f32 0.0, %v2850
        %v2852 = vpop.f32.mrb[0].mxu0
        %v2853 = vpop.f32.mrb[0].mxu0
        %v2854 = vadd.f32 0.0, %v2853
        %v2855 = vpop.f32.mrb[0].mxu0
        %2856 = vmatprep.mubr.bf16.mxu0 %v2497
        %2857 = vmatmul.mubr.bf16.gmra.mrb[0].mxu0 %v2496
        %v2858 = vpop.f32.mrb[0].mxu0
        %v2859 = vadd.f32 0.0, %v2858
        %v2860 = vpop.f32.mrb[0].mxu0
        %v2861 = vpop.f32.mrb[0].mxu0
        %v2862 = vadd.f32 0.0, %v2861
        %v2863 = vpop.f32.mrb[0].mxu0
        %2864 = vmatprep.mubr.bf16.mxu0 %v2501
        %2865 = vmatmul.mubr.bf16.gmra.mrb[0].mxu0 %v2500
        %v2866 = vpop.f32.mrb[0].mxu0
        %v2867 = vadd.f32 0.0, %v2866
        %v2868 = vpop.f32.mrb[0].mxu0
        %v2869 = vpop.f32.mrb[0].mxu0
        %v2870 = vadd.f32 0.0, %v2869
        %v2871 = vpop.f32.mrb[0].mxu0
        %2872 = vmatprep.mubr.bf16.mxu0 %v2505
        %2873 = vmatmul.mubr.bf16.gmra.mrb[0].mxu0 %v2504
        %v2874 = vpop.f32.mrb[0].mxu0
        %v2875 = vadd.f32 0.0, %v2874
        %v2876 = vpop.f32.mrb[0].mxu0
        %v2877 = vpop.f32.mrb[0].mxu0
        %v2878 = vadd.f32 0.0, %v2877
        %v2879 = vpop.f32.mrb[0].mxu0
        %2880 = vmatprep.mubr.bf16.mxu0 %v2509
        %2881 = vmatmul.mubr.bf16.gmra.mrb[0].mxu0 %v2508
        %v2882 = vpop.f32.mrb[0].mxu0
        %v2883 = vadd.f32 0.0, %v2882
        %v2884 = vpop.f32.mrb[0].mxu0
        %v2885 = vpop.f32.mrb[0].mxu0
        %v2886 = vadd.f32 0.0, %v2885
        %v2887 = vpop.f32.mrb[0].mxu0
        %2888 = vmatprep.mubr.bf16.mxu0 %v2513
        %2889 = vmatmul.mubr.bf16.gmra.mrb[0].mxu0 %v2512
        %v2890 = vpop.f32.mrb[0].mxu0
        %v2891 = vadd.f32 0.0, %v2890
        %v2892 = vpop.f32.mrb[0].mxu0
        %v2893 = vpop.f32.mrb[0].mxu0
        %v2894 = vadd.f32 0.0, %v2893
        %v2895 = vpop.f32.mrb[0].mxu0
        %2896 = vmatprep.mubr.bf16.mxu0 %v2517
        %2897 = vmatmul.mubr.bf16.gmra.mrb[0].mxu0 %v2516
        %v2898 = vpop.f32.mrb[0].mxu0
        %v2899 = vadd.f32 0.0, %v2898
        %v2900 = vpop.f32.mrb[0].mxu0
        %v2901 = vpop.f32.mrb[0].mxu0
        %v2902 = vadd.f32 0.0, %v2901
        %v2903 = vpop.f32.mrb[0].mxu0
        %2904 = vmatprep.mubr.bf16.mxu0 %v2521
        %2905 = vmatmul.mubr.bf16.gmra.mrb[0].mxu0 %v2520
        %v2906 = vpop.f32.mrb[0].mxu0
        %v2907 = vadd.f32 0.0, %v2906
        %v2908 = vpop.f32.mrb[0].mxu0
        %v2909 = vpop.f32.mrb[0].mxu0
        %v2910 = vadd.f32 0.0, %v2909
        %v2911 = vpop.f32.mrb[0].mxu0
        %2912 = vmatprep.mubr.bf16.mxu0 %v2525
        %2913 = vmatmul.mubr.bf16.gmra.mrb[0].mxu0 %v2524
        %v2914 = vpop.f32.mrb[0].mxu0
        %v2915 = vadd.f32 0.0, %v2914
        %v2916 = vpop.f32.mrb[0].mxu0
        %v2917 = vpop.f32.mrb[0].mxu0
        %v2918 = vadd.f32 0.0, %v2917
        %v2919 = vpop.f32.mrb[0].mxu0
        %2920 = vmatprep.mubr.bf16.mxu0 %v2529
        %2921 = vmatmul.mubr.bf16.gmra.mrb[0].mxu0 %v2528
        %v2922 = vpop.f32.mrb[0].mxu0
        %v2923 = vadd.f32 0.0, %v2922
        %v2924 = vpop.f32.mrb[0].mxu0
        %v2925 = vpop.f32.mrb[0].mxu0
        %v2926 = vadd.f32 0.0, %v2925
        %v2927 = vpop.f32.mrb[0].mxu0
        %2928 = vmatprep.mubr.bf16.mxu0 %v2533
        %2929 = vmatmul.mubr.bf16.gmra.mrb[0].mxu0 %v2532
        %v2930 = vpop.f32.mrb[0].mxu0
        %v2931 = vadd.f32 0.0, %v2930
        %v2932 = vpop.f32.mrb[0].mxu0
        %v2933 = vpop.f32.mrb[0].mxu0
        %v2934 = vadd.f32 0.0, %v2933
        %v2935 = vpop.f32.mrb[0].mxu0
        %2936 = vmatprep.mubr.bf16.mxu0 %v2537
        %2937 = vmatmul.mubr.bf16.gmra.mrb[0].mxu0 %v2536
        %v2938 = vpop.f32.mrb[0].mxu0
        %v2939 = vadd.f32 0.0, %v2938
        %v2940 = vpop.f32.mrb[0].mxu0
        %v2941 = vpop.f32.mrb[0].mxu0
        %v2942 = vadd.f32 0.0, %v2941
        %v2943 = vpop.f32.mrb[0].mxu0
        %2944 = vmatprep.mubr.bf16.mxu0 %v2541
        %2945 = vmatmul.mubr.bf16.gmra.mrb[0].mxu0 %v2540
        %v2946 = vpop.f32.mrb[0].mxu0
        %v2947 = vadd.f32 0.0, %v2946
        %v2948 = vpop.f32.mrb[0].mxu0
        %v2949 = vpop.f32.mrb[0].mxu0
        %v2950 = vadd.f32 0.0, %v2949
        %v2951 = vpop.f32.mrb[0].mxu0
        %2952 = vmatprep.mubr.bf16.mxu0 %v2545
        %2953 = vmatmul.mubr.bf16.gmra.mrb[0].mxu0 %v2544
        %v2954 = vpop.f32.mrb[0].mxu0
        %v2955 = vadd.f32 0.0, %v2954
        %v2956 = vpop.f32.mrb[0].mxu0
        %v2957 = vpop.f32.mrb[0].mxu0
        %v2958 = vadd.f32 0.0, %v2957
        %v2959 = vpop.f32.mrb[0].mxu0
        %2960 = vmatprep.mubr.bf16.mxu0 %v2549
        %2961 = vmatmul.mubr.bf16.gmra.mrb[0].mxu0 %v2548
        %v2962 = vpop.f32.mrb[0].mxu0
        %v2963 = vadd.f32 0.0, %v2962
        %v2964 = vpop.f32.mrb[0].mxu0
        %v2965 = vpop.f32.mrb[0].mxu0
        %v2966 = vadd.f32 0.0, %v2965
        %v2967 = vpop.f32.mrb[0].mxu0
        %2968 = vdwg.mxu0
        %2969 = vmatprep.subr.bf16.mxu0 0
        %2970 = vmatpush1.bf16.msra.mxu0 %v2760
        %2971 = vmatprep.subr.bf16.mxu0 0
        %2972 = vmatpush1.bf16.msra.mxu0 %v2761
        %2973 = vmatprep.subr.bf16.mxu0 0
        %2974 = vmatpush1.bf16.msra.mxu0 %v2762
        %2975 = vmatprep.subr.bf16.mxu0 0
        %2976 = vmatpush1.bf16.msra.mxu0 %v2763
        %2977 = vmatprep.subr.bf16.mxu0 0
        %2978 = vmatpush1.bf16.msra.mxu0 %v2764
        %2979 = vmatprep.subr.bf16.mxu0 0
        %2980 = vmatpush1.bf16.msra.mxu0 %v2765
        %2981 = vmatprep.subr.bf16.mxu0 0
        %2982 = vmatpush1.bf16.msra.mxu0 %v2766
        %2983 = vmatprep.subr.bf16.mxu0 0
        %2984 = vmatpush1.bf16.msra.mxu0 %v2767
        %2985 = vmatprep.subr.bf16.mxu0 0
        %2986 = vmatpush1.bf16.msra.mxu0 %v2768
        %2987 = vmatprep.subr.bf16.mxu0 0
        %2988 = vmatpush1.bf16.msra.mxu0 %v2769
        %2989 = vmatprep.subr.bf16.mxu0 0
        %2990 = vmatpush1.bf16.msra.mxu0 %v2770
        %2991 = vmatprep.subr.bf16.mxu0 0
        %2992 = vmatpush1.bf16.msra.mxu0 %v2771
        %2993 = vmatprep.subr.bf16.mxu0 0
        %2994 = vmatpush1.bf16.msra.mxu0 %v2772
        %2995 = vmatprep.subr.bf16.mxu0 0
        %2996 = vmatpush1.bf16.msra.mxu0 %v2773
        %2997 = vmatprep.subr.bf16.mxu0 0
        %2998 = vmatpush1.bf16.msra.mxu0 %v2774
        %2999 = vmatprep.subr.bf16.mxu0 0
        %3000 = vmatpush1.bf16.msra.mxu0 %v2775
        %3001 = vmatprep.mubr.bf16.mxu0 %v2491
        %3002 = vmatmul.mubr.bf16.gmra.mrb[0].mxu0 %v2490
        %v3003 = vpop.f32.mrb[0].mxu0
        %v3004 = vadd.f32 %v2843, %v3003
        %v3005 = vpop.f32.mrb[0].mxu0
        %v3006 = vpop.f32.mrb[0].mxu0
        %v3007 = vadd.f32 %v2846, %v3006
        %v3008 = vpop.f32.mrb[0].mxu0
        %3009 = vmatprep.mubr.bf16.mxu0 %v2495
        %3010 = vmatmul.mubr.bf16.gmra.mrb[0].mxu0 %v2494
        %v3011 = vpop.f32.mrb[0].mxu0
        %v3012 = vadd.f32 %v2851, %v3011
        %v3013 = vpop.f32.mrb[0].mxu0
        %v3014 = vpop.f32.mrb[0].mxu0
        %v3015 = vadd.f32 %v2854, %v3014
        %v3016 = vpop.f32.mrb[0].mxu0
        %3017 = vmatprep.mubr.bf16.mxu0 %v2499
        %3018 = vmatmul.mubr.bf16.gmra.mrb[0].mxu0 %v2498
        %v3019 = vpop.f32.mrb[0].mxu0
        %v3020 = vadd.f32 %v2859, %v3019
        %v3021 = vpop.f32.mrb[0].mxu0
        %v3022 = vpop.f32.mrb[0].mxu0
        %v3023 = vadd.f32 %v2862, %v3022
        %v3024 = vpop.f32.mrb[0].mxu0
        %3025 = vmatprep.mubr.bf16.mxu0 %v2503
        %3026 = vmatmul.mubr.bf16.gmra.mrb[0].mxu0 %v2502
        %v3027 = vpop.f32.mrb[0].mxu0
        %v3028 = vadd.f32 %v2867, %v3027
        %v3029 = vpop.f32.mrb[0].mxu0
        %v3030 = vpop.f32.mrb[0].mxu0
        %v3031 = vadd.f32 %v2870, %v3030
        %v3032 = vpop.f32.mrb[0].mxu0
        %3033 = vmatprep.mubr.bf16.mxu0 %v2507
        %3034 = vmatmul.mubr.bf16.gmra.mrb[0].mxu0 %v2506
        %v3035 = vpop.f32.mrb[0].mxu0
        %v3036 = vadd.f32 %v2875, %v3035
        %v3037 = vpop.f32.mrb[0].mxu0
        %v3038 = vpop.f32.mrb[0].mxu0
        %v3039 = vadd.f32 %v2878, %v3038
        %v3040 = vpop.f32.mrb[0].mxu0
        %3041 = vmatprep.mubr.bf16.mxu0 %v2511
        %3042 = vmatmul.mubr.bf16.gmra.mrb[0].mxu0 %v2510
        %v3043 = vpop.f32.mrb[0].mxu0
        %v3044 = vadd.f32 %v2883, %v3043
        %v3045 = vpop.f32.mrb[0].mxu0
        %v3046 = vpop.f32.mrb[0].mxu0
        %v3047 = vadd.f32 %v2886, %v3046
        %v3048 = vpop.f32.mrb[0].mxu0
        %3049 = vmatprep.mubr.bf16.mxu0 %v2515
        %3050 = vmatmul.mubr.bf16.gmra.mrb[0].mxu0 %v2514
        %v3051 = vpop.f32.mrb[0].mxu0
        %v3052 = vadd.f32 %v2891, %v3051
        %v3053 = vpop.f32.mrb[0].mxu0
        %v3054 = vpop.f32.mrb[0].mxu0
        %v3055 = vadd.f32 %v2894, %v3054
        %v3056 = vpop.f32.mrb[0].mxu0
        %3057 = vmatprep.mubr.bf16.mxu0 %v2519
        %3058 = vmatmul.mubr.bf16.gmra.mrb[0].mxu0 %v2518
        %v3059 = vpop.f32.mrb[0].mxu0
        %v3060 = vadd.f32 %v2899, %v3059
        %v3061 = vpop.f32.mrb[0].mxu0
        %v3062 = vpop.f32.mrb[0].mxu0
        %v3063 = vadd.f32 %v2902, %v3062
        %v3064 = vpop.f32.mrb[0].mxu0
        %3065 = vmatprep.mubr.bf16.mxu0 %v2523
        %3066 = vmatmul.mubr.bf16.gmra.mrb[0].mxu0 %v2522
        %v3067 = vpop.f32.mrb[0].mxu0
        %v3068 = vadd.f32 %v2907, %v3067
        %v3069 = vpop.f32.mrb[0].mxu0
        %v3070 = vpop.f32.mrb[0].mxu0
        %v3071 = vadd.f32 %v2910, %v3070
        %v3072 = vpop.f32.mrb[0].mxu0
        %3073 = vmatprep.mubr.bf16.mxu0 %v2527
        %3074 = vmatmul.mubr.bf16.gmra.mrb[0].mxu0 %v2526
        %v3075 = vpop.f32.mrb[0].mxu0
        %v3076 = vadd.f32 %v2915, %v3075
        %v3077 = vpop.f32.mrb[0].mxu0
        %v3078 = vpop.f32.mrb[0].mxu0
        %v3079 = vadd.f32 %v2918, %v3078
        %v3080 = vpop.f32.mrb[0].mxu0
        %3081 = vmatprep.mubr.bf16.mxu0 %v2531
        %3082 = vmatmul.mubr.bf16.gmra.mrb[0].mxu0 %v2530
        %v3083 = vpop.f32.mrb[0].mxu0
        %v3084 = vadd.f32 %v2923, %v3083
        %v3085 = vpop.f32.mrb[0].mxu0
        %v3086 = vpop.f32.mrb[0].mxu0
        %v3087 = vadd.f32 %v2926, %v3086
        %v3088 = vpop.f32.mrb[0].mxu0
        %3089 = vmatprep.mubr.bf16.mxu0 %v2535
        %3090 = vmatmul.mubr.bf16.gmra.mrb[0].mxu0 %v2534
        %v3091 = vpop.f32.mrb[0].mxu0
        %v3092 = vadd.f32 %v2931, %v3091
        %v3093 = vpop.f32.mrb[0].mxu0
        %v3094 = vpop.f32.mrb[0].mxu0
        %v3095 = vadd.f32 %v2934, %v3094
        %v3096 = vpop.f32.mrb[0].mxu0
        %3097 = vmatprep.mubr.bf16.mxu0 %v2539
        %3098 = vmatmul.mubr.bf16.gmra.mrb[0].mxu0 %v2538
        %v3099 = vpop.f32.mrb[0].mxu0
        %v3100 = vadd.f32 %v2939, %v3099
        %v3101 = vpop.f32.mrb[0].mxu0
        %v3102 = vpop.f32.mrb[0].mxu0
        %v3103 = vadd.f32 %v2942, %v3102
        %v3104 = vpop.f32.mrb[0].mxu0
        %3105 = vmatprep.mubr.bf16.mxu0 %v2543
        %3106 = vmatmul.mubr.bf16.gmra.mrb[0].mxu0 %v2542
        %v3107 = vpop.f32.mrb[0].mxu0
        %v3108 = vadd.f32 %v2947, %v3107
        %v3109 = vpop.f32.mrb[0].mxu0
        %v3110 = vpop.f32.mrb[0].mxu0
        %v3111 = vadd.f32 %v2950, %v3110
        %v3112 = vpop.f32.mrb[0].mxu0
        %3113 = vmatprep.mubr.bf16.mxu0 %v2547
        %3114 = vmatmul.mubr.bf16.gmra.mrb[0].mxu0 %v2546
        %v3115 = vpop.f32.mrb[0].mxu0
        %v3116 = vadd.f32 %v2955, %v3115
        %v3117 = vpop.f32.mrb[0].mxu0
        %v3118 = vpop.f32.mrb[0].mxu0
        %v3119 = vadd.f32 %v2958, %v3118
        %v3120 = vpop.f32.mrb[0].mxu0
        %3121 = vmatprep.mubr.bf16.mxu0 %v2551
        %3122 = vmatmul.mubr.bf16.gmra.mrb[0].mxu0 %v2550
        %v3123 = vpop.f32.mrb[0].mxu0
        %v3124 = vadd.f32 %v2963, %v3123
        %v3125 = vpop.f32.mrb[0].mxu0
        %v3126 = vpop.f32.mrb[0].mxu0
        %v3127 = vadd.f32 %v2966, %v3126
        %v3128 = vpop.f32.mrb[0].mxu0
        %3129 = vdwg.mxu0
        %v3130 = vadd.f32 %v2456, %v3004
        %v3131 = vadd.f32 %v2457, %v3007
        %v3132 = vadd.f32 %v2458, %v3012
        %v3133 = vadd.f32 %v2459, %v3015
        %v3134 = vadd.f32 %v2460, %v3020
        %v3135 = vadd.f32 %v2461, %v3023
        %v3136 = vadd.f32 %v2462, %v3028
        %v3137 = vadd.f32 %v2463, %v3031
        %v3138 = vadd.f32 %v2464, %v3036
        %v3139 = vadd.f32 %v2465, %v3039
        %v3140 = vadd.f32 %v2466, %v3044
        %v3141 = vadd.f32 %v2467, %v3047
        %v3142 = vadd.f32 %v2468, %v3052
        %v3143 = vadd.f32 %v2469, %v3055
        %v3144 = vadd.f32 %v2470, %v3060
        %v3145 = vadd.f32 %v2471, %v3063
        %v3146 = vadd.f32 %v2472, %v3068
        %v3147 = vadd.f32 %v2473, %v3071
        %v3148 = vadd.f32 %v2474, %v3076
        %v3149 = vadd.f32 %v2475, %v3079
        %v3150 = vadd.f32 %v2476, %v3084
        %v3151 = vadd.f32 %v2477, %v3087
        %v3152 = vadd.f32 %v2478, %v3092
        %v3153 = vadd.f32 %v2479, %v3095
        %v3154 = vadd.f32 %v2480, %v3100
        %v3155 = vadd.f32 %v2481, %v3103
        %v3156 = vadd.f32 %v2482, %v3108
        %v3157 = vadd.f32 %v2483, %v3111
        %v3158 = vadd.f32 %v2484, %v3116
        %v3159 = vadd.f32 %v2485, %v3119
        %v3160 = vadd.f32 %v2486, %v3124
        %v3161 = vadd.f32 %v2487, %v3127
        %3162 = vst [vmem:[#allocation4] sm:$0xff] %v3130
        %3163 = vst [vmem:[#allocation4 + $0x8] sm:$0xff] %v3131
        %3164 = vst [vmem:[#allocation4 + $0x10] sm:$0xff] %v3132
        %3165 = vst [vmem:[#allocation4 + $0x18] sm:$0xff] %v3133
        %3166 = vst [vmem:[#allocation4 + $0x20] sm:$0xff] %v3134
        %3167 = vst [vmem:[#allocation4 + $0x28] sm:$0xff] %v3135
        %3168 = vst [vmem:[#allocation4 + $0x30] sm:$0xff] %v3136
        %3169 = vst [vmem:[#allocation4 + $0x38] sm:$0xff] %v3137
        %3170 = vst [vmem:[#allocation4 + $0x40] sm:$0xff] %v3138
        %3171 = vst [vmem:[#allocation4 + $0x48] sm:$0xff] %v3139
        %3172 = vst [vmem:[#allocation4 + $0x50] sm:$0xff] %v3140
        %3173 = vst [vmem:[#allocation4 + $0x58] sm:$0xff] %v3141
        %3174 = vst [vmem:[#allocation4 + $0x60] sm:$0xff] %v3142
        %3175 = vst [vmem:[#allocation4 + $0x68] sm:$0xff] %v3143
        %3176 = vst [vmem:[#allocation4 + $0x70] sm:$0xff] %v3144
        %3177 = vst [vmem:[#allocation4 + $0x78] sm:$0xff] %v3145
        %3178 = vst [vmem:[#allocation4 + $0x80] sm:$0xff] %v3146
        %3179 = vst [vmem:[#allocation4 + $0x88] sm:$0xff] %v3147
        %3180 = vst [vmem:[#allocation4 + $0x90] sm:$0xff] %v3148
        %3181 = vst [vmem:[#allocation4 + $0x98] sm:$0xff] %v3149
        %3182 = vst [vmem:[#allocation4 + $0xa0] sm:$0xff] %v3150
        %3183 = vst [vmem:[#allocation4 + $0xa8] sm:$0xff] %v3151
        %3184 = vst [vmem:[#allocation4 + $0xb0] sm:$0xff] %v3152
        %3185 = vst [vmem:[#allocation4 + $0xb8] sm:$0xff] %v3153
        %3186 = vst [vmem:[#allocation4 + $0xc0] sm:$0xff] %v3154
        %3187 = vst [vmem:[#allocation4 + $0xc8] sm:$0xff] %v3155
        %3188 = vst [vmem:[#allocation4 + $0xd0] sm:$0xff] %v3156
        %3189 = vst [vmem:[#allocation4 + $0xd8] sm:$0xff] %v3157
        %3190 = vst [vmem:[#allocation4 + $0xe0] sm:$0xff] %v3158
        %3191 = vst [vmem:[#allocation4 + $0xe8] sm:$0xff] %v3159
        %3192 = vst [vmem:[#allocation4 + $0xf0] sm:$0xff] %v3160
        %3193 = vst [vmem:[#allocation4 + $0xf8] sm:$0xff] %v3161
        %3194 = vst.msk [vmem:[#allocation2] sm:$0xff] %vm2231, %v1303
        %3195 = vst.msk [vmem:[#allocation2 + $0x8] sm:$0xff] %vm2231, %v1304
        %3196 = vst.msk [vmem:[#allocation2 + $0x10] sm:$0xff] %vm2231, %v1305
        %3197 = vst.msk [vmem:[#allocation2 + $0x18] sm:$0xff] %vm2231, %v1306
        %3198 = vst.msk [vmem:[#allocation2 + $0x20] sm:$0xff] %vm2231, %v1307
        %3199 = vst.msk [vmem:[#allocation2 + $0x28] sm:$0xff] %vm2231, %v1308
        %3200 = vst.msk [vmem:[#allocation2 + $0x30] sm:$0xff] %vm2231, %v1309
        %3201 = vst.msk [vmem:[#allocation2 + $0x38] sm:$0xff] %vm2231, %v1310
        %3202 = vst.msk [vmem:[#allocation2 + $0x40] sm:$0xff] %vm2231, %v1311
        %3203 = vst.msk [vmem:[#allocation2 + $0x48] sm:$0xff] %vm2231, %v1312
        %3204 = vst.msk [vmem:[#allocation2 + $0x50] sm:$0xff] %vm2231, %v1313
        %3205 = vst.msk [vmem:[#allocation2 + $0x58] sm:$0xff] %vm2231, %v1314
        %3206 = vst.msk [vmem:[#allocation2 + $0x60] sm:$0xff] %vm2231, %v1315
        %3207 = vst.msk [vmem:[#allocation2 + $0x68] sm:$0xff] %vm2231, %v1316
        %3208 = vst.msk [vmem:[#allocation2 + $0x70] sm:$0xff] %vm2231, %v1317
        %3209 = vst.msk [vmem:[#allocation2 + $0x78] sm:$0xff] %vm2231, %v1318
        %3210 = vst.msk [vmem:[#allocation2 + $0x80] sm:$0xff] %vm2231, %v1319
        %3211 = vst.msk [vmem:[#allocation2 + $0x88] sm:$0xff] %vm2231, %v1320
        %3212 = vst.msk [vmem:[#allocation2 + $0x90] sm:$0xff] %vm2231, %v1321
        %3213 = vst.msk [vmem:[#allocation2 + $0x98] sm:$0xff] %vm2231, %v1322
        %3214 = vst.msk [vmem:[#allocation2 + $0xa0] sm:$0xff] %vm2231, %v1323
        %3215 = vst.msk [vmem:[#allocation2 + $0xa8] sm:$0xff] %vm2231, %v1324
        %3216 = vst.msk [vmem:[#allocation2 + $0xb0] sm:$0xff] %vm2231, %v1325
        %3217 = vst.msk [vmem:[#allocation2 + $0xb8] sm:$0xff] %vm2231, %v1326
        %3218 = vst.msk [vmem:[#allocation2 + $0xc0] sm:$0xff] %vm2231, %v1327
        %3219 = vst.msk [vmem:[#allocation2 + $0xc8] sm:$0xff] %vm2231, %v1328
        %3220 = vst.msk [vmem:[#allocation2 + $0xd0] sm:$0xff] %vm2231, %v1329
        %3221 = vst.msk [vmem:[#allocation2 + $0xd8] sm:$0xff] %vm2231, %v1330
        %3222 = vst.msk [vmem:[#allocation2 + $0xe0] sm:$0xff] %vm2231, %v1331
        %3223 = vst.msk [vmem:[#allocation2 + $0xe8] sm:$0xff] %vm2231, %v1332
        %3224 = vst.msk [vmem:[#allocation2 + $0xf0] sm:$0xff] %vm2231, %v1333
        %3225 = vst.msk [vmem:[#allocation2 + $0xf8] sm:$0xff] %vm2231, %v1334
        %p3226 = scmp.eq.s32.totalorder %s30, 1
        // Predicated region
        $region49: #{tpu_custom_call.1} parent=31 // pred_check
          %p3227 = pneg %p3226
        $region50: #{tpu_custom_call.1} parent=31 // pred_check_branch
          %3229 = sbr.rel (%p3227) target = $region52
        $region51: #{tpu_custom_call.1} parent=31 // pred_region
          %v3230 = vld [vmem:[#allocation3] sm:$0xff]
          %v3231 = vld [vmem:[#allocation3 + $0x8] sm:$0xff]
          %v3232 = vld [vmem:[#allocation3 + $0x10] sm:$0xff]
          %v3233 = vld [vmem:[#allocation3 + $0x18] sm:$0xff]
          %v3234 = vld [vmem:[#allocation3 + $0x20] sm:$0xff]
          %v3235 = vld [vmem:[#allocation3 + $0x28] sm:$0xff]
          %v3236 = vld [vmem:[#allocation3 + $0x30] sm:$0xff]
          %v3237 = vld [vmem:[#allocation3 + $0x38] sm:$0xff]
          %v3238 = vld [vmem:[#allocation3 + $0x40] sm:$0xff]
          %v3239 = vld [vmem:[#allocation3 + $0x48] sm:$0xff]
          %v3240 = vld [vmem:[#allocation3 + $0x50] sm:$0xff]
          %v3241 = vld [vmem:[#allocation3 + $0x58] sm:$0xff]
          %v3242 = vld [vmem:[#allocation3 + $0x60] sm:$0xff]
          %v3243 = vld [vmem:[#allocation3 + $0x68] sm:$0xff]
          %v3244 = vld [vmem:[#allocation3 + $0x70] sm:$0xff]
          %v3245 = vld [vmem:[#allocation3 + $0x78] sm:$0xff]
          %v3246 = vld [vmem:[#allocation3 + $0x80] sm:$0xff]
          %v3247 = vld [vmem:[#allocation3 + $0x88] sm:$0xff]
          %v3248 = vld [vmem:[#allocation3 + $0x90] sm:$0xff]
          %v3249 = vld [vmem:[#allocation3 + $0x98] sm:$0xff]
          %v3250 = vld [vmem:[#allocation3 + $0xa0] sm:$0xff]
          %v3251 = vld [vmem:[#allocation3 + $0xa8] sm:$0xff]
          %v3252 = vld [vmem:[#allocation3 + $0xb0] sm:$0xff]
          %v3253 = vld [vmem:[#allocation3 + $0xb8] sm:$0xff]
          %v3254 = vld [vmem:[#allocation3 + $0xc0] sm:$0xff]
          %v3255 = vld [vmem:[#allocation3 + $0xc8] sm:$0xff]
          %v3256 = vld [vmem:[#allocation3 + $0xd0] sm:$0xff]
          %v3257 = vld [vmem:[#allocation3 + $0xd8] sm:$0xff]
          %v3258 = vld [vmem:[#allocation3 + $0xe0] sm:$0xff]
          %v3259 = vld [vmem:[#allocation3 + $0xe8] sm:$0xff]
          %v3260 = vld [vmem:[#allocation3 + $0xf0] sm:$0xff]
          %v3261 = vld [vmem:[#allocation3 + $0xf8] sm:$0xff]
          %v3262 = vrcp.pop %v3230
          %v3263 = vrcp.pop %v3231
          %v3264 = vrcp.pop %v3232
          %v3265 = vrcp.pop %v3233
          %v3266 = vrcp.pop %v3234
          %v3267 = vrcp.pop %v3235
          %v3268 = vrcp.pop %v3236
          %v3269 = vrcp.pop %v3237
          %v3270 = vrcp.pop %v3238
          %v3271 = vrcp.pop %v3239
          %v3272 = vrcp.pop %v3240
          %v3273 = vrcp.pop %v3241
          %v3274 = vrcp.pop %v3242
          %v3275 = vrcp.pop %v3243
          %v3276 = vrcp.pop %v3244
          %v3277 = vrcp.pop %v3245
          %v3278 = vrcp.pop %v3246
          %v3279 = vrcp.pop %v3247
          %v3280 = vrcp.pop %v3248
          %v3281 = vrcp.pop %v3249
          %v3282 = vrcp.pop %v3250
          %v3283 = vrcp.pop %v3251
          %v3284 = vrcp.pop %v3252
          %v3285 = vrcp.pop %v3253
          %v3286 = vrcp.pop %v3254
          %v3287 = vrcp.pop %v3255
          %v3288 = vrcp.pop %v3256
          %v3289 = vrcp.pop %v3257
          %v3290 = vrcp.pop %v3258
          %v3291 = vrcp.pop %v3259
          %v3292 = vrcp.pop %v3260
          %v3293 = vrcp.pop %v3261
          %v3294 = vld [vmem:[#allocation4] sm:$0xff]
          %v3295 = vld [vmem:[#allocation4 + $0x8] sm:$0xff]
          %v3296 = vld [vmem:[#allocation4 + $0x10] sm:$0xff]
          %v3297 = vld [vmem:[#allocation4 + $0x18] sm:$0xff]
          %v3298 = vld [vmem:[#allocation4 + $0x20] sm:$0xff]
          %v3299 = vld [vmem:[#allocation4 + $0x28] sm:$0xff]
          %v3300 = vld [vmem:[#allocation4 + $0x30] sm:$0xff]
          %v3301 = vld [vmem:[#allocation4 + $0x38] sm:$0xff]
          %v3302 = vld [vmem:[#allocation4 + $0x40] sm:$0xff]
          %v3303 = vld [vmem:[#allocation4 + $0x48] sm:$0xff]
          %v3304 = vld [vmem:[#allocation4 + $0x50] sm:$0xff]
          %v3305 = vld [vmem:[#allocation4 + $0x58] sm:$0xff]
          %v3306 = vld [vmem:[#allocation4 + $0x60] sm:$0xff]
          %v3307 = vld [vmem:[#allocation4 + $0x68] sm:$0xff]
          %v3308 = vld [vmem:[#allocation4 + $0x70] sm:$0xff]
          %v3309 = vld [vmem:[#allocation4 + $0x78] sm:$0xff]
          %v3310 = vld [vmem:[#allocation4 + $0x80] sm:$0xff]
          %v3311 = vld [vmem:[#allocation4 + $0x88] sm:$0xff]
          %v3312 = vld [vmem:[#allocation4 + $0x90] sm:$0xff]
          %v3313 = vld [vmem:[#allocation4 + $0x98] sm:$0xff]
          %v3314 = vld [vmem:[#allocation4 + $0xa0] sm:$0xff]
          %v3315 = vld [vmem:[#allocation4 + $0xa8] sm:$0xff]
          %v3316 = vld [vmem:[#allocation4 + $0xb0] sm:$0xff]
          %v3317 = vld [vmem:[#allocation4 + $0xb8] sm:$0xff]
          %v3318 = vld [vmem:[#allocation4 + $0xc0] sm:$0xff]
          %v3319 = vld [vmem:[#allocation4 + $0xc8] sm:$0xff]
          %v3320 = vld [vmem:[#allocation4 + $0xd0] sm:$0xff]
          %v3321 = vld [vmem:[#allocation4 + $0xd8] sm:$0xff]
          %v3322 = vld [vmem:[#allocation4 + $0xe0] sm:$0xff]
          %v3323 = vld [vmem:[#allocation4 + $0xe8] sm:$0xff]
          %v3324 = vld [vmem:[#allocation4 + $0xf0] sm:$0xff]
          %v3325 = vld [vmem:[#allocation4 + $0xf8] sm:$0xff]
          %3327 = vset.pattern.permute.xlu0 0
          %3328 = vperm.xlu0 %3327, %v3262
          %v3329 = vpop.permute.xlu0 %3328
          %3332 = vset.pattern.permute.xlu0 0
          %3333 = vperm.xlu0 %3332, %v3263
          %v3334 = vpop.permute.xlu0 %3333
          %3337 = vset.pattern.permute.xlu0 0
          %3338 = vperm.xlu0 %3337, %v3264
          %v3339 = vpop.permute.xlu0 %3338
          %3342 = vset.pattern.permute.xlu0 0
          %3343 = vperm.xlu0 %3342, %v3265
          %v3344 = vpop.permute.xlu0 %3343
          %3347 = vset.pattern.permute.xlu0 0
          %3348 = vperm.xlu0 %3347, %v3266
          %v3349 = vpop.permute.xlu0 %3348
          %3352 = vset.pattern.permute.xlu0 0
          %3353 = vperm.xlu0 %3352, %v3267
          %v3354 = vpop.permute.xlu0 %3353
          %3357 = vset.pattern.permute.xlu0 0
          %3358 = vperm.xlu0 %3357, %v3268
          %v3359 = vpop.permute.xlu0 %3358
          %3362 = vset.pattern.permute.xlu0 0
          %3363 = vperm.xlu0 %3362, %v3269
          %v3364 = vpop.permute.xlu0 %3363
          %3367 = vset.pattern.permute.xlu0 0
          %3368 = vperm.xlu0 %3367, %v3270
          %v3369 = vpop.permute.xlu0 %3368
          %3372 = vset.pattern.permute.xlu0 0
          %3373 = vperm.xlu0 %3372, %v3271
          %v3374 = vpop.permute.xlu0 %3373
          %3377 = vset.pattern.permute.xlu0 0
          %3378 = vperm.xlu0 %3377, %v3272
          %v3379 = vpop.permute.xlu0 %3378
          %3382 = vset.pattern.permute.xlu0 0
          %3383 = vperm.xlu0 %3382, %v3273
          %v3384 = vpop.permute.xlu0 %3383
          %3387 = vset.pattern.permute.xlu0 0
          %3388 = vperm.xlu0 %3387, %v3274
          %v3389 = vpop.permute.xlu0 %3388
          %3392 = vset.pattern.permute.xlu0 0
          %3393 = vperm.xlu0 %3392, %v3275
          %v3394 = vpop.permute.xlu0 %3393
          %3397 = vset.pattern.permute.xlu0 0
          %3398 = vperm.xlu0 %3397, %v3276
          %v3399 = vpop.permute.xlu0 %3398
          %3402 = vset.pattern.permute.xlu0 0
          %3403 = vperm.xlu0 %3402, %v3277
          %v3404 = vpop.permute.xlu0 %3403
          %3407 = vset.pattern.permute.xlu0 0
          %3408 = vperm.xlu0 %3407, %v3278
          %v3409 = vpop.permute.xlu0 %3408
          %3412 = vset.pattern.permute.xlu0 0
          %3413 = vperm.xlu0 %3412, %v3279
          %v3414 = vpop.permute.xlu0 %3413
          %3417 = vset.pattern.permute.xlu0 0
          %3418 = vperm.xlu0 %3417, %v3280
          %v3419 = vpop.permute.xlu0 %3418
          %3422 = vset.pattern.permute.xlu0 0
          %3423 = vperm.xlu0 %3422, %v3281
          %v3424 = vpop.permute.xlu0 %3423
          %3427 = vset.pattern.permute.xlu0 0
          %3428 = vperm.xlu0 %3427, %v3282
          %v3429 = vpop.permute.xlu0 %3428
          %3432 = vset.pattern.permute.xlu0 0
          %3433 = vperm.xlu0 %3432, %v3283
          %v3434 = vpop.permute.xlu0 %3433
          %3437 = vset.pattern.permute.xlu0 0
          %3438 = vperm.xlu0 %3437, %v3284
          %v3439 = vpop.permute.xlu0 %3438
          %3442 = vset.pattern.permute.xlu0 0
          %3443 = vperm.xlu0 %3442, %v3285
          %v3444 = vpop.permute.xlu0 %3443
          %3447 = vset.pattern.permute.xlu0 0
          %3448 = vperm.xlu0 %3447, %v3286
          %v3449 = vpop.permute.xlu0 %3448
          %3452 = vset.pattern.permute.xlu0 0
          %3453 = vperm.xlu0 %3452, %v3287
          %v3454 = vpop.permute.xlu0 %3453
          %3457 = vset.pattern.permute.xlu0 0
          %3458 = vperm.xlu0 %3457, %v3288
          %v3459 = vpop.permute.xlu0 %3458
          %3462 = vset.pattern.permute.xlu0 0
          %3463 = vperm.xlu0 %3462, %v3289
          %v3464 = vpop.permute.xlu0 %3463
          %3467 = vset.pattern.permute.xlu0 0
          %3468 = vperm.xlu0 %3467, %v3290
          %v3469 = vpop.permute.xlu0 %3468
          %3472 = vset.pattern.permute.xlu0 0
          %3473 = vperm.xlu0 %3472, %v3291
          %v3474 = vpop.permute.xlu0 %3473
          %3477 = vset.pattern.permute.xlu0 0
          %3478 = vperm.xlu0 %3477, %v3292
          %v3479 = vpop.permute.xlu0 %3478
          %3482 = vset.pattern.permute.xlu0 0
          %3483 = vperm.xlu0 %3482, %v3293
          %v3484 = vpop.permute.xlu0 %3483
          %v3486 = vmul.f32 %v3294, %v3329
          %v3487 = vmul.f32 %v3295, %v3334
          %v3488 = vmul.f32 %v3296, %v3339
          %v3489 = vmul.f32 %v3297, %v3344
          %v3490 = vmul.f32 %v3298, %v3349
          %v3491 = vmul.f32 %v3299, %v3354
          %v3492 = vmul.f32 %v3300, %v3359
          %v3493 = vmul.f32 %v3301, %v3364
          %v3494 = vmul.f32 %v3302, %v3369
          %v3495 = vmul.f32 %v3303, %v3374
          %v3496 = vmul.f32 %v3304, %v3379
          %v3497 = vmul.f32 %v3305, %v3384
          %v3498 = vmul.f32 %v3306, %v3389
          %v3499 = vmul.f32 %v3307, %v3394
          %v3500 = vmul.f32 %v3308, %v3399
          %v3501 = vmul.f32 %v3309, %v3404
          %v3502 = vmul.f32 %v3310, %v3409
          %v3503 = vmul.f32 %v3311, %v3414
          %v3504 = vmul.f32 %v3312, %v3419
          %v3505 = vmul.f32 %v3313, %v3424
          %v3506 = vmul.f32 %v3314, %v3429
          %v3507 = vmul.f32 %v3315, %v3434
          %v3508 = vmul.f32 %v3316, %v3439
          %v3509 = vmul.f32 %v3317, %v3444
          %v3510 = vmul.f32 %v3318, %v3449
          %v3511 = vmul.f32 %v3319, %v3454
          %v3512 = vmul.f32 %v3320, %v3459
          %v3513 = vmul.f32 %v3321, %v3464
          %v3514 = vmul.f32 %v3322, %v3469
          %v3515 = vmul.f32 %v3323, %v3474
          %v3516 = vmul.f32 %v3324, %v3479
          %v3517 = vmul.f32 %v3325, %v3484
          %3518 = vst [vmem:[%s298] sm:$0xff] %v3486
          %3519 = vst [vmem:[%s298 + $0x8] sm:$0xff] %v3487
          %3520 = vst [vmem:[%s298 + $0x10] sm:$0xff] %v3488
          %3521 = vst [vmem:[%s298 + $0x18] sm:$0xff] %v3489
          %3522 = vst [vmem:[%s298 + $0x20] sm:$0xff] %v3490
          %3523 = vst [vmem:[%s298 + $0x28] sm:$0xff] %v3491
          %3524 = vst [vmem:[%s298 + $0x30] sm:$0xff] %v3492
          %3525 = vst [vmem:[%s298 + $0x38] sm:$0xff] %v3493
          %3526 = vst [vmem:[%s298 + $0x40] sm:$0xff] %v3494
          %3527 = vst [vmem:[%s298 + $0x48] sm:$0xff] %v3495
          %3528 = vst [vmem:[%s298 + $0x50] sm:$0xff] %v3496
          %3529 = vst [vmem:[%s298 + $0x58] sm:$0xff] %v3497
          %3530 = vst [vmem:[%s298 + $0x60] sm:$0xff] %v3498
          %3531 = vst [vmem:[%s298 + $0x68] sm:$0xff] %v3499
          %3532 = vst [vmem:[%s298 + $0x70] sm:$0xff] %v3500
          %3533 = vst [vmem:[%s298 + $0x78] sm:$0xff] %v3501
          %3534 = vst [vmem:[%s298 + $0x80] sm:$0xff] %v3502
          %3535 = vst [vmem:[%s298 + $0x88] sm:$0xff] %v3503
          %3536 = vst [vmem:[%s298 + $0x90] sm:$0xff] %v3504
          %3537 = vst [vmem:[%s298 + $0x98] sm:$0xff] %v3505
          %3538 = vst [vmem:[%s298 + $0xa0] sm:$0xff] %v3506
          %3539 = vst [vmem:[%s298 + $0xa8] sm:$0xff] %v3507
          %3540 = vst [vmem:[%s298 + $0xb0] sm:$0xff] %v3508
          %3541 = vst [vmem:[%s298 + $0xb8] sm:$0xff] %v3509
          %3542 = vst [vmem:[%s298 + $0xc0] sm:$0xff] %v3510
          %3543 = vst [vmem:[%s298 + $0xc8] sm:$0xff] %v3511
          %3544 = vst [vmem:[%s298 + $0xd0] sm:$0xff] %v3512
          %3545 = vst [vmem:[%s298 + $0xd8] sm:$0xff] %v3513
          %3546 = vst [vmem:[%s298 + $0xe0] sm:$0xff] %v3514
          %3547 = vst [vmem:[%s298 + $0xe8] sm:$0xff] %v3515
          %3548 = vst [vmem:[%s298 + $0xf0] sm:$0xff] %v3516
          %3549 = vst [vmem:[%s298 + $0xf8] sm:$0xff] %v3517
        $region52: #{tpu_custom_call.1} parent=31 // pred_fallthru
          _
        %s3550 = sand.u32 %s136, 1
        %s3551 = scalar_lea.sflag [#allocation7], %s3550
        %s3552 = sand.u32 %s136, 1
        %s3553 = smul.addr %s3552, 256
        %s3554 = scalar_lea.vmem [#allocation11], %s3553
        // Predicated region
        $region53: #{tpu_custom_call.1} parent=31 // pred_check
          %p3555 = pneg %p146
        $region54: #{tpu_custom_call.1} parent=31 // pred_check_branch
          %3557 = sbr.rel (%p3555) target = $region56
        $region55: #{tpu_custom_call.1} parent=31 // pred_region
          %s3558 = smul.u32 32, %s29
          %s3560 = ssub.s32 4096, 4096
          %3561 = vsyncadd %s3551, %s3560
          %s3562 = smul.addr %s28, 128
          %s3563 = sadd.s32 %s3558, %s3562
          %s3564 = smul.addr %s3563, 128
          %s3565 = scalar_lea.hbm %s3, %s3564
          %s3566 = sshll.u32 %s3554, 4
          %s3567 = int_to_ptr.vmem [resolvable:$true] %s3566
          %3572 = dma.vmem_to_hbm [thread:$0]  %s3567, 4096, %s3565, %s3551, 128, 128, 8
        $region56: #{tpu_custom_call.1} parent=31 // pred_fallthru
          _
      $region32: #{tpu_custom_call.1} parent=5 // pred_fallthru
        _
      %p3573 = scmp.le.s32.totalorder 2, %s18
      // Predicated region
      $region57: #{tpu_custom_call.1} parent=5 // pred_check
        %p3574 = pneg %p3573
      $region58: #{tpu_custom_call.1} parent=5 // pred_check_branch
        %3576 = sbr.rel (%p3574) target = $region60
      $region59: #{tpu_custom_call.1} parent=5 // pred_region
        %s3577 = ssub.s32 %s18, 2
        // Predicated region
        $region61: #{tpu_custom_call.1} parent=59 // pred_check
          %p3578 = pneg %p152
        $region62: #{tpu_custom_call.1} parent=59 // pred_check_branch
          %3580 = sbr.rel (%p3578) target = $region64
        $region63: #{tpu_custom_call.1} parent=59 // pred_region
          %s3581 = sand.u32 %s137, 1
          %s3582 = scalar_lea.sflag [#allocation7], %s3581
          %s3583 = sand.u32 %s137, 1
          %s3584 = smul.addr %s3583, 256
          %s3585 = scalar_lea.vmem [#allocation11], %s3584
          %3586 = dma.done %s3582, 4096
        $region64: #{tpu_custom_call.1} parent=59 // pred_fallthru
          _
      $region60: #{tpu_custom_call.1} parent=5 // pred_fallthru
        _
    $region6: #{tpu_custom_call.1} parent=1 // loop_footer
      %s22 = sadd.s32 1, %s18
    $region7: #{tpu_custom_call.1} parent=1 // loop_footer_branch
      %17 = sbr.rel target = $region3
    $region8: #{tpu_custom_call.1} parent=1 // loop_exit
      _
    %3587 = vsyncpa [#allocation6], 1
    %s3588 = scalar_lea.sflag [#allocation6], 1
    %3589 = vsyncpa %s3588, 1
    %3590 = vsyncpa [#allocation9], 1
    %s3591 = scalar_lea.sflag [#allocation9], 1
    %3592 = vsyncpa %s3591, 1
    %3593 = vsyncpa [#allocation7], 1
    %s3594 = scalar_lea.sflag [#allocation7], 1
    %3595 = vsyncpa %s3594, 1

</llo_original>
